<compile_context>
chip_gen: v7x
topology: tpu7x:2x2x1
jax: 0.10.0
libtpu: 0.0.40
codegen_flags: <defaults>
</compile_context>

<pallas_src>
import functools

import numpy as np
import jax
import jax.numpy as jnp
from jax.experimental import pallas as pl
from jax.experimental.pallas import tpu as pltpu

# Scoped-VMEM ceiling that is safe on v5e (128 MiB phys), v6e (128 MiB) and v7x (64 MiB).
_VMEM_LIMIT_BYTES = 32 * 1024 * 1024

_TAPS = ((0, 0), (0, 1), (1, 0), (1, 1))   # 2x2 kernel tap order (kh, kw)


def _elu(x):
    # ELU with alpha=1 (used both inside kernels and in the pure-JAX reference).
    return jnp.where(x > 0, x, jnp.exp(x) - 1.0)


def _round_up(x, m):
    return (x + m - 1) // m * m


# ----------------------------- Pallas kernels -----------------------------

def _conv2x2_from_scratch(scr_ref, w_ref, b_ref, blk, h, w):
    """2x2 conv (top/left zero padding) as 4 accumulated matmuls on windows of `scr_ref`.

    scr_ref has shape (h+1, w+8, c_in); the activation lives at [1:1+h, 8:8+w, :] so that
    row 0 and column 7 hold the conv's zero padding.  The interior store done by the caller
    is sublane-tile aligned; the tap windows here are (possibly unaligned) reads only.
    Tap (ki, kj) needs x[i+ki-1, j+kj-1] == scr[ki+i, 7+kj+j].
    """
    acc = None
    for t, (ki, kj) in enumerate(_TAPS):
        win = scr_ref[ki:ki + h, 7 + kj:7 + kj + w, :]          # (h, w, c_in)
        win = win.reshape(h * w, win.shape[-1])
        part = jnp.dot(win, w_ref[blk, t], preferred_element_type=jnp.float32)
        acc = part if acc is None else acc + part
    return acc + b_ref[blk]                                      # (h*w, c_out)


def _residual_tower_kernel(x_ref, w_in_ref, b_in_ref, w_a_ref, b_a_ref, w_g_ref, b_g_ref,
                           o_ref, scr_ref, *, n_blocks, h, w, c):
    # Runs the full stack of ResidualBlocks for one image; h1 / gated conv intermediates
    # never leave VMEM.
    hw = h * w
    scr_ref[...] = jnp.zeros_like(scr_ref)          # zero padding borders (row 0 / col 7)
    x = x_ref[0].reshape(hw, c)
    cur = x
    for blk in range(n_blocks):
        # out = elu(conv2x2(elu(cur)))  (padding zeros applied to elu'd activation)
        scr_ref[1:1 + h, 8:8 + w, :] = _elu(cur).reshape(h, w, c)
        h1 = _elu(_conv2x2_from_scratch(scr_ref, w_in_ref, b_in_ref, blk, h, w))
        # gated conv: a * sigmoid(g) with the 2C-wide conv split into two lane-aligned matmuls
        scr_ref[1:1 + h, 8:8 + w, :] = h1.reshape(h, w, c)
        a = _conv2x2_from_scratch(scr_ref, w_a_ref, b_a_ref, blk, h, w)
        g = _conv2x2_from_scratch(scr_ref, w_g_ref, b_g_ref, blk, h, w)
        cur = cur + a * jax.nn.sigmoid(g)
    o_ref[0] = cur.reshape(h, w, c)


def _masked_attention_kernel(kvin_ref, mask_ref, w_qkv_ref, b_qkv_ref, wp_ref, bp_ref,
                             o_ref, *, dk):
    # Single-head MaskedAttention, is_causal=True (pixel i attends strictly to j < i).
    # q/k/v come from ONE fused projection of kvin (wq is zero-padded over the extra img
    # channels and pre-scaled by 1/sqrt(dk) at init).
    kvin = kvin_ref[0]                                           # (HW, CKV)
    qkv = jnp.dot(kvin, w_qkv_ref[...],
                  preferred_element_type=jnp.float32) + b_qkv_ref[...]
    q = qkv[:, :dk]
    k = qkv[:, dk:2 * dk]
    v = qkv[:, 2 * dk:]
    scores = jax.lax.dot_general(q, k, (((1,), (1,)), ((), ())),
                                 preferred_element_type=jnp.float32)     # (HW, HW)
    m = jnp.max(scores, axis=-1, keepdims=True)
    # Single masking pass: masked probs are exactly 0, fully-masked first row stays 0
    # (matches torch's softmax(...).masked_fill(mask == 0, 0)).
    e = jnp.exp(scores - m) * mask_ref[...]
    l = jnp.sum(e, axis=-1, keepdims=True)
    p = e * (1.0 / jnp.maximum(l, 1e-30))
    out = jnp.dot(p, v, preferred_element_type=jnp.float32)             # (HW, dv)
    o_ref[0] = jnp.dot(out, wp_ref[...],
                       preferred_element_type=jnp.float32) + bp_ref[...]


def _output_head_kernel(res_ref, attn_ref, wr_ref, br_ref, wa_ref, ba_ref,
                        wo_ref, bo_ref, o_ref):
    r = _elu(jnp.dot(_elu(res_ref[...]), wr_ref[...],
                     preferred_element_type=jnp.float32) + br_ref[...])
    a = _elu(jnp.dot(_elu(attn_ref[...]), wa_ref[...],
                     preferred_element_type=jnp.float32) + ba_ref[...])
    s = _elu(r + a)
    o_ref[...] = _elu(jnp.dot(s, wo_ref[...],
                              preferred_element_type=jnp.float32) + bo_ref[...])


# ----------------------------- wrappers -----------------------------

def _residual_tower(x_nhwc, stacks, n_blocks):
    n, h, w, c = x_nhwc.shape
    kernel = functools.partial(_residual_tower_kernel, n_blocks=n_blocks, h=h, w=w, c=c)
    return pl.pallas_call(
        kernel,
        grid=(n,),
        in_specs=[
            pl.BlockSpec((1, h, w, c), lambda b: (b, 0, 0, 0)),
            pl.BlockSpec(stacks["w_in"].shape, lambda b: (0, 0, 0, 0)),
            pl.BlockSpec(stacks["b_in"].shape, lambda b: (0, 0, 0)),
            pl.BlockSpec(stacks["w_a"].shape, lambda b: (0, 0, 0, 0)),
            pl.BlockSpec(stacks["b_a"].shape, lambda b: (0, 0, 0)),
            pl.BlockSpec(stacks["w_g"].shape, lambda b: (0, 0, 0, 0)),
            pl.BlockSpec(stacks["b_g"].shape, lambda b: (0, 0, 0)),
        ],
        out_specs=pl.BlockSpec((1, h, w, c), lambda b: (b, 0, 0, 0)),
        out_shape=jax.ShapeDtypeStruct((n, h, w, c), jnp.float32),
        scratch_shapes=[pltpu.VMEM((h + 1, w + 8, c), jnp.float32)],
        compiler_params=pltpu.CompilerParams(
            dimension_semantics=("parallel",),
            vmem_limit_bytes=_VMEM_LIMIT_BYTES),
    )(x_nhwc, stacks["w_in"], stacks["b_in"], stacks["w_a"], stacks["b_a"],
      stacks["w_g"], stacks["b_g"])


def _masked_attention(kvin_nhwc, pa, dk, dv):
    n, h, w, ckv = kvin_nhwc.shape
    hw = h * w
    kvin = kvin_nhwc.reshape(n, hw, ckv)
    # Precompute the causal mask once (stays resident across the batch grid).
    row = jax.lax.broadcasted_iota(jnp.int32, (hw, hw), 0)
    col = jax.lax.broadcasted_iota(jnp.int32, (hw, hw), 1)
    mask = (col < row).astype(jnp.float32)                   # strictly-lower triangular
    out = pl.pallas_call(
        functools.partial(_masked_attention_kernel, dk=dk),
        grid=(n,),
        in_specs=[
            pl.BlockSpec((1, hw, ckv), lambda b: (b, 0, 0)),
            pl.BlockSpec((hw, hw), lambda b: (0, 0)),
            pl.BlockSpec(pa["w_qkv"].shape, lambda b: (0, 0)),
            pl.BlockSpec(pa["b_qkv"].shape, lambda b: (0, 0)),
            pl.BlockSpec(pa["wp"].shape, lambda b: (0, 0)),
            pl.BlockSpec(pa["bp"].shape, lambda b: (0, 0)),
        ],
        out_specs=pl.BlockSpec((1, hw, dv), lambda b: (b, 0, 0)),
        out_shape=jax.ShapeDtypeStruct((n, hw, dv), jnp.float32),
        compiler_params=pltpu.CompilerParams(
            dimension_semantics=("parallel",),
            vmem_limit_bytes=_VMEM_LIMIT_BYTES),
    )(kvin, mask, pa["w_qkv"], pa["b_qkv"], pa["wp"], pa["bp"])
    return out.reshape(n, h, w, dv)


def _output_head(res_flat, attn_flat, params, c, dv, row_tile=512):
    m = res_flat.shape[0]
    tm = min(row_tile, _round_up(m, 8))
    mp = _round_up(m, tm)
    if mp != m:
        res_flat = jnp.pad(res_flat, ((0, mp - m), (0, 0)))
        attn_flat = jnp.pad(attn_flat, ((0, mp - m), (0, 0)))
    out = pl.pallas_call(
        _output_head_kernel,
        grid=(mp // tm,),
        in_specs=[
            pl.BlockSpec((tm, c), lambda i: (i, 0)),
            pl.BlockSpec((tm, dv), lambda i: (i, 0)),
            pl.BlockSpec(params["w_res_out"].shape, lambda i: (0, 0)),
            pl.BlockSpec(params["b_res_out"].shape, lambda i: (0, 0)),
            pl.BlockSpec(params["w_attn_out"].shape, lambda i: (0, 0)),
            pl.BlockSpec(params["b_attn_out"].shape, lambda i: (0, 0)),
            pl.BlockSpec(params["w_out"].shape, lambda i: (0, 0)),
            pl.BlockSpec(params["b_out"].shape, lambda i: (0, 0)),
        ],
        out_specs=pl.BlockSpec((tm, c), lambda i: (i, 0)),
        out_shape=jax.ShapeDtypeStruct((mp, c), jnp.float32),
        compiler_params=pltpu.CompilerParams(
            dimension_semantics=("parallel",),
            vmem_limit_bytes=_VMEM_LIMIT_BYTES),
    )(res_flat, attn_flat,
      params["w_res_out"], params["b_res_out"],
      params["w_attn_out"], params["b_attn_out"],
      params["w_out"], params["b_out"])
    return out[:m]


def _positional_encoding(n, ci, h, w):
    rows = (jnp.arange(h, dtype=jnp.float32) / h) - 0.5
    cols = (jnp.arange(w, dtype=jnp.float32) / w) - 0.5
    pos_r = jnp.broadcast_to(rows[None, :, None, None], (n, h, w, ci))
    pos_c = jnp.broadcast_to(cols[None, None, :, None], (n, h, w, ci))
    return jnp.concatenate([pos_r, pos_c], axis=-1)      # NHWC, channels [row, col]


def pixel_snail_block_forward(x_nchw, img_nchw, params):
    n, c, h, w = x_nchw.shape
    ci = img_nchw.shape[1]
    x = jnp.transpose(x_nchw, (0, 2, 3, 1)).astype(jnp.float32)
    img = jnp.transpose(img_nchw, (0, 2, 3, 1)).astype(jnp.float32)

    nb = len(params["residual"])
    res = _residual_tower(x, params["res_stacks"], nb) if nb > 0 else x

    pos = _positional_encoding(n, ci, h, w)
    # kvin = cat(qin, img) with qin = cat(pos, res); the q projection only sees the first
    # (C + 2*ci) channels (its weight is zero-padded over img at init).
    kvin = jnp.concatenate([pos, res, img], axis=-1)
    attn = _masked_attention(kvin, params["attention"], params["dk"], params["dv"])

    m = n * h * w
    out = _output_head(res.reshape(m, c), attn.reshape(m, params["dv"]),
                       params, c, params["dv"])
    return jnp.transpose(out.reshape(n, h, w, c), (0, 3, 1, 2))


# ----------------------------- parameters -----------------------------

def _conv_params(key, out_c, in_c, kh, kw):
    k = 1.0 / float(np.sqrt(in_c * kh * kw))
    kw_key, kb_key = jax.random.split(key)
    wgt = jax.random.uniform(kw_key, (out_c, in_c, kh, kw), jnp.float32, -k, k)
    b = jax.random.uniform(kb_key, (out_c,), jnp.float32, -k, k)
    return wgt, b


def _conv1x1_to_matmul(w):   # (out, in, 1, 1) -> (in, out)
    return jnp.transpose(w[:, :, 0, 0], (1, 0))


def _tap_stack(w_oihw):      # (out, in, 2, 2) -> (4, in, out), tap order (0,0)(0,1)(1,0)(1,1)
    return jnp.stack([jnp.transpose(w_oihw[:, :, ki, kj], (1, 0)) for ki, kj in _TAPS],
                     axis=0)


def init_params(key, n_channels, input_img_channels, n_residual_blocks, dk, dv):
    keys = jax.random.split(key, 2 * max(n_residual_blocks, 1) + 6)
    it = iter(keys)
    c = n_channels
    residual = []
    for _ in range(n_residual_blocks):
        w_in, b_in = _conv_params(next(it), c, c, 2, 2)
        w_out, b_out = _conv_params(next(it), 2 * c, c, 2, 2)
        residual.append({"w_in_raw": w_in, "b_in_raw": b_in,
                         "w_out_raw": w_out, "b_out_raw": b_out})

    if n_residual_blocks > 0:
        res_stacks = {
            "w_in": jnp.stack([_tap_stack(p["w_in_raw"]) for p in residual]),
            "b_in": jnp.stack([p["b_in_raw"][None, :] for p in residual]),
            "w_a": jnp.stack([_tap_stack(p["w_out_raw"][:c]) for p in residual]),
            "b_a": jnp.stack([p["b_out_raw"][None, :c] for p in residual]),
            "w_g": jnp.stack([_tap_stack(p["w_out_raw"][c:]) for p in residual]),
            "b_g": jnp.stack([p["b_out_raw"][None, c:] for p in residual]),
        }
    else:
        res_stacks = {}

    attn_in_c = c + 2 * input_img_channels
    kv_in_c = attn_in_c + input_img_channels
    wq, bq = _conv_params(next(it), dk, attn_in_c, 1, 1)
    wkv, bkv = _conv_params(next(it), dk + dv, kv_in_c, 1, 1)
    wp, bp = _conv_params(next(it), dv, dv, 1, 1)
    scale = 1.0 / float(np.sqrt(dk))
    wq_mat = _conv1x1_to_matmul(wq) * scale          # fold 1/sqrt(dk) into the q projection
    wq_pad = jnp.concatenate(
        [wq_mat, jnp.zeros((input_img_channels, dk), jnp.float32)], axis=0)
    wkv_mat = _conv1x1_to_matmul(wkv)
    attention = {
        "w_qkv": jnp.concatenate([wq_pad, wkv_mat], axis=1),   # (ckv, 2*dk+dv): [q | k | v]
        "b_qkv": jnp.concatenate([bq * scale, bkv])[None, :],
        "wp": _conv1x1_to_matmul(wp), "bp": bp[None, :],
        "wq_raw": wq, "bq_raw": bq, "wkv_raw": wkv, "bkv_raw": bkv,
        "wp_raw": wp, "bp_raw": bp,
    }
    w_ro, b_ro = _conv_params(next(it), c, c, 1, 1)
    w_ao, b_ao = _conv_params(next(it), c, dv, 1, 1)
    w_o, b_o = _conv_params(next(it), c, c, 1, 1)
    return {
        "residual": residual, "res_stacks": res_stacks, "attention": attention,
        "dk": dk, "dv": dv,
        "w_res_out": _conv1x1_to_matmul(w_ro), "b_res_out": b_ro[None, :],
        "w_attn_out": _conv1x1_to_matmul(w_ao), "b_attn_out": b_ao[None, :],
        "w_out": _conv1x1_to_matmul(w_o), "b_out": b_o[None, :],
        "w_res_out_raw": w_ro, "b_res_out_raw": b_ro,
        "w_attn_out_raw": w_ao, "b_attn_out_raw": b_ao,
        "w_out_raw": w_o, "b_out_raw": b_o,
    }


# ----------------------------- pure-JAX reference (NCHW, lax.conv) -----------------------------

def _ref_conv2d(x_nchw, w, b, padding):
    out = jax.lax.conv_general_dilated(
        x_nchw, w, window_strides=(1, 1), padding=[(padding, padding)] * 2,
        dimension_numbers=("NCHW", "OIHW", "NCHW"),
        precision=jax.lax.Precision.HIGHEST)
    return out + b[None, :, None, None]


def _ref_residual_block(x, p):
    _, c, h, w = x.shape
    out = _elu(_ref_conv2d(_elu(x), p["w_in_raw"], p["b_in_raw"], 1))[:, :, :h, :w]
    out = _ref_conv2d(out, p["w_out_raw"], p["b_out_raw"], 1)[:, :, :h, :w]
    a, g = out[:, :c], out[:, c:]
    return x + a * jax.nn.sigmoid(g)


def _ref_forward(x, img, params):
    n, c, h, w = x.shape
    ci = img.shape[1]
    res = x
    for p in params["residual"]:
        res = _ref_residual_block(res, p)
    rows = (jnp.arange(h, dtype=jnp.float32) / h) - 0.5
    cols = (jnp.arange(w, dtype=jnp.float32) / w) - 0.5
    pos = jnp.concatenate([
        jnp.broadcast_to(rows[None, None, :, None], (n, ci, h, w)),
        jnp.broadcast_to(cols[None, None, None, :], (n, ci, h, w))], axis=1)
    qx = jnp.concatenate([pos, res], axis=1)
    kvx = jnp.concatenate([qx, img], axis=1)
    pa, dk, dv = params["attention"], params["dk"], params["dv"]
    q = _ref_conv2d(qx, pa["wq_raw"], pa["bq_raw"], 0).reshape(n, dk, h * w).transpose(0, 2, 1)
    kv = _ref_conv2d(kvx, pa["wkv_raw"], pa["bkv_raw"], 0)
    k = kv[:, :dk].reshape(n, dk, h * w).transpose(0, 2, 1)
    v = kv[:, dk:].reshape(n, dv, h * w).transpose(0, 2, 1)
    scores = jnp.einsum("bik,bjk->bij", q, k,
                        precision=jax.lax.Precision.HIGHEST) / float(np.sqrt(dk))
    mask = jnp.tril(jnp.ones((h * w, h * w)), k=-1) > 0
    scores = jnp.where(mask[None], scores, -1e30)
    p = jax.nn.softmax(scores, axis=-1)
    p = jnp.where(mask[None], p, 0.0)
    out = jnp.einsum("bij,bjd->bid", p, v, precision=jax.lax.Precision.HIGHEST)
    out = out.transpose(0, 2, 1).reshape(n, dv, h, w)
    attn = _ref_conv2d(out, pa["wp_raw"], pa["bp_raw"], 0)
    r = _elu(_ref_conv2d(_elu(res), params["w_res_out_raw"], params["b_res_out_raw"], 0))
    a = _elu(_ref_conv2d(_elu(attn), params["w_attn_out_raw"], params["b_attn_out_raw"], 0))
    return _elu(_ref_conv2d(_elu(r + a), params["w_out_raw"], params["b_out_raw"], 0))


# ----------------------------- main -----------------------------

if __name__ == "__main__":
    N, C, H, W = 2, 16, 8, 8            # n_channels=16
    CI = 1                              # input_img_channels
    DK, DV = 4, 32                      # attention key / value channels

    key = jax.random.PRNGKey(0)
    kx, kimg, kparams = jax.random.split(key, 3)
    x = jax.random.normal(kx, (N, C, H, W), jnp.float32)
    img = jax.random.normal(kimg, (N, CI, H, W), jnp.float32)
    params = init_params(kparams, C, CI, n_residual_blocks=2, dk=DK, dv=DV)

    out = pixel_snail_block_forward(x, img, params)
    out = jax.block_until_ready(out)

    ref = _ref_forward(x, img, params)
    np.testing.assert_allclose(np.asarray(out), np.asarray(ref), rtol=1e-3, atol=1e-3)
    print("KERNEL_OK")
</pallas_src>

<mosaic_0001>
module attributes {stable_mosaic.version = 11 : i64} {
  func.func @_residual_tower_kernel(%arg0: i32, %arg1: memref<1x8x8x16xf32, #tpu.memory_space<vmem>>, %arg2: memref<2x4x16x16xf32, #tpu.memory_space<vmem>>, %arg3: memref<2x1x16xf32, #tpu.memory_space<vmem>>, %arg4: memref<2x4x16x16xf32, #tpu.memory_space<vmem>>, %arg5: memref<2x1x16xf32, #tpu.memory_space<vmem>>, %arg6: memref<2x4x16x16xf32, #tpu.memory_space<vmem>>, %arg7: memref<2x1x16xf32, #tpu.memory_space<vmem>>, %arg8: memref<1x8x8x16xf32, #tpu.memory_space<vmem>>, %arg9: memref<9x16x16xf32, #tpu.memory_space<vmem>>) attributes {dimension_semantics = [#tpu.dimension_semantics<parallel>], iteration_bounds = array<i64: 2>, scalar_prefetch = 0 : i64, scratch_operands = 1 : i64, tpu.core_type = #tpu.core_type<tc>, window_params = [{transform_indices = @transform_0, window_bounds = array<i64: 1, 8, 8, 16>}, {pipeline_mode = #tpu.pipeline_mode<synchronous>, transform_indices = @transform_1, window_bounds = array<i64: 2, 4, 16, 16>}, {pipeline_mode = #tpu.pipeline_mode<synchronous>, transform_indices = @transform_2, window_bounds = array<i64: 2, 1, 16>}, {pipeline_mode = #tpu.pipeline_mode<synchronous>, transform_indices = @transform_3, window_bounds = array<i64: 2, 4, 16, 16>}, {pipeline_mode = #tpu.pipeline_mode<synchronous>, transform_indices = @transform_4, window_bounds = array<i64: 2, 1, 16>}, {pipeline_mode = #tpu.pipeline_mode<synchronous>, transform_indices = @transform_5, window_bounds = array<i64: 2, 4, 16, 16>}, {pipeline_mode = #tpu.pipeline_mode<synchronous>, transform_indices = @transform_6, window_bounds = array<i64: 2, 1, 16>}, {transform_indices = @transform_7, window_bounds = array<i64: 1, 8, 8, 16>}]} {
    %cst = arith.constant 0.000000e+00 : f32
    %0 = vector.broadcast %cst : f32 to vector<9x16x16xf32>
    %c0 = arith.constant 0 : index
    %c0_0 = arith.constant 0 : index
    %c0_1 = arith.constant 0 : index
    %1 = vector.load %arg9[%c0, %c0_0, %c0_1] : memref<9x16x16xf32, #tpu.memory_space<vmem>>, vector<9x16x16xf32>
    tpu.vector_store %arg9[%c0, %c0_0, %c0_1], %0 {strides = array<i32>} : memref<9x16x16xf32, #tpu.memory_space<vmem>>, vector<9x16x16xf32>,
    %c0_2 = arith.constant 0 : index
    %c0_3 = arith.constant 0 : index
    %c0_4 = arith.constant 0 : index
    %c0_5 = arith.constant 0 : index
    %2 = vector.load %arg1[%c0_2, %c0_3, %c0_4, %c0_5] : memref<1x8x8x16xf32, #tpu.memory_space<vmem>>, vector<1x8x8x16xf32>
    %3 = vector.shape_cast %2 : vector<1x8x8x16xf32> to vector<8x8x16xf32>
    %4 = vector.shape_cast %3 : vector<8x8x16xf32> to vector<64x16xf32>
    %cst_6 = arith.constant 0.000000e+00 : f32
    %5 = vector.broadcast %cst_6 : f32 to vector<64x16xf32>
    %6 = arith.cmpf ogt, %4, %5 : vector<64x16xf32>
    %7 = math.exp %4 : vector<64x16xf32>
    %cst_7 = arith.constant 1.000000e+00 : f32
    %8 = vector.broadcast %cst_7 : f32 to vector<64x16xf32>
    %9 = arith.subf %7, %8 : vector<64x16xf32>
    %10 = arith.select %6, %4, %9 : vector<64x16xi1>, vector<64x16xf32>
    %11 = vector.shape_cast %10 : vector<64x16xf32> to vector<8x8x16xf32>
    %c1 = arith.constant 1 : index
    %c8 = arith.constant 8 : index
    %c0_8 = arith.constant 0 : index
    %12 = vector.load %arg9[%c1, %c8, %c0_8] : memref<9x16x16xf32, #tpu.memory_space<vmem>>, vector<8x8x16xf32>
    tpu.vector_store %arg9[%c1, %c8, %c0_8], %11 {strides = array<i32>} : memref<9x16x16xf32, #tpu.memory_space<vmem>>, vector<8x8x16xf32>,
    %c0_9 = arith.constant 0 : index
    %c7 = arith.constant 7 : index
    %c0_10 = arith.constant 0 : index
    %13 = vector.load %arg9[%c0_9, %c7, %c0_10] : memref<9x16x16xf32, #tpu.memory_space<vmem>>, vector<8x8x16xf32>
    %14 = vector.shape_cast %13 : vector<8x8x16xf32> to vector<64x16xf32>
    %c0_11 = arith.constant 0 : index
    %c0_12 = arith.constant 0 : index
    %c0_13 = arith.constant 0 : index
    %c0_14 = arith.constant 0 : index
    %15 = vector.load %arg2[%c0_11, %c0_12, %c0_13, %c0_14] : memref<2x4x16x16xf32, #tpu.memory_space<vmem>>, vector<1x1x16x16xf32>
    %16 = vector.shape_cast %15 : vector<1x1x16x16xf32> to vector<16x16xf32>
    %cst_15 = arith.constant dense<0.000000e+00> : vector<64x16xf32>
    %17 = tpu.matmul %14, %16, %cst_15 {dimension_numbers = #tpu.dot_dimension_numbers<[1], [0], [0], [1], [0, 0, 1, 1], [], []>} : vector<64x16xf32>, vector<16x16xf32>, vector<64x16xf32> -> vector<64x16xf32>
    %c0_16 = arith.constant 0 : index
    %c8_17 = arith.constant 8 : index
    %c0_18 = arith.constant 0 : index
    %18 = vector.load %arg9[%c0_16, %c8_17, %c0_18] : memref<9x16x16xf32, #tpu.memory_space<vmem>>, vector<8x8x16xf32>
    %19 = vector.shape_cast %18 : vector<8x8x16xf32> to vector<64x16xf32>
    %c0_19 = arith.constant 0 : index
    %c1_20 = arith.constant 1 : index
    %c0_21 = arith.constant 0 : index
    %c0_22 = arith.constant 0 : index
    %20 = vector.load %arg2[%c0_19, %c1_20, %c0_21, %c0_22] : memref<2x4x16x16xf32, #tpu.memory_space<vmem>>, vector<1x1x16x16xf32>
    %21 = vector.shape_cast %20 : vector<1x1x16x16xf32> to vector<16x16xf32>
    %cst_23 = arith.constant dense<0.000000e+00> : vector<64x16xf32>
    %22 = tpu.matmul %19, %21, %cst_23 {dimension_numbers = #tpu.dot_dimension_numbers<[1], [0], [0], [1], [0, 0, 1, 1], [], []>} : vector<64x16xf32>, vector<16x16xf32>, vector<64x16xf32> -> vector<64x16xf32>
    %23 = arith.addf %17, %22 : vector<64x16xf32>
    %c1_24 = arith.constant 1 : index
    %c7_25 = arith.constant 7 : index
    %c0_26 = arith.constant 0 : index
    %24 = vector.load %arg9[%c1_24, %c7_25, %c0_26] : memref<9x16x16xf32, #tpu.memory_space<vmem>>, vector<8x8x16xf32>
    %25 = vector.shape_cast %24 : vector<8x8x16xf32> to vector<64x16xf32>
    %c0_27 = arith.constant 0 : index
    %c2 = arith.constant 2 : index
    %c0_28 = arith.constant 0 : index
    %c0_29 = arith.constant 0 : index
    %26 = vector.load %arg2[%c0_27, %c2, %c0_28, %c0_29] : memref<2x4x16x16xf32, #tpu.memory_space<vmem>>, vector<1x1x16x16xf32>
    %27 = vector.shape_cast %26 : vector<1x1x16x16xf32> to vector<16x16xf32>
    %cst_30 = arith.constant dense<0.000000e+00> : vector<64x16xf32>
    %28 = tpu.matmul %25, %27, %cst_30 {dimension_numbers = #tpu.dot_dimension_numbers<[1], [0], [0], [1], [0, 0, 1, 1], [], []>} : vector<64x16xf32>, vector<16x16xf32>, vector<64x16xf32> -> vector<64x16xf32>
    %29 = arith.addf %23, %28 : vector<64x16xf32>
    %c1_31 = arith.constant 1 : index
    %c8_32 = arith.constant 8 : index
    %c0_33 = arith.constant 0 : index
    %30 = vector.load %arg9[%c1_31, %c8_32, %c0_33] : memref<9x16x16xf32, #tpu.memory_space<vmem>>, vector<8x8x16xf32>
    %31 = vector.shape_cast %30 : vector<8x8x16xf32> to vector<64x16xf32>
    %c0_34 = arith.constant 0 : index
    %c3 = arith.constant 3 : index
    %c0_35 = arith.constant 0 : index
    %c0_36 = arith.constant 0 : index
    %32 = vector.load %arg2[%c0_34, %c3, %c0_35, %c0_36] : memref<2x4x16x16xf32, #tpu.memory_space<vmem>>, vector<1x1x16x16xf32>
    %33 = vector.shape_cast %32 : vector<1x1x16x16xf32> to vector<16x16xf32>
    %cst_37 = arith.constant dense<0.000000e+00> : vector<64x16xf32>
    %34 = tpu.matmul %31, %33, %cst_37 {dimension_numbers = #tpu.dot_dimension_numbers<[1], [0], [0], [1], [0, 0, 1, 1], [], []>} : vector<64x16xf32>, vector<16x16xf32>, vector<64x16xf32> -> vector<64x16xf32>
    %35 = arith.addf %29, %34 : vector<64x16xf32>
    %c0_38 = arith.constant 0 : index
    %c0_39 = arith.constant 0 : index
    %c0_40 = arith.constant 0 : index
    %36 = vector.load %arg3[%c0_38, %c0_39, %c0_40] : memref<2x1x16xf32, #tpu.memory_space<vmem>>, vector<1x1x16xf32>
    %37 = vector.shape_cast %36 : vector<1x1x16xf32> to vector<1x16xf32>
    %38 = vector.broadcast %37 : vector<1x16xf32> to vector<64x16xf32>
    %39 = arith.addf %35, %38 : vector<64x16xf32>
    %cst_41 = arith.constant 0.000000e+00 : f32
    %40 = vector.broadcast %cst_41 : f32 to vector<64x16xf32>
    %41 = arith.cmpf ogt, %39, %40 : vector<64x16xf32>
    %42 = math.exp %39 : vector<64x16xf32>
    %cst_42 = arith.constant 1.000000e+00 : f32
    %43 = vector.broadcast %cst_42 : f32 to vector<64x16xf32>
    %44 = arith.subf %42, %43 : vector<64x16xf32>
    %45 = arith.select %41, %39, %44 : vector<64x16xi1>, vector<64x16xf32>
    %46 = vector.shape_cast %45 : vector<64x16xf32> to vector<8x8x16xf32>
    %c1_43 = arith.constant 1 : index
    %c8_44 = arith.constant 8 : index
    %c0_45 = arith.constant 0 : index
    %47 = vector.load %arg9[%c1_43, %c8_44, %c0_45] : memref<9x16x16xf32, #tpu.memory_space<vmem>>, vector<8x8x16xf32>
    tpu.vector_store %arg9[%c1_43, %c8_44, %c0_45], %46 {strides = array<i32>} : memref<9x16x16xf32, #tpu.memory_space<vmem>>, vector<8x8x16xf32>,
    %c0_46 = arith.constant 0 : index
    %c7_47 = arith.constant 7 : index
    %c0_48 = arith.constant 0 : index
    %48 = vector.load %arg9[%c0_46, %c7_47, %c0_48] : memref<9x16x16xf32, #tpu.memory_space<vmem>>, vector<8x8x16xf32>
    %49 = vector.shape_cast %48 : vector<8x8x16xf32> to vector<64x16xf32>
    %c0_49 = arith.constant 0 : index
    %c0_50 = arith.constant 0 : index
    %c0_51 = arith.constant 0 : index
    %c0_52 = arith.constant 0 : index
    %50 = vector.load %arg4[%c0_49, %c0_50, %c0_51, %c0_52] : memref<2x4x16x16xf32, #tpu.memory_space<vmem>>, vector<1x1x16x16xf32>
    %51 = vector.shape_cast %50 : vector<1x1x16x16xf32> to vector<16x16xf32>
    %cst_53 = arith.constant dense<0.000000e+00> : vector<64x16xf32>
    %52 = tpu.matmul %49, %51, %cst_53 {dimension_numbers = #tpu.dot_dimension_numbers<[1], [0], [0], [1], [0, 0, 1, 1], [], []>} : vector<64x16xf32>, vector<16x16xf32>, vector<64x16xf32> -> vector<64x16xf32>
    %c0_54 = arith.constant 0 : index
    %c8_55 = arith.constant 8 : index
    %c0_56 = arith.constant 0 : index
    %53 = vector.load %arg9[%c0_54, %c8_55, %c0_56] : memref<9x16x16xf32, #tpu.memory_space<vmem>>, vector<8x8x16xf32>
    %54 = vector.shape_cast %53 : vector<8x8x16xf32> to vector<64x16xf32>
    %c0_57 = arith.constant 0 : index
    %c1_58 = arith.constant 1 : index
    %c0_59 = arith.constant 0 : index
    %c0_60 = arith.constant 0 : index
    %55 = vector.load %arg4[%c0_57, %c1_58, %c0_59, %c0_60] : memref<2x4x16x16xf32, #tpu.memory_space<vmem>>, vector<1x1x16x16xf32>
    %56 = vector.shape_cast %55 : vector<1x1x16x16xf32> to vector<16x16xf32>
    %cst_61 = arith.constant dense<0.000000e+00> : vector<64x16xf32>
    %57 = tpu.matmul %54, %56, %cst_61 {dimension_numbers = #tpu.dot_dimension_numbers<[1], [0], [0], [1], [0, 0, 1, 1], [], []>} : vector<64x16xf32>, vector<16x16xf32>, vector<64x16xf32> -> vector<64x16xf32>
    %58 = arith.addf %52, %57 : vector<64x16xf32>
    %c1_62 = arith.constant 1 : index
    %c7_63 = arith.constant 7 : index
    %c0_64 = arith.constant 0 : index
    %59 = vector.load %arg9[%c1_62, %c7_63, %c0_64] : memref<9x16x16xf32, #tpu.memory_space<vmem>>, vector<8x8x16xf32>
    %60 = vector.shape_cast %59 : vector<8x8x16xf32> to vector<64x16xf32>
    %c0_65 = arith.constant 0 : index
    %c2_66 = arith.constant 2 : index
    %c0_67 = arith.constant 0 : index
    %c0_68 = arith.constant 0 : index
    %61 = vector.load %arg4[%c0_65, %c2_66, %c0_67, %c0_68] : memref<2x4x16x16xf32, #tpu.memory_space<vmem>>, vector<1x1x16x16xf32>
    %62 = vector.shape_cast %61 : vector<1x1x16x16xf32> to vector<16x16xf32>
    %cst_69 = arith.constant dense<0.000000e+00> : vector<64x16xf32>
    %63 = tpu.matmul %60, %62, %cst_69 {dimension_numbers = #tpu.dot_dimension_numbers<[1], [0], [0], [1], [0, 0, 1, 1], [], []>} : vector<64x16xf32>, vector<16x16xf32>, vector<64x16xf32> -> vector<64x16xf32>
    %64 = arith.addf %58, %63 : vector<64x16xf32>
    %c1_70 = arith.constant 1 : index
    %c8_71 = arith.constant 8 : index
    %c0_72 = arith.constant 0 : index
    %65 = vector.load %arg9[%c1_70, %c8_71, %c0_72] : memref<9x16x16xf32, #tpu.memory_space<vmem>>, vector<8x8x16xf32>
    %66 = vector.shape_cast %65 : vector<8x8x16xf32> to vector<64x16xf32>
    %c0_73 = arith.constant 0 : index
    %c3_74 = arith.constant 3 : index
    %c0_75 = arith.constant 0 : index
    %c0_76 = arith.constant 0 : index
    %67 = vector.load %arg4[%c0_73, %c3_74, %c0_75, %c0_76] : memref<2x4x16x16xf32, #tpu.memory_space<vmem>>, vector<1x1x16x16xf32>
    %68 = vector.shape_cast %67 : vector<1x1x16x16xf32> to vector<16x16xf32>
    %cst_77 = arith.constant dense<0.000000e+00> : vector<64x16xf32>
    %69 = tpu.matmul %66, %68, %cst_77 {dimension_numbers = #tpu.dot_dimension_numbers<[1], [0], [0], [1], [0, 0, 1, 1], [], []>} : vector<64x16xf32>, vector<16x16xf32>, vector<64x16xf32> -> vector<64x16xf32>
    %70 = arith.addf %64, %69 : vector<64x16xf32>
    %c0_78 = arith.constant 0 : index
    %c0_79 = arith.constant 0 : index
    %c0_80 = arith.constant 0 : index
    %71 = vector.load %arg5[%c0_78, %c0_79, %c0_80] : memref<2x1x16xf32, #tpu.memory_space<vmem>>, vector<1x1x16xf32>
    %72 = vector.shape_cast %71 : vector<1x1x16xf32> to vector<1x16xf32>
    %73 = vector.broadcast %72 : vector<1x16xf32> to vector<64x16xf32>
    %74 = arith.addf %70, %73 : vector<64x16xf32>
    %c0_81 = arith.constant 0 : index
    %c7_82 = arith.constant 7 : index
    %c0_83 = arith.constant 0 : index
    %75 = vector.load %arg9[%c0_81, %c7_82, %c0_83] : memref<9x16x16xf32, #tpu.memory_space<vmem>>, vector<8x8x16xf32>
    %76 = vector.shape_cast %75 : vector<8x8x16xf32> to vector<64x16xf32>
    %c0_84 = arith.constant 0 : index
    %c0_85 = arith.constant 0 : index
    %c0_86 = arith.constant 0 : index
    %c0_87 = arith.constant 0 : index
    %77 = vector.load %arg6[%c0_84, %c0_85, %c0_86, %c0_87] : memref<2x4x16x16xf32, #tpu.memory_space<vmem>>, vector<1x1x16x16xf32>
    %78 = vector.shape_cast %77 : vector<1x1x16x16xf32> to vector<16x16xf32>
    %cst_88 = arith.constant dense<0.000000e+00> : vector<64x16xf32>
    %79 = tpu.matmul %76, %78, %cst_88 {dimension_numbers = #tpu.dot_dimension_numbers<[1], [0], [0], [1], [0, 0, 1, 1], [], []>} : vector<64x16xf32>, vector<16x16xf32>, vector<64x16xf32> -> vector<64x16xf32>
    %c0_89 = arith.constant 0 : index
    %c8_90 = arith.constant 8 : index
    %c0_91 = arith.constant 0 : index
    %80 = vector.load %arg9[%c0_89, %c8_90, %c0_91] : memref<9x16x16xf32, #tpu.memory_space<vmem>>, vector<8x8x16xf32>
    %81 = vector.shape_cast %80 : vector<8x8x16xf32> to vector<64x16xf32>
    %c0_92 = arith.constant 0 : index
    %c1_93 = arith.constant 1 : index
    %c0_94 = arith.constant 0 : index
    %c0_95 = arith.constant 0 : index
    %82 = vector.load %arg6[%c0_92, %c1_93, %c0_94, %c0_95] : memref<2x4x16x16xf32, #tpu.memory_space<vmem>>, vector<1x1x16x16xf32>
    %83 = vector.shape_cast %82 : vector<1x1x16x16xf32> to vector<16x16xf32>
    %cst_96 = arith.constant dense<0.000000e+00> : vector<64x16xf32>
    %84 = tpu.matmul %81, %83, %cst_96 {dimension_numbers = #tpu.dot_dimension_numbers<[1], [0], [0], [1], [0, 0, 1, 1], [], []>} : vector<64x16xf32>, vector<16x16xf32>, vector<64x16xf32> -> vector<64x16xf32>
    %85 = arith.addf %79, %84 : vector<64x16xf32>
    %c1_97 = arith.constant 1 : index
    %c7_98 = arith.constant 7 : index
    %c0_99 = arith.constant 0 : index
    %86 = vector.load %arg9[%c1_97, %c7_98, %c0_99] : memref<9x16x16xf32, #tpu.memory_space<vmem>>, vector<8x8x16xf32>
    %87 = vector.shape_cast %86 : vector<8x8x16xf32> to vector<64x16xf32>
    %c0_100 = arith.constant 0 : index
    %c2_101 = arith.constant 2 : index
    %c0_102 = arith.constant 0 : index
    %c0_103 = arith.constant 0 : index
    %88 = vector.load %arg6[%c0_100, %c2_101, %c0_102, %c0_103] : memref<2x4x16x16xf32, #tpu.memory_space<vmem>>, vector<1x1x16x16xf32>
    %89 = vector.shape_cast %88 : vector<1x1x16x16xf32> to vector<16x16xf32>
    %cst_104 = arith.constant dense<0.000000e+00> : vector<64x16xf32>
    %90 = tpu.matmul %87, %89, %cst_104 {dimension_numbers = #tpu.dot_dimension_numbers<[1], [0], [0], [1], [0, 0, 1, 1], [], []>} : vector<64x16xf32>, vector<16x16xf32>, vector<64x16xf32> -> vector<64x16xf32>
    %91 = arith.addf %85, %90 : vector<64x16xf32>
    %c1_105 = arith.constant 1 : index
    %c8_106 = arith.constant 8 : index
    %c0_107 = arith.constant 0 : index
    %92 = vector.load %arg9[%c1_105, %c8_106, %c0_107] : memref<9x16x16xf32, #tpu.memory_space<vmem>>, vector<8x8x16xf32>
    %93 = vector.shape_cast %92 : vector<8x8x16xf32> to vector<64x16xf32>
    %c0_108 = arith.constant 0 : index
    %c3_109 = arith.constant 3 : index
    %c0_110 = arith.constant 0 : index
    %c0_111 = arith.constant 0 : index
    %94 = vector.load %arg6[%c0_108, %c3_109, %c0_110, %c0_111] : memref<2x4x16x16xf32, #tpu.memory_space<vmem>>, vector<1x1x16x16xf32>
    %95 = vector.shape_cast %94 : vector<1x1x16x16xf32> to vector<16x16xf32>
    %cst_112 = arith.constant dense<0.000000e+00> : vector<64x16xf32>
    %96 = tpu.matmul %93, %95, %cst_112 {dimension_numbers = #tpu.dot_dimension_numbers<[1], [0], [0], [1], [0, 0, 1, 1], [], []>} : vector<64x16xf32>, vector<16x16xf32>, vector<64x16xf32> -> vector<64x16xf32>
    %97 = arith.addf %91, %96 : vector<64x16xf32>
    %c0_113 = arith.constant 0 : index
    %c0_114 = arith.constant 0 : index
    %c0_115 = arith.constant 0 : index
    %98 = vector.load %arg7[%c0_113, %c0_114, %c0_115] : memref<2x1x16xf32, #tpu.memory_space<vmem>>, vector<1x1x16xf32>
    %99 = vector.shape_cast %98 : vector<1x1x16xf32> to vector<1x16xf32>
    %100 = vector.broadcast %99 : vector<1x16xf32> to vector<64x16xf32>
    %101 = arith.addf %97, %100 : vector<64x16xf32>
    %102 = arith.negf %101 : vector<64x16xf32>
    %103 = math.exp %102 : vector<64x16xf32>
    %cst_116 = arith.constant 1.000000e+00 : f32
    %104 = vector.broadcast %cst_116 : f32 to vector<64x16xf32>
    %105 = arith.addf %104, %103 : vector<64x16xf32>
    %106 = arith.divf %104, %105 : vector<64x16xf32>
    %107 = arith.mulf %74, %106 : vector<64x16xf32>
    %108 = arith.addf %4, %107 : vector<64x16xf32>
    %cst_117 = arith.constant 0.000000e+00 : f32
    %109 = vector.broadcast %cst_117 : f32 to vector<64x16xf32>
    %110 = arith.cmpf ogt, %108, %109 : vector<64x16xf32>
    %111 = math.exp %108 : vector<64x16xf32>
    %cst_118 = arith.constant 1.000000e+00 : f32
    %112 = vector.broadcast %cst_118 : f32 to vector<64x16xf32>
    %113 = arith.subf %111, %112 : vector<64x16xf32>
    %114 = arith.select %110, %108, %113 : vector<64x16xi1>, vector<64x16xf32>
    %115 = vector.shape_cast %114 : vector<64x16xf32> to vector<8x8x16xf32>
    %c1_119 = arith.constant 1 : index
    %c8_120 = arith.constant 8 : index
    %c0_121 = arith.constant 0 : index
    %116 = vector.load %arg9[%c1_119, %c8_120, %c0_121] : memref<9x16x16xf32, #tpu.memory_space<vmem>>, vector<8x8x16xf32>
    tpu.vector_store %arg9[%c1_119, %c8_120, %c0_121], %115 {strides = array<i32>} : memref<9x16x16xf32, #tpu.memory_space<vmem>>, vector<8x8x16xf32>,
    %c0_122 = arith.constant 0 : index
    %c7_123 = arith.constant 7 : index
    %c0_124 = arith.constant 0 : index
    %117 = vector.load %arg9[%c0_122, %c7_123, %c0_124] : memref<9x16x16xf32, #tpu.memory_space<vmem>>, vector<8x8x16xf32>
    %118 = vector.shape_cast %117 : vector<8x8x16xf32> to vector<64x16xf32>
    %c1_125 = arith.constant 1 : index
    %c0_126 = arith.constant 0 : index
    %c0_127 = arith.constant 0 : index
    %c0_128 = arith.constant 0 : index
    %119 = vector.load %arg2[%c1_125, %c0_126, %c0_127, %c0_128] : memref<2x4x16x16xf32, #tpu.memory_space<vmem>>, vector<1x1x16x16xf32>
    %120 = vector.shape_cast %119 : vector<1x1x16x16xf32> to vector<16x16xf32>
    %cst_129 = arith.constant dense<0.000000e+00> : vector<64x16xf32>
    %121 = tpu.matmul %118, %120, %cst_129 {dimension_numbers = #tpu.dot_dimension_numbers<[1], [0], [0], [1], [0, 0, 1, 1], [], []>} : vector<64x16xf32>, vector<16x16xf32>, vector<64x16xf32> -> vector<64x16xf32>
    %c0_130 = arith.constant 0 : index
    %c8_131 = arith.constant 8 : index
    %c0_132 = arith.constant 0 : index
    %122 = vector.load %arg9[%c0_130, %c8_131, %c0_132] : memref<9x16x16xf32, #tpu.memory_space<vmem>>, vector<8x8x16xf32>
    %123 = vector.shape_cast %122 : vector<8x8x16xf32> to vector<64x16xf32>
    %c1_133 = arith.constant 1 : index
    %c1_134 = arith.constant 1 : index
    %c0_135 = arith.constant 0 : index
    %c0_136 = arith.constant 0 : index
    %124 = vector.load %arg2[%c1_133, %c1_134, %c0_135, %c0_136] : memref<2x4x16x16xf32, #tpu.memory_space<vmem>>, vector<1x1x16x16xf32>
    %125 = vector.shape_cast %124 : vector<1x1x16x16xf32> to vector<16x16xf32>
    %cst_137 = arith.constant dense<0.000000e+00> : vector<64x16xf32>
    %126 = tpu.matmul %123, %125, %cst_137 {dimension_numbers = #tpu.dot_dimension_numbers<[1], [0], [0], [1], [0, 0, 1, 1], [], []>} : vector<64x16xf32>, vector<16x16xf32>, vector<64x16xf32> -> vector<64x16xf32>
    %127 = arith.addf %121, %126 : vector<64x16xf32>
    %c1_138 = arith.constant 1 : index
    %c7_139 = arith.constant 7 : index
    %c0_140 = arith.constant 0 : index
    %128 = vector.load %arg9[%c1_138, %c7_139, %c0_140] : memref<9x16x16xf32, #tpu.memory_space<vmem>>, vector<8x8x16xf32>
    %129 = vector.shape_cast %128 : vector<8x8x16xf32> to vector<64x16xf32>
    %c1_141 = arith.constant 1 : index
    %c2_142 = arith.constant 2 : index
    %c0_143 = arith.constant 0 : index
    %c0_144 = arith.constant 0 : index
    %130 = vector.load %arg2[%c1_141, %c2_142, %c0_143, %c0_144] : memref<2x4x16x16xf32, #tpu.memory_space<vmem>>, vector<1x1x16x16xf32>
    %131 = vector.shape_cast %130 : vector<1x1x16x16xf32> to vector<16x16xf32>
    %cst_145 = arith.constant dense<0.000000e+00> : vector<64x16xf32>
    %132 = tpu.matmul %129, %131, %cst_145 {dimension_numbers = #tpu.dot_dimension_numbers<[1], [0], [0], [1], [0, 0, 1, 1], [], []>} : vector<64x16xf32>, vector<16x16xf32>, vector<64x16xf32> -> vector<64x16xf32>
    %133 = arith.addf %127, %132 : vector<64x16xf32>
    %c1_146 = arith.constant 1 : index
    %c8_147 = arith.constant 8 : index
    %c0_148 = arith.constant 0 : index
    %134 = vector.load %arg9[%c1_146, %c8_147, %c0_148] : memref<9x16x16xf32, #tpu.memory_space<vmem>>, vector<8x8x16xf32>
    %135 = vector.shape_cast %134 : vector<8x8x16xf32> to vector<64x16xf32>
    %c1_149 = arith.constant 1 : index
    %c3_150 = arith.constant 3 : index
    %c0_151 = arith.constant 0 : index
    %c0_152 = arith.constant 0 : index
    %136 = vector.load %arg2[%c1_149, %c3_150, %c0_151, %c0_152] : memref<2x4x16x16xf32, #tpu.memory_space<vmem>>, vector<1x1x16x16xf32>
    %137 = vector.shape_cast %136 : vector<1x1x16x16xf32> to vector<16x16xf32>
    %cst_153 = arith.constant dense<0.000000e+00> : vector<64x16xf32>
    %138 = tpu.matmul %135, %137, %cst_153 {dimension_numbers = #tpu.dot_dimension_numbers<[1], [0], [0], [1], [0, 0, 1, 1], [], []>} : vector<64x16xf32>, vector<16x16xf32>, vector<64x16xf32> -> vector<64x16xf32>
    %139 = arith.addf %133, %138 : vector<64x16xf32>
    %c1_154 = arith.constant 1 : index
    %c0_155 = arith.constant 0 : index
    %c0_156 = arith.constant 0 : index
    %140 = vector.load %arg3[%c1_154, %c0_155, %c0_156] : memref<2x1x16xf32, #tpu.memory_space<vmem>>, vector<1x1x16xf32>
    %141 = vector.shape_cast %140 : vector<1x1x16xf32> to vector<1x16xf32>
    %142 = vector.broadcast %141 : vector<1x16xf32> to vector<64x16xf32>
    %143 = arith.addf %139, %142 : vector<64x16xf32>
    %cst_157 = arith.constant 0.000000e+00 : f32
    %144 = vector.broadcast %cst_157 : f32 to vector<64x16xf32>
    %145 = arith.cmpf ogt, %143, %144 : vector<64x16xf32>
    %146 = math.exp %143 : vector<64x16xf32>
    %cst_158 = arith.constant 1.000000e+00 : f32
    %147 = vector.broadcast %cst_158 : f32 to vector<64x16xf32>
    %148 = arith.subf %146, %147 : vector<64x16xf32>
    %149 = arith.select %145, %143, %148 : vector<64x16xi1>, vector<64x16xf32>
    %150 = vector.shape_cast %149 : vector<64x16xf32> to vector<8x8x16xf32>
    %c1_159 = arith.constant 1 : index
    %c8_160 = arith.constant 8 : index
    %c0_161 = arith.constant 0 : index
    %151 = vector.load %arg9[%c1_159, %c8_160, %c0_161] : memref<9x16x16xf32, #tpu.memory_space<vmem>>, vector<8x8x16xf32>
    tpu.vector_store %arg9[%c1_159, %c8_160, %c0_161], %150 {strides = array<i32>} : memref<9x16x16xf32, #tpu.memory_space<vmem>>, vector<8x8x16xf32>,
    %c0_162 = arith.constant 0 : index
    %c7_163 = arith.constant 7 : index
    %c0_164 = arith.constant 0 : index
    %152 = vector.load %arg9[%c0_162, %c7_163, %c0_164] : memref<9x16x16xf32, #tpu.memory_space<vmem>>, vector<8x8x16xf32>
    %153 = vector.shape_cast %152 : vector<8x8x16xf32> to vector<64x16xf32>
    %c1_165 = arith.constant 1 : index
    %c0_166 = arith.constant 0 : index
    %c0_167 = arith.constant 0 : index
    %c0_168 = arith.constant 0 : index
    %154 = vector.load %arg4[%c1_165, %c0_166, %c0_167, %c0_168] : memref<2x4x16x16xf32, #tpu.memory_space<vmem>>, vector<1x1x16x16xf32>
    %155 = vector.shape_cast %154 : vector<1x1x16x16xf32> to vector<16x16xf32>
    %cst_169 = arith.constant dense<0.000000e+00> : vector<64x16xf32>
    %156 = tpu.matmul %153, %155, %cst_169 {dimension_numbers = #tpu.dot_dimension_numbers<[1], [0], [0], [1], [0, 0, 1, 1], [], []>} : vector<64x16xf32>, vector<16x16xf32>, vector<64x16xf32> -> vector<64x16xf32>
    %c0_170 = arith.constant 0 : index
    %c8_171 = arith.constant 8 : index
    %c0_172 = arith.constant 0 : index
    %157 = vector.load %arg9[%c0_170, %c8_171, %c0_172] : memref<9x16x16xf32, #tpu.memory_space<vmem>>, vector<8x8x16xf32>
    %158 = vector.shape_cast %157 : vector<8x8x16xf32> to vector<64x16xf32>
    %c1_173 = arith.constant 1 : index
    %c1_174 = arith.constant 1 : index
    %c0_175 = arith.constant 0 : index
    %c0_176 = arith.constant 0 : index
    %159 = vector.load %arg4[%c1_173, %c1_174, %c0_175, %c0_176] : memref<2x4x16x16xf32, #tpu.memory_space<vmem>>, vector<1x1x16x16xf32>
    %160 = vector.shape_cast %159 : vector<1x1x16x16xf32> to vector<16x16xf32>
    %cst_177 = arith.constant dense<0.000000e+00> : vector<64x16xf32>
    %161 = tpu.matmul %158, %160, %cst_177 {dimension_numbers = #tpu.dot_dimension_numbers<[1], [0], [0], [1], [0, 0, 1, 1], [], []>} : vector<64x16xf32>, vector<16x16xf32>, vector<64x16xf32> -> vector<64x16xf32>
    %162 = arith.addf %156, %161 : vector<64x16xf32>
    %c1_178 = arith.constant 1 : index
    %c7_179 = arith.constant 7 : index
    %c0_180 = arith.constant 0 : index
    %163 = vector.load %arg9[%c1_178, %c7_179, %c0_180] : memref<9x16x16xf32, #tpu.memory_space<vmem>>, vector<8x8x16xf32>
    %164 = vector.shape_cast %163 : vector<8x8x16xf32> to vector<64x16xf32>
    %c1_181 = arith.constant 1 : index
    %c2_182 = arith.constant 2 : index
    %c0_183 = arith.constant 0 : index
    %c0_184 = arith.constant 0 : index
    %165 = vector.load %arg4[%c1_181, %c2_182, %c0_183, %c0_184] : memref<2x4x16x16xf32, #tpu.memory_space<vmem>>, vector<1x1x16x16xf32>
    %166 = vector.shape_cast %165 : vector<1x1x16x16xf32> to vector<16x16xf32>
    %cst_185 = arith.constant dense<0.000000e+00> : vector<64x16xf32>
    %167 = tpu.matmul %164, %166, %cst_185 {dimension_numbers = #tpu.dot_dimension_numbers<[1], [0], [0], [1], [0, 0, 1, 1], [], []>} : vector<64x16xf32>, vector<16x16xf32>, vector<64x16xf32> -> vector<64x16xf32>
    %168 = arith.addf %162, %167 : vector<64x16xf32>
    %c1_186 = arith.constant 1 : index
    %c8_187 = arith.constant 8 : index
    %c0_188 = arith.constant 0 : index
    %169 = vector.load %arg9[%c1_186, %c8_187, %c0_188] : memref<9x16x16xf32, #tpu.memory_space<vmem>>, vector<8x8x16xf32>
    %170 = vector.shape_cast %169 : vector<8x8x16xf32> to vector<64x16xf32>
    %c1_189 = arith.constant 1 : index
    %c3_190 = arith.constant 3 : index
    %c0_191 = arith.constant 0 : index
    %c0_192 = arith.constant 0 : index
    %171 = vector.load %arg4[%c1_189, %c3_190, %c0_191, %c0_192] : memref<2x4x16x16xf32, #tpu.memory_space<vmem>>, vector<1x1x16x16xf32>
    %172 = vector.shape_cast %171 : vector<1x1x16x16xf32> to vector<16x16xf32>
    %cst_193 = arith.constant dense<0.000000e+00> : vector<64x16xf32>
    %173 = tpu.matmul %170, %172, %cst_193 {dimension_numbers = #tpu.dot_dimension_numbers<[1], [0], [0], [1], [0, 0, 1, 1], [], []>} : vector<64x16xf32>, vector<16x16xf32>, vector<64x16xf32> -> vector<64x16xf32>
    %174 = arith.addf %168, %173 : vector<64x16xf32>
    %c1_194 = arith.constant 1 : index
    %c0_195 = arith.constant 0 : index
    %c0_196 = arith.constant 0 : index
    %175 = vector.load %arg5[%c1_194, %c0_195, %c0_196] : memref<2x1x16xf32, #tpu.memory_space<vmem>>, vector<1x1x16xf32>
    %176 = vector.shape_cast %175 : vector<1x1x16xf32> to vector<1x16xf32>
    %177 = vector.broadcast %176 : vector<1x16xf32> to vector<64x16xf32>
    %178 = arith.addf %174, %177 : vector<64x16xf32>
    %c0_197 = arith.constant 0 : index
    %c7_198 = arith.constant 7 : index
    %c0_199 = arith.constant 0 : index
    %179 = vector.load %arg9[%c0_197, %c7_198, %c0_199] : memref<9x16x16xf32, #tpu.memory_space<vmem>>, vector<8x8x16xf32>
    %180 = vector.shape_cast %179 : vector<8x8x16xf32> to vector<64x16xf32>
    %c1_200 = arith.constant 1 : index
    %c0_201 = arith.constant 0 : index
    %c0_202 = arith.constant 0 : index
    %c0_203 = arith.constant 0 : index
    %181 = vector.load %arg6[%c1_200, %c0_201, %c0_202, %c0_203] : memref<2x4x16x16xf32, #tpu.memory_space<vmem>>, vector<1x1x16x16xf32>
    %182 = vector.shape_cast %181 : vector<1x1x16x16xf32> to vector<16x16xf32>
    %cst_204 = arith.constant dense<0.000000e+00> : vector<64x16xf32>
    %183 = tpu.matmul %180, %182, %cst_204 {dimension_numbers = #tpu.dot_dimension_numbers<[1], [0], [0], [1], [0, 0, 1, 1], [], []>} : vector<64x16xf32>, vector<16x16xf32>, vector<64x16xf32> -> vector<64x16xf32>
    %c0_205 = arith.constant 0 : index
    %c8_206 = arith.constant 8 : index
    %c0_207 = arith.constant 0 : index
    %184 = vector.load %arg9[%c0_205, %c8_206, %c0_207] : memref<9x16x16xf32, #tpu.memory_space<vmem>>, vector<8x8x16xf32>
    %185 = vector.shape_cast %184 : vector<8x8x16xf32> to vector<64x16xf32>
    %c1_208 = arith.constant 1 : index
    %c1_209 = arith.constant 1 : index
    %c0_210 = arith.constant 0 : index
    %c0_211 = arith.constant 0 : index
    %186 = vector.load %arg6[%c1_208, %c1_209, %c0_210, %c0_211] : memref<2x4x16x16xf32, #tpu.memory_space<vmem>>, vector<1x1x16x16xf32>
    %187 = vector.shape_cast %186 : vector<1x1x16x16xf32> to vector<16x16xf32>
    %cst_212 = arith.constant dense<0.000000e+00> : vector<64x16xf32>
    %188 = tpu.matmul %185, %187, %cst_212 {dimension_numbers = #tpu.dot_dimension_numbers<[1], [0], [0], [1], [0, 0, 1, 1], [], []>} : vector<64x16xf32>, vector<16x16xf32>, vector<64x16xf32> -> vector<64x16xf32>
    %189 = arith.addf %183, %188 : vector<64x16xf32>
    %c1_213 = arith.constant 1 : index
    %c7_214 = arith.constant 7 : index
    %c0_215 = arith.constant 0 : index
    %190 = vector.load %arg9[%c1_213, %c7_214, %c0_215] : memref<9x16x16xf32, #tpu.memory_space<vmem>>, vector<8x8x16xf32>
    %191 = vector.shape_cast %190 : vector<8x8x16xf32> to vector<64x16xf32>
    %c1_216 = arith.constant 1 : index
    %c2_217 = arith.constant 2 : index
    %c0_218 = arith.constant 0 : index
    %c0_219 = arith.constant 0 : index
    %192 = vector.load %arg6[%c1_216, %c2_217, %c0_218, %c0_219] : memref<2x4x16x16xf32, #tpu.memory_space<vmem>>, vector<1x1x16x16xf32>
    %193 = vector.shape_cast %192 : vector<1x1x16x16xf32> to vector<16x16xf32>
    %cst_220 = arith.constant dense<0.000000e+00> : vector<64x16xf32>
    %194 = tpu.matmul %191, %193, %cst_220 {dimension_numbers = #tpu.dot_dimension_numbers<[1], [0], [0], [1], [0, 0, 1, 1], [], []>} : vector<64x16xf32>, vector<16x16xf32>, vector<64x16xf32> -> vector<64x16xf32>
    %195 = arith.addf %189, %194 : vector<64x16xf32>
    %c1_221 = arith.constant 1 : index
    %c8_222 = arith.constant 8 : index
    %c0_223 = arith.constant 0 : index
    %196 = vector.load %arg9[%c1_221, %c8_222, %c0_223] : memref<9x16x16xf32, #tpu.memory_space<vmem>>, vector<8x8x16xf32>
    %197 = vector.shape_cast %196 : vector<8x8x16xf32> to vector<64x16xf32>
    %c1_224 = arith.constant 1 : index
    %c3_225 = arith.constant 3 : index
    %c0_226 = arith.constant 0 : index
    %c0_227 = arith.constant 0 : index
    %198 = vector.load %arg6[%c1_224, %c3_225, %c0_226, %c0_227] : memref<2x4x16x16xf32, #tpu.memory_space<vmem>>, vector<1x1x16x16xf32>
    %199 = vector.shape_cast %198 : vector<1x1x16x16xf32> to vector<16x16xf32>
    %cst_228 = arith.constant dense<0.000000e+00> : vector<64x16xf32>
    %200 = tpu.matmul %197, %199, %cst_228 {dimension_numbers = #tpu.dot_dimension_numbers<[1], [0], [0], [1], [0, 0, 1, 1], [], []>} : vector<64x16xf32>, vector<16x16xf32>, vector<64x16xf32> -> vector<64x16xf32>
    %201 = arith.addf %195, %200 : vector<64x16xf32>
    %c1_229 = arith.constant 1 : index
    %c0_230 = arith.constant 0 : index
    %c0_231 = arith.constant 0 : index
    %202 = vector.load %arg7[%c1_229, %c0_230, %c0_231] : memref<2x1x16xf32, #tpu.memory_space<vmem>>, vector<1x1x16xf32>
    %203 = vector.shape_cast %202 : vector<1x1x16xf32> to vector<1x16xf32>
    %204 = vector.broadcast %203 : vector<1x16xf32> to vector<64x16xf32>
    %205 = arith.addf %201, %204 : vector<64x16xf32>
    %206 = arith.negf %205 : vector<64x16xf32>
    %207 = math.exp %206 : vector<64x16xf32>
    %cst_232 = arith.constant 1.000000e+00 : f32
    %208 = vector.broadcast %cst_232 : f32 to vector<64x16xf32>
    %209 = arith.addf %208, %207 : vector<64x16xf32>
    %210 = arith.divf %208, %209 : vector<64x16xf32>
    %211 = arith.mulf %178, %210 : vector<64x16xf32>
    %212 = arith.addf %108, %211 : vector<64x16xf32>
    %213 = vector.shape_cast %212 : vector<64x16xf32> to vector<8x8x16xf32>
    %c0_233 = arith.constant 0 : index
    %c0_234 = arith.constant 0 : index
    %c0_235 = arith.constant 0 : index
    %c0_236 = arith.constant 0 : index
    %214 = vector.load %arg8[%c0_233, %c0_234, %c0_235, %c0_236] : memref<1x8x8x16xf32, #tpu.memory_space<vmem>>, vector<1x8x8x16xf32>
    %215 = vector.shape_cast %214 : vector<1x8x8x16xf32> to vector<8x8x16xf32>
    %216 = vector.shape_cast %213 : vector<8x8x16xf32> to vector<1x8x8x16xf32>
    tpu.vector_store %arg8[%c0_233, %c0_234, %c0_235, %c0_236], %216 {strides = array<i32>} : memref<1x8x8x16xf32, #tpu.memory_space<vmem>>, vector<1x8x8x16xf32>,
    return
  }
  func.func @transform_0(%arg0: i32) -> (i32, i32, i32, i32) {
    %c0_i32 = arith.constant 0 : i32
    %c0_i32_0 = arith.constant 0 : i32
    %c0_i32_1 = arith.constant 0 : i32
    %c0_i32_2 = arith.constant 0 : i32
    return %arg0, %c0_i32, %c0_i32_0, %c0_i32_1 : i32, i32, i32, i32
  }
  func.func @transform_1(%arg0: i32) -> (i32, i32, i32, i32) {
    %c0_i32 = arith.constant 0 : i32
    %c0_i32_0 = arith.constant 0 : i32
    %c0_i32_1 = arith.constant 0 : i32
    %c0_i32_2 = arith.constant 0 : i32
    %c0_i32_3 = arith.constant 0 : i32
    return %c0_i32, %c0_i32_0, %c0_i32_1, %c0_i32_2 : i32, i32, i32, i32
  }
  func.func @transform_2(%arg0: i32) -> (i32, i32, i32) {
    %c0_i32 = arith.constant 0 : i32
    %c0_i32_0 = arith.constant 0 : i32
    %c0_i32_1 = arith.constant 0 : i32
    %c0_i32_2 = arith.constant 0 : i32
    return %c0_i32, %c0_i32_0, %c0_i32_1 : i32, i32, i32
  }
  func.func @transform_3(%arg0: i32) -> (i32, i32, i32, i32) {
    %c0_i32 = arith.constant 0 : i32
    %c0_i32_0 = arith.constant 0 : i32
    %c0_i32_1 = arith.constant 0 : i32
    %c0_i32_2 = arith.constant 0 : i32
    %c0_i32_3 = arith.constant 0 : i32
    return %c0_i32, %c0_i32_0, %c0_i32_1, %c0_i32_2 : i32, i32, i32, i32
  }
  func.func @transform_4(%arg0: i32) -> (i32, i32, i32) {
    %c0_i32 = arith.constant 0 : i32
    %c0_i32_0 = arith.constant 0 : i32
    %c0_i32_1 = arith.constant 0 : i32
    %c0_i32_2 = arith.constant 0 : i32
    return %c0_i32, %c0_i32_0, %c0_i32_1 : i32, i32, i32
  }
  func.func @transform_5(%arg0: i32) -> (i32, i32, i32, i32) {
    %c0_i32 = arith.constant 0 : i32
    %c0_i32_0 = arith.constant 0 : i32
    %c0_i32_1 = arith.constant 0 : i32
    %c0_i32_2 = arith.constant 0 : i32
    %c0_i32_3 = arith.constant 0 : i32
    return %c0_i32, %c0_i32_0, %c0_i32_1, %c0_i32_2 : i32, i32, i32, i32
  }
  func.func @transform_6(%arg0: i32) -> (i32, i32, i32) {
    %c0_i32 = arith.constant 0 : i32
    %c0_i32_0 = arith.constant 0 : i32
    %c0_i32_1 = arith.constant 0 : i32
    %c0_i32_2 = arith.constant 0 : i32
    return %c0_i32, %c0_i32_0, %c0_i32_1 : i32, i32, i32
  }
  func.func @transform_7(%arg0: i32) -> (i32, i32, i32, i32) {
    %c0_i32 = arith.constant 0 : i32
    %c0_i32_0 = arith.constant 0 : i32
    %c0_i32_1 = arith.constant 0 : i32
    %c0_i32_2 = arith.constant 0 : i32
    return %arg0, %c0_i32, %c0_i32_0, %c0_i32_1 : i32, i32, i32, i32
  }
}

</mosaic_0001>

<llo_original>
// kernel: tpu_custom_call.1
$region0: #{tpu_custom_call.1}
  #allocation0 [shape = 'u32[]', space=smem, size = 0x4, offset = 0x4, fixed_abs, tag = 'smem constant byte address 0x4 - core index']
  #allocation1 [shape = 'u32[144,128]{1,0:T(1,128)}', space=vmem, size = 0x12000, scoped, tag = 'internal scratch']
  #allocation2 [shape = 'f32[9,16,16]{2,1,0:T(8,128)}', space=vmem, size = 0x12000, scoped, tag = 'scratch operand']
  %s0 = inlined_call_operand.hbm [shape: f32[2,8,8,16], index: 0, kind: input, shape index: {}]
  %s1 = inlined_call_operand.hbm [shape: f32[2,4,16,16], index: 1, kind: input, shape index: {}]
  %s2 = inlined_call_operand.vmem [shape: f32[2,1,16], index: 2, kind: input, shape index: {}]
  %s3 = inlined_call_operand.hbm [shape: f32[2,4,16,16], index: 3, kind: input, shape index: {}]
  %s4 = inlined_call_operand.vmem [shape: f32[2,1,16], index: 4, kind: input, shape index: {}]
  %s5 = inlined_call_operand.hbm [shape: f32[2,4,16,16], index: 5, kind: input, shape index: {}]
  %s6 = inlined_call_operand.vmem [shape: f32[2,1,16], index: 6, kind: input, shape index: {}]
  %s7 = inlined_call_operand.hbm [shape: f32[2,8,8,16], index: 7, kind: output, shape index: {}]
  %s8 = sld [smem:[#allocation0]]
  $region77: #{tpu_custom_call.1} parent=0
    _
  %s10 = ssub.s32 1, %s8
  %s11 = scalar_select 0, %s10, %s8
  $region1: #{tpu_custom_call.1} parent=0
    #allocation3 [shape = 'u8[65536]{0}', space=vmem, size = 0x10000, scoped, tag = 'input window, operand 0']
    #allocation4 [shape = 's32[2]{0}', space=sflag, size = 0x8, scoped, tag = 'scoped memory for tpu_custom_call.1']
    #allocation5 [shape = 's32[2]{0}', space=sflag, size = 0x8, scoped, tag = 'scoped memory for tpu_custom_call.1']
    #allocation6 [shape = 'u8[65536]{0}', space=vmem, size = 0x10000, scoped, tag = 'input window, operand 1, single buffered']
    #allocation7 [shape = 's32[1]{0}', space=sflag, size = 0x4, scoped, tag = 'scoped memory for tpu_custom_call.1']
    #allocation8 [shape = 'u8[65536]{0}', space=vmem, size = 0x10000, scoped, tag = 'input window, operand 3, single buffered']
    #allocation9 [shape = 'u8[65536]{0}', space=vmem, size = 0x10000, scoped, tag = 'input window, operand 5, single buffered']
    #allocation10 [shape = 's32[1]{0}', space=sflag, size = 0x4, scoped, tag = 'scoped memory for tpu_custom_call.1']
    #allocation11 [shape = 'u8[65536]{0}', space=vmem, size = 0x10000, scoped, tag = 'output window, operand 0']
    %12 = vsyncpa [#allocation4], 0
    %s13 = scalar_lea.sflag [#allocation4], 1
    %14 = vsyncpa %s13, 0
    %15 = vsyncpa [#allocation7], 0
    %16 = vsyncpa [#allocation10], 0
    %17 = vsyncpa [#allocation5], 0
    %s18 = scalar_lea.sflag [#allocation5], 1
    %19 = vsyncpa %s18, 0
    loop: start=0, step=1, limit=4
    $region2: #{tpu_custom_call.1} parent=1 // loop_pre_header
      _
    $region3: #{tpu_custom_call.1} parent=1 // loop_header
      %s21 = sphi 0, %s25
      %p22 = scmp.ge.s32.totalorder %s21, 4
      %s31 = sphi 0, %s33
      %s34 = sphi 0, %s31
      %s35 = sphi 0, %s34
      %s51 = sphi 0, %s35
      %s55 = sphi 0, %s55
      %s57 = sphi 0, %s55
      %s58 = sphi 0, %s57
      %s72 = sphi 0, %s58
      %s76 = sphi 0, %s76
      %s78 = sphi 0, %s76
      %s79 = sphi 0, %s78
      %s93 = sphi 0, %s79
      %s97 = sphi 0, %s97
      %s99 = sphi 0, %s97
      %s100 = sphi 0, %s99
      %s114 = sphi 0, %s100
      %s118 = sphi 0, %s118
      %s120 = sphi 0, %s118
      %s121 = sphi 0, %s120
      %s135 = sphi 0, %s121
      %s139 = sphi 0, %s139
      %s141 = sphi 0, %s139
      %s142 = sphi 0, %s141
      %s156 = sphi 0, %s142
      %s160 = sphi 0, %s160
      %s162 = sphi 0, %s160
      %s163 = sphi 0, %s162
      %s177 = sphi 0, %s163
      %s183 = sphi 0, %s185
      %s186 = sphi 0, %s183
      %s187 = sphi 0, %s186
      %s203 = sphi 0, %s187
    $region4: #{tpu_custom_call.1} parent=1 // loop_header_branch
      %24 = sbr.rel (%p22) target = $region8
    $region5: #{tpu_custom_call.1} parent=1 // loop_body
      %s26 = ssub.s32 %s21, 1
      %s27 = ssub.s32 %s21, 2
      %s28 = sadd.s32 %s21, 1
      %s29 = ssub.s32 %s21, %s28
      %p30 = scmp.eq.s32.totalorder %s29, 0
      %s32 = sadd.s32 %s31, 1
      %s33 = scalar_select %p30, %s31, %s32
      %p36 = pneg %p30
      %p37 = scmp.eq.s32.totalorder %s21, 1
      %p38 = por %p36, %p37
      %p39 = scmp.ne.s32.totalorder %s31, %s34
      %p40 = scmp.eq.s32.totalorder %s21, 0
      %p41 = por %p39, %p40
      %p42 = scmp.ne.s32.totalorder %s31, %s34
      %p43 = scmp.eq.s32.totalorder %s26, 1
      %p44 = por %p42, %p43
      %p45 = scmp.ne.s32.totalorder %s34, %s35
      %p46 = scmp.eq.s32.totalorder %s26, 0
      %p47 = por %p45, %p46
      %p48 = scmp.ne.s32.totalorder %s34, %s35
      %p49 = scmp.eq.s32.totalorder %s27, 1
      %p50 = por %p48, %p49
      %p52 = scmp.ne.s32.totalorder %s35, %s51
      %p53 = scmp.eq.s32.totalorder %s27, 0
      %p54 = por %p52, %p53
      %s56 = sadd.s32 %s55, 1
      %p59 = scmp.eq.s32.totalorder %s21, 1
      %p60 = scmp.ne.s32.totalorder %s55, %s57
      %p61 = scmp.eq.s32.totalorder %s21, 0
      %p62 = por %p60, %p61
      %p63 = scmp.ne.s32.totalorder %s55, %s57
      %p64 = scmp.eq.s32.totalorder %s26, 1
      %p65 = por %p63, %p64
      %p66 = scmp.ne.s32.totalorder %s57, %s58
      %p67 = scmp.eq.s32.totalorder %s26, 0
      %p68 = por %p66, %p67
      %p69 = scmp.ne.s32.totalorder %s57, %s58
      %p70 = scmp.eq.s32.totalorder %s27, 1
      %p71 = por %p69, %p70
      %p73 = scmp.ne.s32.totalorder %s58, %s72
      %p74 = scmp.eq.s32.totalorder %s27, 0
      %p75 = por %p73, %p74
      %s77 = sadd.s32 %s76, 1
      %p80 = scmp.eq.s32.totalorder %s21, 1
      %p81 = scmp.ne.s32.totalorder %s76, %s78
      %p82 = scmp.eq.s32.totalorder %s21, 0
      %p83 = por %p81, %p82
      %p84 = scmp.ne.s32.totalorder %s76, %s78
      %p85 = scmp.eq.s32.totalorder %s26, 1
      %p86 = por %p84, %p85
      %p87 = scmp.ne.s32.totalorder %s78, %s79
      %p88 = scmp.eq.s32.totalorder %s26, 0
      %p89 = por %p87, %p88
      %p90 = scmp.ne.s32.totalorder %s78, %s79
      %p91 = scmp.eq.s32.totalorder %s27, 1
      %p92 = por %p90, %p91
      %p94 = scmp.ne.s32.totalorder %s79, %s93
      %p95 = scmp.eq.s32.totalorder %s27, 0
      %p96 = por %p94, %p95
      %s98 = sadd.s32 %s97, 1
      %p101 = scmp.eq.s32.totalorder %s21, 1
      %p102 = scmp.ne.s32.totalorder %s97, %s99
      %p103 = scmp.eq.s32.totalorder %s21, 0
      %p104 = por %p102, %p103
      %p105 = scmp.ne.s32.totalorder %s97, %s99
      %p106 = scmp.eq.s32.totalorder %s26, 1
      %p107 = por %p105, %p106
      %p108 = scmp.ne.s32.totalorder %s99, %s100
      %p109 = scmp.eq.s32.totalorder %s26, 0
      %p110 = por %p108, %p109
      %p111 = scmp.ne.s32.totalorder %s99, %s100
      %p112 = scmp.eq.s32.totalorder %s27, 1
      %p113 = por %p111, %p112
      %p115 = scmp.ne.s32.totalorder %s100, %s114
      %p116 = scmp.eq.s32.totalorder %s27, 0
      %p117 = por %p115, %p116
      %s119 = sadd.s32 %s118, 1
      %p122 = scmp.eq.s32.totalorder %s21, 1
      %p123 = scmp.ne.s32.totalorder %s118, %s120
      %p124 = scmp.eq.s32.totalorder %s21, 0
      %p125 = por %p123, %p124
      %p126 = scmp.ne.s32.totalorder %s118, %s120
      %p127 = scmp.eq.s32.totalorder %s26, 1
      %p128 = por %p126, %p127
      %p129 = scmp.ne.s32.totalorder %s120, %s121
      %p130 = scmp.eq.s32.totalorder %s26, 0
      %p131 = por %p129, %p130
      %p132 = scmp.ne.s32.totalorder %s120, %s121
      %p133 = scmp.eq.s32.totalorder %s27, 1
      %p134 = por %p132, %p133
      %p136 = scmp.ne.s32.totalorder %s121, %s135
      %p137 = scmp.eq.s32.totalorder %s27, 0
      %p138 = por %p136, %p137
      %s140 = sadd.s32 %s139, 1
      %p143 = scmp.eq.s32.totalorder %s21, 1
      %p144 = scmp.ne.s32.totalorder %s139, %s141
      %p145 = scmp.eq.s32.totalorder %s21, 0
      %p146 = por %p144, %p145
      %p147 = scmp.ne.s32.totalorder %s139, %s141
      %p148 = scmp.eq.s32.totalorder %s26, 1
      %p149 = por %p147, %p148
      %p150 = scmp.ne.s32.totalorder %s141, %s142
      %p151 = scmp.eq.s32.totalorder %s26, 0
      %p152 = por %p150, %p151
      %p153 = scmp.ne.s32.totalorder %s141, %s142
      %p154 = scmp.eq.s32.totalorder %s27, 1
      %p155 = por %p153, %p154
      %p157 = scmp.ne.s32.totalorder %s142, %s156
      %p158 = scmp.eq.s32.totalorder %s27, 0
      %p159 = por %p157, %p158
      %s161 = sadd.s32 %s160, 1
      %p164 = scmp.eq.s32.totalorder %s21, 1
      %p165 = scmp.ne.s32.totalorder %s160, %s162
      %p166 = scmp.eq.s32.totalorder %s21, 0
      %p167 = por %p165, %p166
      %p168 = scmp.ne.s32.totalorder %s160, %s162
      %p169 = scmp.eq.s32.totalorder %s26, 1
      %p170 = por %p168, %p169
      %p171 = scmp.ne.s32.totalorder %s162, %s163
      %p172 = scmp.eq.s32.totalorder %s26, 0
      %p173 = por %p171, %p172
      %p174 = scmp.ne.s32.totalorder %s162, %s163
      %p175 = scmp.eq.s32.totalorder %s27, 1
      %p176 = por %p174, %p175
      %p178 = scmp.ne.s32.totalorder %s163, %s177
      %p179 = scmp.eq.s32.totalorder %s27, 0
      %p180 = por %p178, %p179
      %s181 = ssub.s32 %s21, %s28
      %p182 = scmp.eq.s32.totalorder %s181, 0
      %s184 = sadd.s32 %s183, 1
      %s185 = scalar_select %p182, %s183, %s184
      %p188 = pneg %p182
      %p189 = scmp.eq.s32.totalorder %s21, 1
      %p190 = por %p188, %p189
      %p191 = scmp.ne.s32.totalorder %s183, %s186
      %p192 = scmp.eq.s32.totalorder %s21, 0
      %p193 = por %p191, %p192
      %p194 = scmp.ne.s32.totalorder %s183, %s186
      %p195 = scmp.eq.s32.totalorder %s26, 1
      %p196 = por %p194, %p195
      %p197 = scmp.ne.s32.totalorder %s186, %s187
      %p198 = scmp.eq.s32.totalorder %s26, 0
      %p199 = por %p197, %p198
      %p200 = scmp.ne.s32.totalorder %s186, %s187
      %p201 = scmp.eq.s32.totalorder %s27, 1
      %p202 = por %p200, %p201
      %p204 = scmp.ne.s32.totalorder %s187, %s203
      %p205 = scmp.eq.s32.totalorder %s27, 0
      %p206 = por %p204, %p205
      %p207 = scmp.le.s32.totalorder 1, %s21
      %p208 = scmp.lt.s32.totalorder %s21, 3
      %p209 = pnand %p207, %p208
      %p210 = pneg %p209
      // Predicated region
      $region9: #{tpu_custom_call.1} parent=5 // pred_check
        _
      $region10: #{tpu_custom_call.1} parent=5 // pred_check_branch
        %212 = sbr.rel (%p209) target = $region12
      $region11: #{tpu_custom_call.1} parent=5 // pred_region
        %s213 = ssub.s32 %s21, 1
        // Predicated region
        $region13: #{tpu_custom_call.1} parent=11 // pred_check
          %p214 = pneg %p68
        $region14: #{tpu_custom_call.1} parent=11 // pred_check_branch
          %216 = sbr.rel (%p214) target = $region16
        $region15: #{tpu_custom_call.1} parent=11 // pred_region
          %s218 = ssub.s32 2048, 2048
          %219 = vsyncadd [#allocation7], %s218
          %s220 = sshll.u32 [#allocation6], 4
          %s221 = int_to_ptr.vmem [resolvable:$true] %s220
          %226 = dma.hbm_to_vmem [thread:$0]  %s1, 2048, %s221, [#allocation7], 128, 128, 8
        $region16: #{tpu_custom_call.1} parent=11 // pred_fallthru
          _
        // Predicated region
        $region17: #{tpu_custom_call.1} parent=11 // pred_check
          %p227 = pneg %p89
        $region18: #{tpu_custom_call.1} parent=11 // pred_check_branch
          %229 = sbr.rel (%p227) target = $region20
        $region19: #{tpu_custom_call.1} parent=11 // pred_region
          _
        $region20: #{tpu_custom_call.1} parent=11 // pred_fallthru
          _
        // Predicated region
        $region21: #{tpu_custom_call.1} parent=11 // pred_check
          %p230 = pneg %p110
        $region22: #{tpu_custom_call.1} parent=11 // pred_check_branch
          %232 = sbr.rel (%p230) target = $region24
        $region23: #{tpu_custom_call.1} parent=11 // pred_region
          %s234 = ssub.s32 2048, 2048
          %235 = vsyncadd [#allocation7], %s234
          %s236 = sshll.u32 [#allocation8], 4
          %s237 = int_to_ptr.vmem [resolvable:$true] %s236
          %242 = dma.hbm_to_vmem [thread:$0]  %s3, 2048, %s237, [#allocation7], 128, 128, 8
        $region24: #{tpu_custom_call.1} parent=11 // pred_fallthru
          _
        // Predicated region
        $region25: #{tpu_custom_call.1} parent=11 // pred_check
          %p243 = pneg %p131
        $region26: #{tpu_custom_call.1} parent=11 // pred_check_branch
          %245 = sbr.rel (%p243) target = $region28
        $region27: #{tpu_custom_call.1} parent=11 // pred_region
          _
        $region28: #{tpu_custom_call.1} parent=11 // pred_fallthru
          _
        // Predicated region
        $region29: #{tpu_custom_call.1} parent=11 // pred_check
          %p246 = pneg %p152
        $region30: #{tpu_custom_call.1} parent=11 // pred_check_branch
          %248 = sbr.rel (%p246) target = $region32
        $region31: #{tpu_custom_call.1} parent=11 // pred_region
          %s250 = ssub.s32 2048, 2048
          %251 = vsyncadd [#allocation10], %s250
          %s252 = sshll.u32 [#allocation9], 4
          %s253 = int_to_ptr.vmem [resolvable:$true] %s252
          %258 = dma.hbm_to_vmem [thread:$0]  %s5, 2048, %s253, [#allocation10], 128, 128, 8
        $region32: #{tpu_custom_call.1} parent=11 // pred_fallthru
          _
        // Predicated region
        $region33: #{tpu_custom_call.1} parent=11 // pred_check
          %p259 = pneg %p173
        $region34: #{tpu_custom_call.1} parent=11 // pred_check_branch
          %261 = sbr.rel (%p259) target = $region36
        $region35: #{tpu_custom_call.1} parent=11 // pred_region
          _
        $region36: #{tpu_custom_call.1} parent=11 // pred_fallthru
          _
      $region12: #{tpu_custom_call.1} parent=5 // pred_fallthru
        _
      %p262 = scmp.lt.s32.totalorder %s21, 2
      // Predicated region
      $region37: #{tpu_custom_call.1} parent=5 // pred_check
        %p263 = pneg %p262
      $region38: #{tpu_custom_call.1} parent=5 // pred_check_branch
        %265 = sbr.rel (%p263) target = $region40
      $region39: #{tpu_custom_call.1} parent=5 // pred_region
        // Predicated region
        $region41: #{tpu_custom_call.1} parent=39 // pred_check
          %p266 = pneg %p41
        $region42: #{tpu_custom_call.1} parent=39 // pred_check_branch
          %268 = sbr.rel (%p266) target = $region44
        $region43: #{tpu_custom_call.1} parent=39 // pred_region
          %s269 = sand.u32 %s31, 1
          %s270 = scalar_lea.sflag [#allocation4], %s269
          %s271 = sand.u32 %s31, 1
          %s272 = smul.addr %s271, 64
          %s273 = scalar_lea.vmem [#allocation3], %s272
          %s275 = ssub.s32 1024, 1024
          %276 = vsyncadd %s270, %s275
          %s277 = smul.addr %s21, 8
          %s278 = smul.addr %s277, 128
          %s279 = scalar_lea.hbm %s0, %s278
          %s280 = sshll.u32 %s273, 4
          %s281 = int_to_ptr.vmem [resolvable:$true] %s280
          %286 = dma.hbm_to_vmem [thread:$0]  %s279, 1024, %s281, %s270, 128, 128, 8
        $region44: #{tpu_custom_call.1} parent=39 // pred_fallthru
          _
      $region40: #{tpu_custom_call.1} parent=5 // pred_fallthru
        _
      %p287 = scmp.le.s32.totalorder 1, %s21
      %p288 = scmp.lt.s32.totalorder %s21, 3
      %p289 = pnand %p287, %p288
      %p290 = pneg %p289
      // Predicated region
      $region45: #{tpu_custom_call.1} parent=5 // pred_check
        _
      $region46: #{tpu_custom_call.1} parent=5 // pred_check_branch
        %292 = sbr.rel (%p289) target = $region48
      $region47: #{tpu_custom_call.1} parent=5 // pred_region
        %s293 = ssub.s32 %s21, 1
        %s294 = sand.u32 %s34, 1
        %s295 = scalar_lea.sflag [#allocation4], %s294
        %s296 = sand.u32 %s34, 1
        %s297 = smul.addr %s296, 64
        %s298 = scalar_lea.vmem [#allocation3], %s297
        // Predicated region
        $region49: #{tpu_custom_call.1} parent=47 // pred_check
          %p299 = pneg %p47
        $region50: #{tpu_custom_call.1} parent=47 // pred_check_branch
          %301 = sbr.rel (%p299) target = $region52
        $region51: #{tpu_custom_call.1} parent=47 // pred_region
          %302 = dma.done %s295, 1024
        $region52: #{tpu_custom_call.1} parent=47 // pred_fallthru
          _
        // Predicated region
        $region53: #{tpu_custom_call.1} parent=47 // pred_check
          %p303 = pneg %p68
        $region54: #{tpu_custom_call.1} parent=47 // pred_check_branch
          %305 = sbr.rel (%p303) target = $region56
        $region55: #{tpu_custom_call.1} parent=47 // pred_region
          %306 = dma.done [#allocation7], 2048
        $region56: #{tpu_custom_call.1} parent=47 // pred_fallthru
          _
        // Predicated region
        $region57: #{tpu_custom_call.1} parent=47 // pred_check
          %p307 = pneg %p110
        $region58: #{tpu_custom_call.1} parent=47 // pred_check_branch
          %309 = sbr.rel (%p307) target = $region60
        $region59: #{tpu_custom_call.1} parent=47 // pred_region
          %310 = dma.done [#allocation7], 2048
        $region60: #{tpu_custom_call.1} parent=47 // pred_fallthru
          _
        // Predicated region
        $region61: #{tpu_custom_call.1} parent=47 // pred_check
          %p311 = pneg %p152
        $region62: #{tpu_custom_call.1} parent=47 // pred_check_branch
          %313 = sbr.rel (%p311) target = $region64
        $region63: #{tpu_custom_call.1} parent=47 // pred_region
          %314 = dma.done [#allocation10], 2048
        $region64: #{tpu_custom_call.1} parent=47 // pred_fallthru
          _
        %s315 = sand.u32 %s34, 1
        %s316 = scalar_lea.sflag [#allocation4], %s315
        %s317 = sand.u32 %s34, 1
        %s318 = smul.addr %s317, 64
        %s319 = scalar_lea.vmem [#allocation3], %s318
        %p320 = pneg %p47
        %p321 = pneg %p44
        %p322 = pneg %p68
        %p323 = pneg %p65
        %p324 = pneg %p89
        %p325 = pneg %p86
        %p326 = pneg %p110
        %p327 = pneg %p107
        %p328 = pneg %p131
        %p329 = pneg %p128
        %p330 = pneg %p152
        %p331 = pneg %p149
        %p332 = pneg %p173
        %p333 = pneg %p170
        %p334 = pneg %p199
        %p335 = pneg %p196
        %s336 = sand.u32 %s186, 1
        %s337 = scalar_lea.sflag [#allocation5], %s336
        %s338 = sand.u32 %s186, 1
        %s339 = smul.addr %s338, 64
        %s340 = scalar_lea.vmem [#allocation11], %s339
        %vm341 = vcmask 130048
        %342 = vst.msk [vmem:[#allocation2] sm:$0xff] %vm341, 0.0
        %343 = vst.msk [vmem:[#allocation2 + $0x8] sm:$0xff] %vm341, 0.0
        %344 = vst.msk [vmem:[#allocation2 + $0x10] sm:$0xff] %vm341, 0.0
        %345 = vst.msk [vmem:[#allocation2 + $0x18] sm:$0xff] %vm341, 0.0
        %346 = vst.msk [vmem:[#allocation2 + $0x20] sm:$0xff] %vm341, 0.0
        %347 = vst.msk [vmem:[#allocation2 + $0x28] sm:$0xff] %vm341, 0.0
        %348 = vst.msk [vmem:[#allocation2 + $0x30] sm:$0xff] %vm341, 0.0
        %349 = vst.msk [vmem:[#allocation2 + $0x38] sm:$0xff] %vm341, 0.0
        %350 = vst.msk [vmem:[#allocation2 + $0x40] sm:$0xff] %vm341, 0.0
        %351 = vst.msk [vmem:[#allocation2 + $0x48] sm:$0xff] %vm341, 0.0
        %352 = vst.msk [vmem:[#allocation2 + $0x50] sm:$0xff] %vm341, 0.0
        %353 = vst.msk [vmem:[#allocation2 + $0x58] sm:$0xff] %vm341, 0.0
        %354 = vst.msk [vmem:[#allocation2 + $0x60] sm:$0xff] %vm341, 0.0
        %355 = vst.msk [vmem:[#allocation2 + $0x68] sm:$0xff] %vm341, 0.0
        %356 = vst.msk [vmem:[#allocation2 + $0x70] sm:$0xff] %vm341, 0.0
        %357 = vst.msk [vmem:[#allocation2 + $0x78] sm:$0xff] %vm341, 0.0
        %358 = vst.msk [vmem:[#allocation2 + $0x80] sm:$0xff] %vm341, 0.0
        %359 = vst.msk [vmem:[#allocation2 + $0x88] sm:$0xff] %vm341, 0.0
        %v360 = vld [vmem:[%s298] sm:$0xff]
        %v361 = vld [vmem:[%s298 + $0x8] sm:$0xff]
        %v362 = vld [vmem:[%s298 + $0x10] sm:$0xff]
        %v363 = vld [vmem:[%s298 + $0x18] sm:$0xff]
        %v364 = vld [vmem:[%s298 + $0x20] sm:$0xff]
        %v365 = vld [vmem:[%s298 + $0x28] sm:$0xff]
        %v366 = vld [vmem:[%s298 + $0x30] sm:$0xff]
        %v367 = vld [vmem:[%s298 + $0x38] sm:$0xff]
        %vm368 = vcmp.gt.f32.partialorder %v360, 0.0
        %vm369 = vcmp.gt.f32.partialorder %v361, 0.0
        %vm370 = vcmp.gt.f32.partialorder %v362, 0.0
        %vm371 = vcmp.gt.f32.partialorder %v363, 0.0
        %vm372 = vcmp.gt.f32.partialorder %v364, 0.0
        %vm373 = vcmp.gt.f32.partialorder %v365, 0.0
        %vm374 = vcmp.gt.f32.partialorder %v366, 0.0
        %vm375 = vcmp.gt.f32.partialorder %v367, 0.0
        %v376 = vmul.f32 %v360, 1.442695
        %v377 = vpow.pop %v376
        %v378 = vmul.f32 %v361, 1.442695
        %v379 = vpow.pop %v378
        %v380 = vmul.f32 %v362, 1.442695
        %v381 = vpow.pop %v380
        %v382 = vmul.f32 %v363, 1.442695
        %v383 = vpow.pop %v382
        %v384 = vmul.f32 %v364, 1.442695
        %v385 = vpow.pop %v384
        %v386 = vmul.f32 %v365, 1.442695
        %v387 = vpow.pop %v386
        %v388 = vmul.f32 %v366, 1.442695
        %v389 = vpow.pop %v388
        %v390 = vmul.f32 %v367, 1.442695
        %v391 = vpow.pop %v390
        %v392 = vsub.f32 %v377, 1.0
        %v393 = vsub.f32 %v379, 1.0
        %v394 = vsub.f32 %v381, 1.0
        %v395 = vsub.f32 %v383, 1.0
        %v396 = vsub.f32 %v385, 1.0
        %v397 = vsub.f32 %v387, 1.0
        %v398 = vsub.f32 %v389, 1.0
        %v399 = vsub.f32 %v391, 1.0
        %v400 = vsel %vm368, %v360, %v392
        %v401 = vsel %vm369, %v361, %v393
        %v402 = vsel %vm370, %v362, %v394
        %v403 = vsel %vm371, %v363, %v395
        %v404 = vsel %vm372, %v364, %v396
        %v405 = vsel %vm373, %v365, %v397
        %v406 = vsel %vm374, %v366, %v398
        %v407 = vsel %vm375, %v367, %v399
        %s408 = scalar_lea.vmem [#allocation2], 16
        %409 = vst.msk [vmem:[%s408 + $0x8] sm:$0xff] %vm341, %v400
        %410 = vst.msk [vmem:[%s408 + $0x18] sm:$0xff] %vm341, %v401
        %411 = vst.msk [vmem:[%s408 + $0x28] sm:$0xff] %vm341, %v402
        %412 = vst.msk [vmem:[%s408 + $0x38] sm:$0xff] %vm341, %v403
        %413 = vst.msk [vmem:[%s408 + $0x48] sm:$0xff] %vm341, %v404
        %414 = vst.msk [vmem:[%s408 + $0x58] sm:$0xff] %vm341, %v405
        %415 = vst.msk [vmem:[%s408 + $0x68] sm:$0xff] %vm341, %v406
        %416 = vst.msk [vmem:[%s408 + $0x78] sm:$0xff] %vm341, %v407
        %v417 = vld [vmem:[#allocation2 + $0x7] sm:$0xff]
        %v418 = vld [vmem:[#allocation2 + $0x17] sm:$0xff]
        %v419 = vld [vmem:[#allocation2 + $0x27] sm:$0xff]
        %v420 = vld [vmem:[#allocation2 + $0x37] sm:$0xff]
        %v421 = vld [vmem:[#allocation2 + $0x47] sm:$0xff]
        %v422 = vld [vmem:[#allocation2 + $0x57] sm:$0xff]
        %v423 = vld [vmem:[#allocation2 + $0x67] sm:$0xff]
        %v424 = vld [vmem:[#allocation2 + $0x77] sm:$0xff]
        %v425 = vld [vmem:[#allocation6] sm:$0xff]
        %v426 = vld [vmem:[#allocation6 + $0x8] sm:$0xff]
        %v427 = vld [vmem:[#allocation2 + $0x8] sm:$0xff]
        %v428 = vld [vmem:[#allocation2 + $0x18] sm:$0xff]
        %v429 = vld [vmem:[#allocation2 + $0x28] sm:$0xff]
        %v430 = vld [vmem:[#allocation2 + $0x38] sm:$0xff]
        %v431 = vld [vmem:[#allocation2 + $0x48] sm:$0xff]
        %v432 = vld [vmem:[#allocation2 + $0x58] sm:$0xff]
        %v433 = vld [vmem:[#allocation2 + $0x68] sm:$0xff]
        %v434 = vld [vmem:[#allocation2 + $0x78] sm:$0xff]
        %s435 = scalar_lea.vmem [#allocation6], 16
        %v436 = vld [vmem:[%s435] sm:$0xff]
        %v437 = vld [vmem:[%s435 + $0x8] sm:$0xff]
        %v439 = vsel %vm341, %v427, 0
        %v442 = vsel %vm341, %v428, 0
        %v445 = vsel %vm341, %v429, 0
        %v448 = vsel %vm341, %v430, 0
        %v451 = vsel %vm341, %v431, 0
        %v454 = vsel %vm341, %v432, 0
        %v457 = vsel %vm341, %v433, 0
        %v460 = vsel %vm341, %v434, 0
        %462 = vmatprep.subr.mxu0 0.0
        %463 = vmatpush1.msra.mxu0 %v436
        %464 = vmatprep.subr.mxu0 0.0
        %465 = vmatpush1.msra.mxu0 %v437
        %466 = vmatprep.subr.mxu0 0.0
        %467 = vmatpush1.msra.mxu0 0.0
        %468 = vmatprep.subr.mxu0 0.0
        %469 = vmatpush1.msra.mxu0 0.0
        %470 = vmatprep.subr.mxu0 0.0
        %471 = vmatpush1.msra.mxu0 0.0
        %472 = vmatprep.subr.mxu0 0.0
        %473 = vmatpush1.msra.mxu0 0.0
        %474 = vmatprep.subr.mxu0 0.0
        %475 = vmatpush1.msra.mxu0 0.0
        %476 = vmatprep.subr.mxu0 0.0
        %477 = vmatpush1.msra.mxu0 0.0
        %478 = vmatprep.subr.mxu0 0.0
        %479 = vmatpush1.msra.mxu0 0.0
        %480 = vmatprep.subr.mxu0 0.0
        %481 = vmatpush1.msra.mxu0 0.0
        %482 = vmatprep.subr.mxu0 0.0
        %483 = vmatpush1.msra.mxu0 0.0
        %484 = vmatprep.subr.mxu0 0.0
        %485 = vmatpush1.msra.mxu0 0.0
        %486 = vmatprep.subr.mxu0 0.0
        %487 = vmatpush1.msra.mxu0 0.0
        %488 = vmatprep.subr.mxu0 0.0
        %489 = vmatpush1.msra.mxu0 0.0
        %490 = vmatprep.subr.mxu0 0.0
        %491 = vmatpush1.msra.mxu0 0.0
        %492 = vmatprep.subr.mxu0 0.0
        %493 = vmatpush1.msra.mxu0 0.0
        %494 = vmatprep.subr.mxu0 0.0
        %495 = vmatpush1.msra.mxu0 0.0
        %496 = vmatprep.subr.mxu0 0.0
        %497 = vmatpush1.msra.mxu0 0.0
        %498 = vmatprep.subr.mxu0 0.0
        %499 = vmatpush1.msra.mxu0 0.0
        %500 = vmatprep.subr.mxu0 0.0
        %501 = vmatpush1.msra.mxu0 0.0
        %502 = vmatprep.subr.mxu0 0.0
        %503 = vmatpush1.msra.mxu0 0.0
        %504 = vmatprep.subr.mxu0 0.0
        %505 = vmatpush1.msra.mxu0 0.0
        %506 = vmatprep.subr.mxu0 0.0
        %507 = vmatpush1.msra.mxu0 0.0
        %508 = vmatprep.subr.mxu0 0.0
        %509 = vmatpush1.msra.mxu0 0.0
        %510 = vmatprep.subr.mxu0 0.0
        %511 = vmatpush1.msra.mxu0 0.0
        %512 = vmatprep.subr.mxu0 0.0
        %513 = vmatpush1.msra.mxu0 0.0
        %514 = vmatprep.subr.mxu0 0.0
        %515 = vmatpush1.msra.mxu0 0.0
        %516 = vmatprep.subr.mxu0 0.0
        %517 = vmatpush1.msra.mxu0 0.0
        %518 = vmatprep.subr.mxu0 0.0
        %519 = vmatpush1.msra.mxu0 0.0
        %520 = vmatprep.subr.mxu0 0.0
        %521 = vmatpush1.msra.mxu0 0.0
        %522 = vmatprep.subr.mxu0 0.0
        %523 = vmatpush1.msra.mxu0 0.0
        %524 = vmatprep.subr.mxu0 0.0
        %525 = vmatpush1.msra.mxu0 0.0
        %526 = vmatprep.mubr.f32.mxu0 0.0
        %527 = vmatmul.mubr.f32.gmra.mrb[0].mxu0 %v439
        %v528 = vpop.f32.mrb[0].mxu0
        %v529 = vadd.f32 0.0, %v528
        %v530 = vpop.f32.mrb[0].mxu0
        %531 = vmatprep.mubr.f32.mxu0 0.0
        %532 = vmatmul.mubr.f32.gmra.mrb[0].mxu0 %v442
        %v533 = vpop.f32.mrb[0].mxu0
        %v534 = vadd.f32 0.0, %v533
        %v535 = vpop.f32.mrb[0].mxu0
        %536 = vmatprep.mubr.f32.mxu0 0.0
        %537 = vmatmul.mubr.f32.gmra.mrb[0].mxu0 %v445
        %v538 = vpop.f32.mrb[0].mxu0
        %v539 = vadd.f32 0.0, %v538
        %v540 = vpop.f32.mrb[0].mxu0
        %541 = vmatprep.mubr.f32.mxu0 0.0
        %542 = vmatmul.mubr.f32.gmra.mrb[0].mxu0 %v448
        %v543 = vpop.f32.mrb[0].mxu0
        %v544 = vadd.f32 0.0, %v543
        %v545 = vpop.f32.mrb[0].mxu0
        %546 = vmatprep.mubr.f32.mxu0 0.0
        %547 = vmatmul.mubr.f32.gmra.mrb[0].mxu0 %v451
        %v548 = vpop.f32.mrb[0].mxu0
        %v549 = vadd.f32 0.0, %v548
        %v550 = vpop.f32.mrb[0].mxu0
        %551 = vmatprep.mubr.f32.mxu0 0.0
        %552 = vmatmul.mubr.f32.gmra.mrb[0].mxu0 %v454
        %v553 = vpop.f32.mrb[0].mxu0
        %v554 = vadd.f32 0.0, %v553
        %v555 = vpop.f32.mrb[0].mxu0
        %556 = vmatprep.mubr.f32.mxu0 0.0
        %557 = vmatmul.mubr.f32.gmra.mrb[0].mxu0 %v457
        %v558 = vpop.f32.mrb[0].mxu0
        %v559 = vadd.f32 0.0, %v558
        %v560 = vpop.f32.mrb[0].mxu0
        %561 = vmatprep.mubr.f32.mxu0 0.0
        %562 = vmatmul.mubr.f32.gmra.mrb[0].mxu0 %v460
        %v563 = vpop.f32.mrb[0].mxu0
        %v564 = vadd.f32 0.0, %v563
        %v565 = vpop.f32.mrb[0].mxu0
        %566 = vdwg.mxu0
        %v568 = vsel %vm341, %v417, 0
        %v571 = vsel %vm341, %v418, 0
        %v574 = vsel %vm341, %v419, 0
        %v577 = vsel %vm341, %v420, 0
        %v580 = vsel %vm341, %v421, 0
        %v583 = vsel %vm341, %v422, 0
        %v586 = vsel %vm341, %v423, 0
        %v589 = vsel %vm341, %v424, 0
        %591 = vmatprep.subr.mxu0 0.0
        %592 = vmatpush1.msra.mxu0 %v425
        %593 = vmatprep.subr.mxu0 0.0
        %594 = vmatpush1.msra.mxu0 %v426
        %595 = vmatprep.subr.mxu0 0.0
        %596 = vmatpush1.msra.mxu0 0.0
        %597 = vmatprep.subr.mxu0 0.0
        %598 = vmatpush1.msra.mxu0 0.0
        %599 = vmatprep.subr.mxu0 0.0
        %600 = vmatpush1.msra.mxu0 0.0
        %601 = vmatprep.subr.mxu0 0.0
        %602 = vmatpush1.msra.mxu0 0.0
        %603 = vmatprep.subr.mxu0 0.0
        %604 = vmatpush1.msra.mxu0 0.0
        %605 = vmatprep.subr.mxu0 0.0
        %606 = vmatpush1.msra.mxu0 0.0
        %607 = vmatprep.subr.mxu0 0.0
        %608 = vmatpush1.msra.mxu0 0.0
        %609 = vmatprep.subr.mxu0 0.0
        %610 = vmatpush1.msra.mxu0 0.0
        %611 = vmatprep.subr.mxu0 0.0
        %612 = vmatpush1.msra.mxu0 0.0
        %613 = vmatprep.subr.mxu0 0.0
        %614 = vmatpush1.msra.mxu0 0.0
        %615 = vmatprep.subr.mxu0 0.0
        %616 = vmatpush1.msra.mxu0 0.0
        %617 = vmatprep.subr.mxu0 0.0
        %618 = vmatpush1.msra.mxu0 0.0
        %619 = vmatprep.subr.mxu0 0.0
        %620 = vmatpush1.msra.mxu0 0.0
        %621 = vmatprep.subr.mxu0 0.0
        %622 = vmatpush1.msra.mxu0 0.0
        %623 = vmatprep.subr.mxu0 0.0
        %624 = vmatpush1.msra.mxu0 0.0
        %625 = vmatprep.subr.mxu0 0.0
        %626 = vmatpush1.msra.mxu0 0.0
        %627 = vmatprep.subr.mxu0 0.0
        %628 = vmatpush1.msra.mxu0 0.0
        %629 = vmatprep.subr.mxu0 0.0
        %630 = vmatpush1.msra.mxu0 0.0
        %631 = vmatprep.subr.mxu0 0.0
        %632 = vmatpush1.msra.mxu0 0.0
        %633 = vmatprep.subr.mxu0 0.0
        %634 = vmatpush1.msra.mxu0 0.0
        %635 = vmatprep.subr.mxu0 0.0
        %636 = vmatpush1.msra.mxu0 0.0
        %637 = vmatprep.subr.mxu0 0.0
        %638 = vmatpush1.msra.mxu0 0.0
        %639 = vmatprep.subr.mxu0 0.0
        %640 = vmatpush1.msra.mxu0 0.0
        %641 = vmatprep.subr.mxu0 0.0
        %642 = vmatpush1.msra.mxu0 0.0
        %643 = vmatprep.subr.mxu0 0.0
        %644 = vmatpush1.msra.mxu0 0.0
        %645 = vmatprep.subr.mxu0 0.0
        %646 = vmatpush1.msra.mxu0 0.0
        %647 = vmatprep.subr.mxu0 0.0
        %648 = vmatpush1.msra.mxu0 0.0
        %649 = vmatprep.subr.mxu0 0.0
        %650 = vmatpush1.msra.mxu0 0.0
        %651 = vmatprep.subr.mxu0 0.0
        %652 = vmatpush1.msra.mxu0 0.0
        %653 = vmatprep.subr.mxu0 0.0
        %654 = vmatpush1.msra.mxu0 0.0
        %655 = vmatprep.mubr.f32.mxu0 0.0
        %656 = vmatmul.mubr.f32.gmra.mrb[0].mxu0 %v568
        %v657 = vpop.f32.mrb[0].mxu0
        %v658 = vadd.f32 %v529, %v657
        %v659 = vpop.f32.mrb[0].mxu0
        %660 = vmatprep.mubr.f32.mxu0 0.0
        %661 = vmatmul.mubr.f32.gmra.mrb[0].mxu0 %v571
        %v662 = vpop.f32.mrb[0].mxu0
        %v663 = vadd.f32 %v534, %v662
        %v664 = vpop.f32.mrb[0].mxu0
        %665 = vmatprep.mubr.f32.mxu0 0.0
        %666 = vmatmul.mubr.f32.gmra.mrb[0].mxu0 %v574
        %v667 = vpop.f32.mrb[0].mxu0
        %v668 = vadd.f32 %v539, %v667
        %v669 = vpop.f32.mrb[0].mxu0
        %670 = vmatprep.mubr.f32.mxu0 0.0
        %671 = vmatmul.mubr.f32.gmra.mrb[0].mxu0 %v577
        %v672 = vpop.f32.mrb[0].mxu0
        %v673 = vadd.f32 %v544, %v672
        %v674 = vpop.f32.mrb[0].mxu0
        %675 = vmatprep.mubr.f32.mxu0 0.0
        %676 = vmatmul.mubr.f32.gmra.mrb[0].mxu0 %v580
        %v677 = vpop.f32.mrb[0].mxu0
        %v678 = vadd.f32 %v549, %v677
        %v679 = vpop.f32.mrb[0].mxu0
        %680 = vmatprep.mubr.f32.mxu0 0.0
        %681 = vmatmul.mubr.f32.gmra.mrb[0].mxu0 %v583
        %v682 = vpop.f32.mrb[0].mxu0
        %v683 = vadd.f32 %v554, %v682
        %v684 = vpop.f32.mrb[0].mxu0
        %685 = vmatprep.mubr.f32.mxu0 0.0
        %686 = vmatmul.mubr.f32.gmra.mrb[0].mxu0 %v586
        %v687 = vpop.f32.mrb[0].mxu0
        %v688 = vadd.f32 %v559, %v687
        %v689 = vpop.f32.mrb[0].mxu0
        %690 = vmatprep.mubr.f32.mxu0 0.0
        %691 = vmatmul.mubr.f32.gmra.mrb[0].mxu0 %v589
        %v692 = vpop.f32.mrb[0].mxu0
        %v693 = vadd.f32 %v564, %v692
        %v694 = vpop.f32.mrb[0].mxu0
        %695 = vdwg.mxu0
        %v696 = vld [vmem:[%s408 + $0x7] sm:$0xff]
        %v697 = vld [vmem:[%s408 + $0x17] sm:$0xff]
        %v698 = vld [vmem:[%s408 + $0x27] sm:$0xff]
        %v699 = vld [vmem:[%s408 + $0x37] sm:$0xff]
        %v700 = vld [vmem:[%s408 + $0x47] sm:$0xff]
        %v701 = vld [vmem:[%s408 + $0x57] sm:$0xff]
        %v702 = vld [vmem:[%s408 + $0x67] sm:$0xff]
        %v703 = vld [vmem:[%s408 + $0x77] sm:$0xff]
        %s704 = scalar_lea.vmem [#allocation6], 32
        %v705 = vld [vmem:[%s704] sm:$0xff]
        %v706 = vld [vmem:[%s704 + $0x8] sm:$0xff]
        %v708 = vsel %vm341, %v696, 0
        %v711 = vsel %vm341, %v697, 0
        %v714 = vsel %vm341, %v698, 0
        %v717 = vsel %vm341, %v699, 0
        %v720 = vsel %vm341, %v700, 0
        %v723 = vsel %vm341, %v701, 0
        %v726 = vsel %vm341, %v702, 0
        %v729 = vsel %vm341, %v703, 0
        %731 = vmatprep.subr.mxu0 0.0
        %732 = vmatpush1.msra.mxu0 %v705
        %733 = vmatprep.subr.mxu0 0.0
        %734 = vmatpush1.msra.mxu0 %v706
        %735 = vmatprep.subr.mxu0 0.0
        %736 = vmatpush1.msra.mxu0 0.0
        %737 = vmatprep.subr.mxu0 0.0
        %738 = vmatpush1.msra.mxu0 0.0
        %739 = vmatprep.subr.mxu0 0.0
        %740 = vmatpush1.msra.mxu0 0.0
        %741 = vmatprep.subr.mxu0 0.0
        %742 = vmatpush1.msra.mxu0 0.0
        %743 = vmatprep.subr.mxu0 0.0
        %744 = vmatpush1.msra.mxu0 0.0
        %745 = vmatprep.subr.mxu0 0.0
        %746 = vmatpush1.msra.mxu0 0.0
        %747 = vmatprep.subr.mxu0 0.0
        %748 = vmatpush1.msra.mxu0 0.0
        %749 = vmatprep.subr.mxu0 0.0
        %750 = vmatpush1.msra.mxu0 0.0
        %751 = vmatprep.subr.mxu0 0.0
        %752 = vmatpush1.msra.mxu0 0.0
        %753 = vmatprep.subr.mxu0 0.0
        %754 = vmatpush1.msra.mxu0 0.0
        %755 = vmatprep.subr.mxu0 0.0
        %756 = vmatpush1.msra.mxu0 0.0
        %757 = vmatprep.subr.mxu0 0.0
        %758 = vmatpush1.msra.mxu0 0.0
        %759 = vmatprep.subr.mxu0 0.0
        %760 = vmatpush1.msra.mxu0 0.0
        %761 = vmatprep.subr.mxu0 0.0
        %762 = vmatpush1.msra.mxu0 0.0
        %763 = vmatprep.subr.mxu0 0.0
        %764 = vmatpush1.msra.mxu0 0.0
        %765 = vmatprep.subr.mxu0 0.0
        %766 = vmatpush1.msra.mxu0 0.0
        %767 = vmatprep.subr.mxu0 0.0
        %768 = vmatpush1.msra.mxu0 0.0
        %769 = vmatprep.subr.mxu0 0.0
        %770 = vmatpush1.msra.mxu0 0.0
        %771 = vmatprep.subr.mxu0 0.0
        %772 = vmatpush1.msra.mxu0 0.0
        %773 = vmatprep.subr.mxu0 0.0
        %774 = vmatpush1.msra.mxu0 0.0
        %775 = vmatprep.subr.mxu0 0.0
        %776 = vmatpush1.msra.mxu0 0.0
        %777 = vmatprep.subr.mxu0 0.0
        %778 = vmatpush1.msra.mxu0 0.0
        %779 = vmatprep.subr.mxu0 0.0
        %780 = vmatpush1.msra.mxu0 0.0
        %781 = vmatprep.subr.mxu0 0.0
        %782 = vmatpush1.msra.mxu0 0.0
        %783 = vmatprep.subr.mxu0 0.0
        %784 = vmatpush1.msra.mxu0 0.0
        %785 = vmatprep.subr.mxu0 0.0
        %786 = vmatpush1.msra.mxu0 0.0
        %787 = vmatprep.subr.mxu0 0.0
        %788 = vmatpush1.msra.mxu0 0.0
        %789 = vmatprep.subr.mxu0 0.0
        %790 = vmatpush1.msra.mxu0 0.0
        %791 = vmatprep.subr.mxu0 0.0
        %792 = vmatpush1.msra.mxu0 0.0
        %793 = vmatprep.subr.mxu0 0.0
        %794 = vmatpush1.msra.mxu0 0.0
        %795 = vmatprep.mubr.f32.mxu0 0.0
        %796 = vmatmul.mubr.f32.gmra.mrb[0].mxu0 %v708
        %v797 = vpop.f32.mrb[0].mxu0
        %v798 = vadd.f32 0.0, %v797
        %v799 = vpop.f32.mrb[0].mxu0
        %800 = vmatprep.mubr.f32.mxu0 0.0
        %801 = vmatmul.mubr.f32.gmra.mrb[0].mxu0 %v711
        %v802 = vpop.f32.mrb[0].mxu0
        %v803 = vadd.f32 0.0, %v802
        %v804 = vpop.f32.mrb[0].mxu0
        %805 = vmatprep.mubr.f32.mxu0 0.0
        %806 = vmatmul.mubr.f32.gmra.mrb[0].mxu0 %v714
        %v807 = vpop.f32.mrb[0].mxu0
        %v808 = vadd.f32 0.0, %v807
        %v809 = vpop.f32.mrb[0].mxu0
        %810 = vmatprep.mubr.f32.mxu0 0.0
        %811 = vmatmul.mubr.f32.gmra.mrb[0].mxu0 %v717
        %v812 = vpop.f32.mrb[0].mxu0
        %v813 = vadd.f32 0.0, %v812
        %v814 = vpop.f32.mrb[0].mxu0
        %815 = vmatprep.mubr.f32.mxu0 0.0
        %816 = vmatmul.mubr.f32.gmra.mrb[0].mxu0 %v720
        %v817 = vpop.f32.mrb[0].mxu0
        %v818 = vadd.f32 0.0, %v817
        %v819 = vpop.f32.mrb[0].mxu0
        %820 = vmatprep.mubr.f32.mxu0 0.0
        %821 = vmatmul.mubr.f32.gmra.mrb[0].mxu0 %v723
        %v822 = vpop.f32.mrb[0].mxu0
        %v823 = vadd.f32 0.0, %v822
        %v824 = vpop.f32.mrb[0].mxu0
        %825 = vmatprep.mubr.f32.mxu0 0.0
        %826 = vmatmul.mubr.f32.gmra.mrb[0].mxu0 %v726
        %v827 = vpop.f32.mrb[0].mxu0
        %v828 = vadd.f32 0.0, %v827
        %v829 = vpop.f32.mrb[0].mxu0
        %830 = vmatprep.mubr.f32.mxu0 0.0
        %831 = vmatmul.mubr.f32.gmra.mrb[0].mxu0 %v729
        %v832 = vpop.f32.mrb[0].mxu0
        %v833 = vadd.f32 0.0, %v832
        %v834 = vpop.f32.mrb[0].mxu0
        %835 = vdwg.mxu0
        %v836 = vadd.f32 %v658, %v798
        %v837 = vadd.f32 %v663, %v803
        %v838 = vadd.f32 %v668, %v808
        %v839 = vadd.f32 %v673, %v813
        %v840 = vadd.f32 %v678, %v818
        %v841 = vadd.f32 %v683, %v823
        %v842 = vadd.f32 %v688, %v828
        %v843 = vadd.f32 %v693, %v833
        %v844 = vld [vmem:[%s408 + $0x8] sm:$0xff]
        %v845 = vld [vmem:[%s408 + $0x18] sm:$0xff]
        %v846 = vld [vmem:[%s408 + $0x28] sm:$0xff]
        %v847 = vld [vmem:[%s408 + $0x38] sm:$0xff]
        %v848 = vld [vmem:[%s408 + $0x48] sm:$0xff]
        %v849 = vld [vmem:[%s408 + $0x58] sm:$0xff]
        %v850 = vld [vmem:[%s408 + $0x68] sm:$0xff]
        %v851 = vld [vmem:[%s408 + $0x78] sm:$0xff]
        %s852 = scalar_lea.vmem [#allocation6], 48
        %v853 = vld [vmem:[%s852] sm:$0xff]
        %v854 = vld [vmem:[%s852 + $0x8] sm:$0xff]
        %v856 = vsel %vm341, %v844, 0
        %v859 = vsel %vm341, %v845, 0
        %v862 = vsel %vm341, %v846, 0
        %v865 = vsel %vm341, %v847, 0
        %v868 = vsel %vm341, %v848, 0
        %v871 = vsel %vm341, %v849, 0
        %v874 = vsel %vm341, %v850, 0
        %v877 = vsel %vm341, %v851, 0
        %879 = vmatprep.subr.mxu0 0.0
        %880 = vmatpush1.msra.mxu0 %v853
        %881 = vmatprep.subr.mxu0 0.0
        %882 = vmatpush1.msra.mxu0 %v854
        %883 = vmatprep.subr.mxu0 0.0
        %884 = vmatpush1.msra.mxu0 0.0
        %885 = vmatprep.subr.mxu0 0.0
        %886 = vmatpush1.msra.mxu0 0.0
        %887 = vmatprep.subr.mxu0 0.0
        %888 = vmatpush1.msra.mxu0 0.0
        %889 = vmatprep.subr.mxu0 0.0
        %890 = vmatpush1.msra.mxu0 0.0
        %891 = vmatprep.subr.mxu0 0.0
        %892 = vmatpush1.msra.mxu0 0.0
        %893 = vmatprep.subr.mxu0 0.0
        %894 = vmatpush1.msra.mxu0 0.0
        %895 = vmatprep.subr.mxu0 0.0
        %896 = vmatpush1.msra.mxu0 0.0
        %897 = vmatprep.subr.mxu0 0.0
        %898 = vmatpush1.msra.mxu0 0.0
        %899 = vmatprep.subr.mxu0 0.0
        %900 = vmatpush1.msra.mxu0 0.0
        %901 = vmatprep.subr.mxu0 0.0
        %902 = vmatpush1.msra.mxu0 0.0
        %903 = vmatprep.subr.mxu0 0.0
        %904 = vmatpush1.msra.mxu0 0.0
        %905 = vmatprep.subr.mxu0 0.0
        %906 = vmatpush1.msra.mxu0 0.0
        %907 = vmatprep.subr.mxu0 0.0
        %908 = vmatpush1.msra.mxu0 0.0
        %909 = vmatprep.subr.mxu0 0.0
        %910 = vmatpush1.msra.mxu0 0.0
        %911 = vmatprep.subr.mxu0 0.0
        %912 = vmatpush1.msra.mxu0 0.0
        %913 = vmatprep.subr.mxu0 0.0
        %914 = vmatpush1.msra.mxu0 0.0
        %915 = vmatprep.subr.mxu0 0.0
        %916 = vmatpush1.msra.mxu0 0.0
        %917 = vmatprep.subr.mxu0 0.0
        %918 = vmatpush1.msra.mxu0 0.0
        %919 = vmatprep.subr.mxu0 0.0
        %920 = vmatpush1.msra.mxu0 0.0
        %921 = vmatprep.subr.mxu0 0.0
        %922 = vmatpush1.msra.mxu0 0.0
        %923 = vmatprep.subr.mxu0 0.0
        %924 = vmatpush1.msra.mxu0 0.0
        %925 = vmatprep.subr.mxu0 0.0
        %926 = vmatpush1.msra.mxu0 0.0
        %927 = vmatprep.subr.mxu0 0.0
        %928 = vmatpush1.msra.mxu0 0.0
        %929 = vmatprep.subr.mxu0 0.0
        %930 = vmatpush1.msra.mxu0 0.0
        %931 = vmatprep.subr.mxu0 0.0
        %932 = vmatpush1.msra.mxu0 0.0
        %933 = vmatprep.subr.mxu0 0.0
        %934 = vmatpush1.msra.mxu0 0.0
        %935 = vmatprep.subr.mxu0 0.0
        %936 = vmatpush1.msra.mxu0 0.0
        %937 = vmatprep.subr.mxu0 0.0
        %938 = vmatpush1.msra.mxu0 0.0
        %939 = vmatprep.subr.mxu0 0.0
        %940 = vmatpush1.msra.mxu0 0.0
        %941 = vmatprep.subr.mxu0 0.0
        %942 = vmatpush1.msra.mxu0 0.0
        %943 = vmatprep.mubr.f32.mxu0 0.0
        %944 = vmatmul.mubr.f32.gmra.mrb[0].mxu0 %v856
        %v945 = vpop.f32.mrb[0].mxu0
        %v946 = vadd.f32 0.0, %v945
        %v947 = vpop.f32.mrb[0].mxu0
        %948 = vmatprep.mubr.f32.mxu0 0.0
        %949 = vmatmul.mubr.f32.gmra.mrb[0].mxu0 %v859
        %v950 = vpop.f32.mrb[0].mxu0
        %v951 = vadd.f32 0.0, %v950
        %v952 = vpop.f32.mrb[0].mxu0
        %953 = vmatprep.mubr.f32.mxu0 0.0
        %954 = vmatmul.mubr.f32.gmra.mrb[0].mxu0 %v862
        %v955 = vpop.f32.mrb[0].mxu0
        %v956 = vadd.f32 0.0, %v955
        %v957 = vpop.f32.mrb[0].mxu0
        %958 = vmatprep.mubr.f32.mxu0 0.0
        %959 = vmatmul.mubr.f32.gmra.mrb[0].mxu0 %v865
        %v960 = vpop.f32.mrb[0].mxu0
        %v961 = vadd.f32 0.0, %v960
        %v962 = vpop.f32.mrb[0].mxu0
        %963 = vmatprep.mubr.f32.mxu0 0.0
        %964 = vmatmul.mubr.f32.gmra.mrb[0].mxu0 %v868
        %v965 = vpop.f32.mrb[0].mxu0
        %v966 = vadd.f32 0.0, %v965
        %v967 = vpop.f32.mrb[0].mxu0
        %968 = vmatprep.mubr.f32.mxu0 0.0
        %969 = vmatmul.mubr.f32.gmra.mrb[0].mxu0 %v871
        %v970 = vpop.f32.mrb[0].mxu0
        %v971 = vadd.f32 0.0, %v970
        %v972 = vpop.f32.mrb[0].mxu0
        %973 = vmatprep.mubr.f32.mxu0 0.0
        %974 = vmatmul.mubr.f32.gmra.mrb[0].mxu0 %v874
        %v975 = vpop.f32.mrb[0].mxu0
        %v976 = vadd.f32 0.0, %v975
        %v977 = vpop.f32.mrb[0].mxu0
        %978 = vmatprep.mubr.f32.mxu0 0.0
        %979 = vmatmul.mubr.f32.gmra.mrb[0].mxu0 %v877
        %v980 = vpop.f32.mrb[0].mxu0
        %v981 = vadd.f32 0.0, %v980
        %v982 = vpop.f32.mrb[0].mxu0
        %983 = vdwg.mxu0
        %v984 = vadd.f32 %v836, %v946
        %v985 = vadd.f32 %v837, %v951
        %v986 = vadd.f32 %v838, %v956
        %v987 = vadd.f32 %v839, %v961
        %v988 = vadd.f32 %v840, %v966
        %v989 = vadd.f32 %v841, %v971
        %v990 = vadd.f32 %v842, %v976
        %v991 = vadd.f32 %v843, %v981
        %v992 = vld [vmem:[%s2] sm:$0x1]
        %v994 = vlaneseq
        %v995 = vshrl.u32 %v994, 7
        %v996 = vsub.s32 0, %v995
        %v997 = vrot.slane %v992, %v996
        %v999 = vadd.f32 %v984, %v997
        %v1000 = vadd.f32 %v985, %v997
        %v1001 = vadd.f32 %v986, %v997
        %v1002 = vadd.f32 %v987, %v997
        %v1003 = vadd.f32 %v988, %v997
        %v1004 = vadd.f32 %v989, %v997
        %v1005 = vadd.f32 %v990, %v997
        %v1006 = vadd.f32 %v991, %v997
        %vm1007 = vcmp.gt.f32.partialorder %v999, 0.0
        %vm1008 = vcmp.gt.f32.partialorder %v1000, 0.0
        %vm1009 = vcmp.gt.f32.partialorder %v1001, 0.0
        %vm1010 = vcmp.gt.f32.partialorder %v1002, 0.0
        %vm1011 = vcmp.gt.f32.partialorder %v1003, 0.0
        %vm1012 = vcmp.gt.f32.partialorder %v1004, 0.0
        %vm1013 = vcmp.gt.f32.partialorder %v1005, 0.0
        %vm1014 = vcmp.gt.f32.partialorder %v1006, 0.0
        %v1015 = vmul.f32 %v999, 1.442695
        %v1016 = vpow.pop %v1015
        %v1017 = vmul.f32 %v1000, 1.442695
        %v1018 = vpow.pop %v1017
        %v1019 = vmul.f32 %v1001, 1.442695
        %v1020 = vpow.pop %v1019
        %v1021 = vmul.f32 %v1002, 1.442695
        %v1022 = vpow.pop %v1021
        %v1023 = vmul.f32 %v1003, 1.442695
        %v1024 = vpow.pop %v1023
        %v1025 = vmul.f32 %v1004, 1.442695
        %v1026 = vpow.pop %v1025
        %v1027 = vmul.f32 %v1005, 1.442695
        %v1028 = vpow.pop %v1027
        %v1029 = vmul.f32 %v1006, 1.442695
        %v1030 = vpow.pop %v1029
        %v1031 = vsub.f32 %v1016, 1.0
        %v1032 = vsub.f32 %v1018, 1.0
        %v1033 = vsub.f32 %v1020, 1.0
        %v1034 = vsub.f32 %v1022, 1.0
        %v1035 = vsub.f32 %v1024, 1.0
        %v1036 = vsub.f32 %v1026, 1.0
        %v1037 = vsub.f32 %v1028, 1.0
        %v1038 = vsub.f32 %v1030, 1.0
        %v1039 = vsel %vm1007, %v999, %v1031
        %v1040 = vsel %vm1008, %v1000, %v1032
        %v1041 = vsel %vm1009, %v1001, %v1033
        %v1042 = vsel %vm1010, %v1002, %v1034
        %v1043 = vsel %vm1011, %v1003, %v1035
        %v1044 = vsel %vm1012, %v1004, %v1036
        %v1045 = vsel %vm1013, %v1005, %v1037
        %v1046 = vsel %vm1014, %v1006, %v1038
        %1047 = vst.msk [vmem:[%s408 + $0x8] sm:$0xff] %vm341, %v1039
        %1048 = vst.msk [vmem:[%s408 + $0x18] sm:$0xff] %vm341, %v1040
        %1049 = vst.msk [vmem:[%s408 + $0x28] sm:$0xff] %vm341, %v1041
        %1050 = vst.msk [vmem:[%s408 + $0x38] sm:$0xff] %vm341, %v1042
        %1051 = vst.msk [vmem:[%s408 + $0x48] sm:$0xff] %vm341, %v1043
        %1052 = vst.msk [vmem:[%s408 + $0x58] sm:$0xff] %vm341, %v1044
        %1053 = vst.msk [vmem:[%s408 + $0x68] sm:$0xff] %vm341, %v1045
        %1054 = vst.msk [vmem:[%s408 + $0x78] sm:$0xff] %vm341, %v1046
        %v1055 = vld [vmem:[#allocation2 + $0x7] sm:$0xff]
        %v1056 = vld [vmem:[#allocation2 + $0x17] sm:$0xff]
        %v1057 = vld [vmem:[#allocation2 + $0x27] sm:$0xff]
        %v1058 = vld [vmem:[#allocation2 + $0x37] sm:$0xff]
        %v1059 = vld [vmem:[#allocation2 + $0x47] sm:$0xff]
        %v1060 = vld [vmem:[#allocation2 + $0x57] sm:$0xff]
        %v1061 = vld [vmem:[#allocation2 + $0x67] sm:$0xff]
        %v1062 = vld [vmem:[#allocation2 + $0x77] sm:$0xff]
        %v1063 = vld [vmem:[#allocation8] sm:$0xff]
        %v1064 = vld [vmem:[#allocation8 + $0x8] sm:$0xff]
        %v1065 = vld [vmem:[#allocation2 + $0x8] sm:$0xff]
        %v1066 = vld [vmem:[#allocation2 + $0x18] sm:$0xff]
        %v1067 = vld [vmem:[#allocation2 + $0x28] sm:$0xff]
        %v1068 = vld [vmem:[#allocation2 + $0x38] sm:$0xff]
        %v1069 = vld [vmem:[#allocation2 + $0x48] sm:$0xff]
        %v1070 = vld [vmem:[#allocation2 + $0x58] sm:$0xff]
        %v1071 = vld [vmem:[#allocation2 + $0x68] sm:$0xff]
        %v1072 = vld [vmem:[#allocation2 + $0x78] sm:$0xff]
        %s1073 = scalar_lea.vmem [#allocation8], 16
        %v1074 = vld [vmem:[%s1073] sm:$0xff]
        %v1075 = vld [vmem:[%s1073 + $0x8] sm:$0xff]
        %v1077 = vsel %vm341, %v1065, 0
        %v1080 = vsel %vm341, %v1066, 0
        %v1083 = vsel %vm341, %v1067, 0
        %v1086 = vsel %vm341, %v1068, 0
        %v1089 = vsel %vm341, %v1069, 0
        %v1092 = vsel %vm341, %v1070, 0
        %v1095 = vsel %vm341, %v1071, 0
        %v1098 = vsel %vm341, %v1072, 0
        %1100 = vmatprep.subr.mxu0 0.0
        %1101 = vmatpush1.msra.mxu0 %v1074
        %1102 = vmatprep.subr.mxu0 0.0
        %1103 = vmatpush1.msra.mxu0 %v1075
        %1104 = vmatprep.subr.mxu0 0.0
        %1105 = vmatpush1.msra.mxu0 0.0
        %1106 = vmatprep.subr.mxu0 0.0
        %1107 = vmatpush1.msra.mxu0 0.0
        %1108 = vmatprep.subr.mxu0 0.0
        %1109 = vmatpush1.msra.mxu0 0.0
        %1110 = vmatprep.subr.mxu0 0.0
        %1111 = vmatpush1.msra.mxu0 0.0
        %1112 = vmatprep.subr.mxu0 0.0
        %1113 = vmatpush1.msra.mxu0 0.0
        %1114 = vmatprep.subr.mxu0 0.0
        %1115 = vmatpush1.msra.mxu0 0.0
        %1116 = vmatprep.subr.mxu0 0.0
        %1117 = vmatpush1.msra.mxu0 0.0
        %1118 = vmatprep.subr.mxu0 0.0
        %1119 = vmatpush1.msra.mxu0 0.0
        %1120 = vmatprep.subr.mxu0 0.0
        %1121 = vmatpush1.msra.mxu0 0.0
        %1122 = vmatprep.subr.mxu0 0.0
        %1123 = vmatpush1.msra.mxu0 0.0
        %1124 = vmatprep.subr.mxu0 0.0
        %1125 = vmatpush1.msra.mxu0 0.0
        %1126 = vmatprep.subr.mxu0 0.0
        %1127 = vmatpush1.msra.mxu0 0.0
        %1128 = vmatprep.subr.mxu0 0.0
        %1129 = vmatpush1.msra.mxu0 0.0
        %1130 = vmatprep.subr.mxu0 0.0
        %1131 = vmatpush1.msra.mxu0 0.0
        %1132 = vmatprep.subr.mxu0 0.0
        %1133 = vmatpush1.msra.mxu0 0.0
        %1134 = vmatprep.subr.mxu0 0.0
        %1135 = vmatpush1.msra.mxu0 0.0
        %1136 = vmatprep.subr.mxu0 0.0
        %1137 = vmatpush1.msra.mxu0 0.0
        %1138 = vmatprep.subr.mxu0 0.0
        %1139 = vmatpush1.msra.mxu0 0.0
        %1140 = vmatprep.subr.mxu0 0.0
        %1141 = vmatpush1.msra.mxu0 0.0
        %1142 = vmatprep.subr.mxu0 0.0
        %1143 = vmatpush1.msra.mxu0 0.0
        %1144 = vmatprep.subr.mxu0 0.0
        %1145 = vmatpush1.msra.mxu0 0.0
        %1146 = vmatprep.subr.mxu0 0.0
        %1147 = vmatpush1.msra.mxu0 0.0
        %1148 = vmatprep.subr.mxu0 0.0
        %1149 = vmatpush1.msra.mxu0 0.0
        %1150 = vmatprep.subr.mxu0 0.0
        %1151 = vmatpush1.msra.mxu0 0.0
        %1152 = vmatprep.subr.mxu0 0.0
        %1153 = vmatpush1.msra.mxu0 0.0
        %1154 = vmatprep.subr.mxu0 0.0
        %1155 = vmatpush1.msra.mxu0 0.0
        %1156 = vmatprep.subr.mxu0 0.0
        %1157 = vmatpush1.msra.mxu0 0.0
        %1158 = vmatprep.subr.mxu0 0.0
        %1159 = vmatpush1.msra.mxu0 0.0
        %1160 = vmatprep.subr.mxu0 0.0
        %1161 = vmatpush1.msra.mxu0 0.0
        %1162 = vmatprep.subr.mxu0 0.0
        %1163 = vmatpush1.msra.mxu0 0.0
        %1164 = vmatprep.mubr.f32.mxu0 0.0
        %1165 = vmatmul.mubr.f32.gmra.mrb[0].mxu0 %v1077
        %v1166 = vpop.f32.mrb[0].mxu0
        %v1167 = vadd.f32 0.0, %v1166
        %v1168 = vpop.f32.mrb[0].mxu0
        %1169 = vmatprep.mubr.f32.mxu0 0.0
        %1170 = vmatmul.mubr.f32.gmra.mrb[0].mxu0 %v1080
        %v1171 = vpop.f32.mrb[0].mxu0
        %v1172 = vadd.f32 0.0, %v1171
        %v1173 = vpop.f32.mrb[0].mxu0
        %1174 = vmatprep.mubr.f32.mxu0 0.0
        %1175 = vmatmul.mubr.f32.gmra.mrb[0].mxu0 %v1083
        %v1176 = vpop.f32.mrb[0].mxu0
        %v1177 = vadd.f32 0.0, %v1176
        %v1178 = vpop.f32.mrb[0].mxu0
        %1179 = vmatprep.mubr.f32.mxu0 0.0
        %1180 = vmatmul.mubr.f32.gmra.mrb[0].mxu0 %v1086
        %v1181 = vpop.f32.mrb[0].mxu0
        %v1182 = vadd.f32 0.0, %v1181
        %v1183 = vpop.f32.mrb[0].mxu0
        %1184 = vmatprep.mubr.f32.mxu0 0.0
        %1185 = vmatmul.mubr.f32.gmra.mrb[0].mxu0 %v1089
        %v1186 = vpop.f32.mrb[0].mxu0
        %v1187 = vadd.f32 0.0, %v1186
        %v1188 = vpop.f32.mrb[0].mxu0
        %1189 = vmatprep.mubr.f32.mxu0 0.0
        %1190 = vmatmul.mubr.f32.gmra.mrb[0].mxu0 %v1092
        %v1191 = vpop.f32.mrb[0].mxu0
        %v1192 = vadd.f32 0.0, %v1191
        %v1193 = vpop.f32.mrb[0].mxu0
        %1194 = vmatprep.mubr.f32.mxu0 0.0
        %1195 = vmatmul.mubr.f32.gmra.mrb[0].mxu0 %v1095
        %v1196 = vpop.f32.mrb[0].mxu0
        %v1197 = vadd.f32 0.0, %v1196
        %v1198 = vpop.f32.mrb[0].mxu0
        %1199 = vmatprep.mubr.f32.mxu0 0.0
        %1200 = vmatmul.mubr.f32.gmra.mrb[0].mxu0 %v1098
        %v1201 = vpop.f32.mrb[0].mxu0
        %v1202 = vadd.f32 0.0, %v1201
        %v1203 = vpop.f32.mrb[0].mxu0
        %1204 = vdwg.mxu0
        %v1206 = vsel %vm341, %v1055, 0
        %v1209 = vsel %vm341, %v1056, 0
        %v1212 = vsel %vm341, %v1057, 0
        %v1215 = vsel %vm341, %v1058, 0
        %v1218 = vsel %vm341, %v1059, 0
        %v1221 = vsel %vm341, %v1060, 0
        %v1224 = vsel %vm341, %v1061, 0
        %v1227 = vsel %vm341, %v1062, 0
        %1229 = vmatprep.subr.mxu0 0.0
        %1230 = vmatpush1.msra.mxu0 %v1063
        %1231 = vmatprep.subr.mxu0 0.0
        %1232 = vmatpush1.msra.mxu0 %v1064
        %1233 = vmatprep.subr.mxu0 0.0
        %1234 = vmatpush1.msra.mxu0 0.0
        %1235 = vmatprep.subr.mxu0 0.0
        %1236 = vmatpush1.msra.mxu0 0.0
        %1237 = vmatprep.subr.mxu0 0.0
        %1238 = vmatpush1.msra.mxu0 0.0
        %1239 = vmatprep.subr.mxu0 0.0
        %1240 = vmatpush1.msra.mxu0 0.0
        %1241 = vmatprep.subr.mxu0 0.0
        %1242 = vmatpush1.msra.mxu0 0.0
        %1243 = vmatprep.subr.mxu0 0.0
        %1244 = vmatpush1.msra.mxu0 0.0
        %1245 = vmatprep.subr.mxu0 0.0
        %1246 = vmatpush1.msra.mxu0 0.0
        %1247 = vmatprep.subr.mxu0 0.0
        %1248 = vmatpush1.msra.mxu0 0.0
        %1249 = vmatprep.subr.mxu0 0.0
        %1250 = vmatpush1.msra.mxu0 0.0
        %1251 = vmatprep.subr.mxu0 0.0
        %1252 = vmatpush1.msra.mxu0 0.0
        %1253 = vmatprep.subr.mxu0 0.0
        %1254 = vmatpush1.msra.mxu0 0.0
        %1255 = vmatprep.subr.mxu0 0.0
        %1256 = vmatpush1.msra.mxu0 0.0
        %1257 = vmatprep.subr.mxu0 0.0
        %1258 = vmatpush1.msra.mxu0 0.0
        %1259 = vmatprep.subr.mxu0 0.0
        %1260 = vmatpush1.msra.mxu0 0.0
        %1261 = vmatprep.subr.mxu0 0.0
        %1262 = vmatpush1.msra.mxu0 0.0
        %1263 = vmatprep.subr.mxu0 0.0
        %1264 = vmatpush1.msra.mxu0 0.0
        %1265 = vmatprep.subr.mxu0 0.0
        %1266 = vmatpush1.msra.mxu0 0.0
        %1267 = vmatprep.subr.mxu0 0.0
        %1268 = vmatpush1.msra.mxu0 0.0
        %1269 = vmatprep.subr.mxu0 0.0
        %1270 = vmatpush1.msra.mxu0 0.0
        %1271 = vmatprep.subr.mxu0 0.0
        %1272 = vmatpush1.msra.mxu0 0.0
        %1273 = vmatprep.subr.mxu0 0.0
        %1274 = vmatpush1.msra.mxu0 0.0
        %1275 = vmatprep.subr.mxu0 0.0
        %1276 = vmatpush1.msra.mxu0 0.0
        %1277 = vmatprep.subr.mxu0 0.0
        %1278 = vmatpush1.msra.mxu0 0.0
        %1279 = vmatprep.subr.mxu0 0.0
        %1280 = vmatpush1.msra.mxu0 0.0
        %1281 = vmatprep.subr.mxu0 0.0
        %1282 = vmatpush1.msra.mxu0 0.0
        %1283 = vmatprep.subr.mxu0 0.0
        %1284 = vmatpush1.msra.mxu0 0.0
        %1285 = vmatprep.subr.mxu0 0.0
        %1286 = vmatpush1.msra.mxu0 0.0
        %1287 = vmatprep.subr.mxu0 0.0
        %1288 = vmatpush1.msra.mxu0 0.0
        %1289 = vmatprep.subr.mxu0 0.0
        %1290 = vmatpush1.msra.mxu0 0.0
        %1291 = vmatprep.subr.mxu0 0.0
        %1292 = vmatpush1.msra.mxu0 0.0
        %1293 = vmatprep.mubr.f32.mxu0 0.0
        %1294 = vmatmul.mubr.f32.gmra.mrb[0].mxu0 %v1206
        %v1295 = vpop.f32.mrb[0].mxu0
        %v1296 = vadd.f32 %v1167, %v1295
        %v1297 = vpop.f32.mrb[0].mxu0
        %1298 = vmatprep.mubr.f32.mxu0 0.0
        %1299 = vmatmul.mubr.f32.gmra.mrb[0].mxu0 %v1209
        %v1300 = vpop.f32.mrb[0].mxu0
        %v1301 = vadd.f32 %v1172, %v1300
        %v1302 = vpop.f32.mrb[0].mxu0
        %1303 = vmatprep.mubr.f32.mxu0 0.0
        %1304 = vmatmul.mubr.f32.gmra.mrb[0].mxu0 %v1212
        %v1305 = vpop.f32.mrb[0].mxu0
        %v1306 = vadd.f32 %v1177, %v1305
        %v1307 = vpop.f32.mrb[0].mxu0
        %1308 = vmatprep.mubr.f32.mxu0 0.0
        %1309 = vmatmul.mubr.f32.gmra.mrb[0].mxu0 %v1215
        %v1310 = vpop.f32.mrb[0].mxu0
        %v1311 = vadd.f32 %v1182, %v1310
        %v1312 = vpop.f32.mrb[0].mxu0
        %1313 = vmatprep.mubr.f32.mxu0 0.0
        %1314 = vmatmul.mubr.f32.gmra.mrb[0].mxu0 %v1218
        %v1315 = vpop.f32.mrb[0].mxu0
        %v1316 = vadd.f32 %v1187, %v1315
        %v1317 = vpop.f32.mrb[0].mxu0
        %1318 = vmatprep.mubr.f32.mxu0 0.0
        %1319 = vmatmul.mubr.f32.gmra.mrb[0].mxu0 %v1221
        %v1320 = vpop.f32.mrb[0].mxu0
        %v1321 = vadd.f32 %v1192, %v1320
        %v1322 = vpop.f32.mrb[0].mxu0
        %1323 = vmatprep.mubr.f32.mxu0 0.0
        %1324 = vmatmul.mubr.f32.gmra.mrb[0].mxu0 %v1224
        %v1325 = vpop.f32.mrb[0].mxu0
        %v1326 = vadd.f32 %v1197, %v1325
        %v1327 = vpop.f32.mrb[0].mxu0
        %1328 = vmatprep.mubr.f32.mxu0 0.0
        %1329 = vmatmul.mubr.f32.gmra.mrb[0].mxu0 %v1227
        %v1330 = vpop.f32.mrb[0].mxu0
        %v1331 = vadd.f32 %v1202, %v1330
        %v1332 = vpop.f32.mrb[0].mxu0
        %1333 = vdwg.mxu0
        %v1334 = vld [vmem:[%s408 + $0x7] sm:$0xff]
        %v1335 = vld [vmem:[%s408 + $0x17] sm:$0xff]
        %v1336 = vld [vmem:[%s408 + $0x27] sm:$0xff]
        %v1337 = vld [vmem:[%s408 + $0x37] sm:$0xff]
        %v1338 = vld [vmem:[%s408 + $0x47] sm:$0xff]
        %v1339 = vld [vmem:[%s408 + $0x57] sm:$0xff]
        %v1340 = vld [vmem:[%s408 + $0x67] sm:$0xff]
        %v1341 = vld [vmem:[%s408 + $0x77] sm:$0xff]
        %s1342 = scalar_lea.vmem [#allocation8], 32
        %v1343 = vld [vmem:[%s1342] sm:$0xff]
        %v1344 = vld [vmem:[%s1342 + $0x8] sm:$0xff]
        %v1346 = vsel %vm341, %v1334, 0
        %v1349 = vsel %vm341, %v1335, 0
        %v1352 = vsel %vm341, %v1336, 0
        %v1355 = vsel %vm341, %v1337, 0
        %v1358 = vsel %vm341, %v1338, 0
        %v1361 = vsel %vm341, %v1339, 0
        %v1364 = vsel %vm341, %v1340, 0
        %v1367 = vsel %vm341, %v1341, 0
        %1369 = vmatprep.subr.mxu0 0.0
        %1370 = vmatpush1.msra.mxu0 %v1343
        %1371 = vmatprep.subr.mxu0 0.0
        %1372 = vmatpush1.msra.mxu0 %v1344
        %1373 = vmatprep.subr.mxu0 0.0
        %1374 = vmatpush1.msra.mxu0 0.0
        %1375 = vmatprep.subr.mxu0 0.0
        %1376 = vmatpush1.msra.mxu0 0.0
        %1377 = vmatprep.subr.mxu0 0.0
        %1378 = vmatpush1.msra.mxu0 0.0
        %1379 = vmatprep.subr.mxu0 0.0
        %1380 = vmatpush1.msra.mxu0 0.0
        %1381 = vmatprep.subr.mxu0 0.0
        %1382 = vmatpush1.msra.mxu0 0.0
        %1383 = vmatprep.subr.mxu0 0.0
        %1384 = vmatpush1.msra.mxu0 0.0
        %1385 = vmatprep.subr.mxu0 0.0
        %1386 = vmatpush1.msra.mxu0 0.0
        %1387 = vmatprep.subr.mxu0 0.0
        %1388 = vmatpush1.msra.mxu0 0.0
        %1389 = vmatprep.subr.mxu0 0.0
        %1390 = vmatpush1.msra.mxu0 0.0
        %1391 = vmatprep.subr.mxu0 0.0
        %1392 = vmatpush1.msra.mxu0 0.0
        %1393 = vmatprep.subr.mxu0 0.0
        %1394 = vmatpush1.msra.mxu0 0.0
        %1395 = vmatprep.subr.mxu0 0.0
        %1396 = vmatpush1.msra.mxu0 0.0
        %1397 = vmatprep.subr.mxu0 0.0
        %1398 = vmatpush1.msra.mxu0 0.0
        %1399 = vmatprep.subr.mxu0 0.0
        %1400 = vmatpush1.msra.mxu0 0.0
        %1401 = vmatprep.subr.mxu0 0.0
        %1402 = vmatpush1.msra.mxu0 0.0
        %1403 = vmatprep.subr.mxu0 0.0
        %1404 = vmatpush1.msra.mxu0 0.0
        %1405 = vmatprep.subr.mxu0 0.0
        %1406 = vmatpush1.msra.mxu0 0.0
        %1407 = vmatprep.subr.mxu0 0.0
        %1408 = vmatpush1.msra.mxu0 0.0
        %1409 = vmatprep.subr.mxu0 0.0
        %1410 = vmatpush1.msra.mxu0 0.0
        %1411 = vmatprep.subr.mxu0 0.0
        %1412 = vmatpush1.msra.mxu0 0.0
        %1413 = vmatprep.subr.mxu0 0.0
        %1414 = vmatpush1.msra.mxu0 0.0
        %1415 = vmatprep.subr.mxu0 0.0
        %1416 = vmatpush1.msra.mxu0 0.0
        %1417 = vmatprep.subr.mxu0 0.0
        %1418 = vmatpush1.msra.mxu0 0.0
        %1419 = vmatprep.subr.mxu0 0.0
        %1420 = vmatpush1.msra.mxu0 0.0
        %1421 = vmatprep.subr.mxu0 0.0
        %1422 = vmatpush1.msra.mxu0 0.0
        %1423 = vmatprep.subr.mxu0 0.0
        %1424 = vmatpush1.msra.mxu0 0.0
        %1425 = vmatprep.subr.mxu0 0.0
        %1426 = vmatpush1.msra.mxu0 0.0
        %1427 = vmatprep.subr.mxu0 0.0
        %1428 = vmatpush1.msra.mxu0 0.0
        %1429 = vmatprep.subr.mxu0 0.0
        %1430 = vmatpush1.msra.mxu0 0.0
        %1431 = vmatprep.subr.mxu0 0.0
        %1432 = vmatpush1.msra.mxu0 0.0
        %1433 = vmatprep.mubr.f32.mxu0 0.0
        %1434 = vmatmul.mubr.f32.gmra.mrb[0].mxu0 %v1346
        %v1435 = vpop.f32.mrb[0].mxu0
        %v1436 = vadd.f32 0.0, %v1435
        %v1437 = vpop.f32.mrb[0].mxu0
        %1438 = vmatprep.mubr.f32.mxu0 0.0
        %1439 = vmatmul.mubr.f32.gmra.mrb[0].mxu0 %v1349
        %v1440 = vpop.f32.mrb[0].mxu0
        %v1441 = vadd.f32 0.0, %v1440
        %v1442 = vpop.f32.mrb[0].mxu0
        %1443 = vmatprep.mubr.f32.mxu0 0.0
        %1444 = vmatmul.mubr.f32.gmra.mrb[0].mxu0 %v1352
        %v1445 = vpop.f32.mrb[0].mxu0
        %v1446 = vadd.f32 0.0, %v1445
        %v1447 = vpop.f32.mrb[0].mxu0
        %1448 = vmatprep.mubr.f32.mxu0 0.0
        %1449 = vmatmul.mubr.f32.gmra.mrb[0].mxu0 %v1355
        %v1450 = vpop.f32.mrb[0].mxu0
        %v1451 = vadd.f32 0.0, %v1450
        %v1452 = vpop.f32.mrb[0].mxu0
        %1453 = vmatprep.mubr.f32.mxu0 0.0
        %1454 = vmatmul.mubr.f32.gmra.mrb[0].mxu0 %v1358
        %v1455 = vpop.f32.mrb[0].mxu0
        %v1456 = vadd.f32 0.0, %v1455
        %v1457 = vpop.f32.mrb[0].mxu0
        %1458 = vmatprep.mubr.f32.mxu0 0.0
        %1459 = vmatmul.mubr.f32.gmra.mrb[0].mxu0 %v1361
        %v1460 = vpop.f32.mrb[0].mxu0
        %v1461 = vadd.f32 0.0, %v1460
        %v1462 = vpop.f32.mrb[0].mxu0
        %1463 = vmatprep.mubr.f32.mxu0 0.0
        %1464 = vmatmul.mubr.f32.gmra.mrb[0].mxu0 %v1364
        %v1465 = vpop.f32.mrb[0].mxu0
        %v1466 = vadd.f32 0.0, %v1465
        %v1467 = vpop.f32.mrb[0].mxu0
        %1468 = vmatprep.mubr.f32.mxu0 0.0
        %1469 = vmatmul.mubr.f32.gmra.mrb[0].mxu0 %v1367
        %v1470 = vpop.f32.mrb[0].mxu0
        %v1471 = vadd.f32 0.0, %v1470
        %v1472 = vpop.f32.mrb[0].mxu0
        %1473 = vdwg.mxu0
        %v1474 = vadd.f32 %v1296, %v1436
        %v1475 = vadd.f32 %v1301, %v1441
        %v1476 = vadd.f32 %v1306, %v1446
        %v1477 = vadd.f32 %v1311, %v1451
        %v1478 = vadd.f32 %v1316, %v1456
        %v1479 = vadd.f32 %v1321, %v1461
        %v1480 = vadd.f32 %v1326, %v1466
        %v1481 = vadd.f32 %v1331, %v1471
        %v1482 = vld [vmem:[%s408 + $0x8] sm:$0xff]
        %v1483 = vld [vmem:[%s408 + $0x18] sm:$0xff]
        %v1484 = vld [vmem:[%s408 + $0x28] sm:$0xff]
        %v1485 = vld [vmem:[%s408 + $0x38] sm:$0xff]
        %v1486 = vld [vmem:[%s408 + $0x48] sm:$0xff]
        %v1487 = vld [vmem:[%s408 + $0x58] sm:$0xff]
        %v1488 = vld [vmem:[%s408 + $0x68] sm:$0xff]
        %v1489 = vld [vmem:[%s408 + $0x78] sm:$0xff]
        %s1490 = scalar_lea.vmem [#allocation8], 48
        %v1491 = vld [vmem:[%s1490] sm:$0xff]
        %v1492 = vld [vmem:[%s1490 + $0x8] sm:$0xff]
        %v1494 = vsel %vm341, %v1482, 0
        %v1497 = vsel %vm341, %v1483, 0
        %v1500 = vsel %vm341, %v1484, 0
        %v1503 = vsel %vm341, %v1485, 0
        %v1506 = vsel %vm341, %v1486, 0
        %v1509 = vsel %vm341, %v1487, 0
        %v1512 = vsel %vm341, %v1488, 0
        %v1515 = vsel %vm341, %v1489, 0
        %1517 = vmatprep.subr.mxu0 0.0
        %1518 = vmatpush1.msra.mxu0 %v1491
        %1519 = vmatprep.subr.mxu0 0.0
        %1520 = vmatpush1.msra.mxu0 %v1492
        %1521 = vmatprep.subr.mxu0 0.0
        %1522 = vmatpush1.msra.mxu0 0.0
        %1523 = vmatprep.subr.mxu0 0.0
        %1524 = vmatpush1.msra.mxu0 0.0
        %1525 = vmatprep.subr.mxu0 0.0
        %1526 = vmatpush1.msra.mxu0 0.0
        %1527 = vmatprep.subr.mxu0 0.0
        %1528 = vmatpush1.msra.mxu0 0.0
        %1529 = vmatprep.subr.mxu0 0.0
        %1530 = vmatpush1.msra.mxu0 0.0
        %1531 = vmatprep.subr.mxu0 0.0
        %1532 = vmatpush1.msra.mxu0 0.0
        %1533 = vmatprep.subr.mxu0 0.0
        %1534 = vmatpush1.msra.mxu0 0.0
        %1535 = vmatprep.subr.mxu0 0.0
        %1536 = vmatpush1.msra.mxu0 0.0
        %1537 = vmatprep.subr.mxu0 0.0
        %1538 = vmatpush1.msra.mxu0 0.0
        %1539 = vmatprep.subr.mxu0 0.0
        %1540 = vmatpush1.msra.mxu0 0.0
        %1541 = vmatprep.subr.mxu0 0.0
        %1542 = vmatpush1.msra.mxu0 0.0
        %1543 = vmatprep.subr.mxu0 0.0
        %1544 = vmatpush1.msra.mxu0 0.0
        %1545 = vmatprep.subr.mxu0 0.0
        %1546 = vmatpush1.msra.mxu0 0.0
        %1547 = vmatprep.subr.mxu0 0.0
        %1548 = vmatpush1.msra.mxu0 0.0
        %1549 = vmatprep.subr.mxu0 0.0
        %1550 = vmatpush1.msra.mxu0 0.0
        %1551 = vmatprep.subr.mxu0 0.0
        %1552 = vmatpush1.msra.mxu0 0.0
        %1553 = vmatprep.subr.mxu0 0.0
        %1554 = vmatpush1.msra.mxu0 0.0
        %1555 = vmatprep.subr.mxu0 0.0
        %1556 = vmatpush1.msra.mxu0 0.0
        %1557 = vmatprep.subr.mxu0 0.0
        %1558 = vmatpush1.msra.mxu0 0.0
        %1559 = vmatprep.subr.mxu0 0.0
        %1560 = vmatpush1.msra.mxu0 0.0
        %1561 = vmatprep.subr.mxu0 0.0
        %1562 = vmatpush1.msra.mxu0 0.0
        %1563 = vmatprep.subr.mxu0 0.0
        %1564 = vmatpush1.msra.mxu0 0.0
        %1565 = vmatprep.subr.mxu0 0.0
        %1566 = vmatpush1.msra.mxu0 0.0
        %1567 = vmatprep.subr.mxu0 0.0
        %1568 = vmatpush1.msra.mxu0 0.0
        %1569 = vmatprep.subr.mxu0 0.0
        %1570 = vmatpush1.msra.mxu0 0.0
        %1571 = vmatprep.subr.mxu0 0.0
        %1572 = vmatpush1.msra.mxu0 0.0
        %1573 = vmatprep.subr.mxu0 0.0
        %1574 = vmatpush1.msra.mxu0 0.0
        %1575 = vmatprep.subr.mxu0 0.0
        %1576 = vmatpush1.msra.mxu0 0.0
        %1577 = vmatprep.subr.mxu0 0.0
        %1578 = vmatpush1.msra.mxu0 0.0
        %1579 = vmatprep.subr.mxu0 0.0
        %1580 = vmatpush1.msra.mxu0 0.0
        %1581 = vmatprep.mubr.f32.mxu0 0.0
        %1582 = vmatmul.mubr.f32.gmra.mrb[0].mxu0 %v1494
        %v1583 = vpop.f32.mrb[0].mxu0
        %v1584 = vadd.f32 0.0, %v1583
        %v1585 = vpop.f32.mrb[0].mxu0
        %1586 = vmatprep.mubr.f32.mxu0 0.0
        %1587 = vmatmul.mubr.f32.gmra.mrb[0].mxu0 %v1497
        %v1588 = vpop.f32.mrb[0].mxu0
        %v1589 = vadd.f32 0.0, %v1588
        %v1590 = vpop.f32.mrb[0].mxu0
        %1591 = vmatprep.mubr.f32.mxu0 0.0
        %1592 = vmatmul.mubr.f32.gmra.mrb[0].mxu0 %v1500
        %v1593 = vpop.f32.mrb[0].mxu0
        %v1594 = vadd.f32 0.0, %v1593
        %v1595 = vpop.f32.mrb[0].mxu0
        %1596 = vmatprep.mubr.f32.mxu0 0.0
        %1597 = vmatmul.mubr.f32.gmra.mrb[0].mxu0 %v1503
        %v1598 = vpop.f32.mrb[0].mxu0
        %v1599 = vadd.f32 0.0, %v1598
        %v1600 = vpop.f32.mrb[0].mxu0
        %1601 = vmatprep.mubr.f32.mxu0 0.0
        %1602 = vmatmul.mubr.f32.gmra.mrb[0].mxu0 %v1506
        %v1603 = vpop.f32.mrb[0].mxu0
        %v1604 = vadd.f32 0.0, %v1603
        %v1605 = vpop.f32.mrb[0].mxu0
        %1606 = vmatprep.mubr.f32.mxu0 0.0
        %1607 = vmatmul.mubr.f32.gmra.mrb[0].mxu0 %v1509
        %v1608 = vpop.f32.mrb[0].mxu0
        %v1609 = vadd.f32 0.0, %v1608
        %v1610 = vpop.f32.mrb[0].mxu0
        %1611 = vmatprep.mubr.f32.mxu0 0.0
        %1612 = vmatmul.mubr.f32.gmra.mrb[0].mxu0 %v1512
        %v1613 = vpop.f32.mrb[0].mxu0
        %v1614 = vadd.f32 0.0, %v1613
        %v1615 = vpop.f32.mrb[0].mxu0
        %1616 = vmatprep.mubr.f32.mxu0 0.0
        %1617 = vmatmul.mubr.f32.gmra.mrb[0].mxu0 %v1515
        %v1618 = vpop.f32.mrb[0].mxu0
        %v1619 = vadd.f32 0.0, %v1618
        %v1620 = vpop.f32.mrb[0].mxu0
        %1621 = vdwg.mxu0
        %v1622 = vadd.f32 %v1474, %v1584
        %v1623 = vadd.f32 %v1475, %v1589
        %v1624 = vadd.f32 %v1476, %v1594
        %v1625 = vadd.f32 %v1477, %v1599
        %v1626 = vadd.f32 %v1478, %v1604
        %v1627 = vadd.f32 %v1479, %v1609
        %v1628 = vadd.f32 %v1480, %v1614
        %v1629 = vadd.f32 %v1481, %v1619
        %v1630 = vld [vmem:[%s4] sm:$0x1]
        %v1632 = vlaneseq
        %v1633 = vshrl.u32 %v1632, 7
        %v1634 = vsub.s32 0, %v1633
        %v1635 = vrot.slane %v1630, %v1634
        %v1637 = vadd.f32 %v1622, %v1635
        %v1638 = vadd.f32 %v1623, %v1635
        %v1639 = vadd.f32 %v1624, %v1635
        %v1640 = vadd.f32 %v1625, %v1635
        %v1641 = vadd.f32 %v1626, %v1635
        %v1642 = vadd.f32 %v1627, %v1635
        %v1643 = vadd.f32 %v1628, %v1635
        %v1644 = vadd.f32 %v1629, %v1635
        %v1645 = vld [vmem:[#allocation9] sm:$0xff]
        %v1646 = vld [vmem:[#allocation9 + $0x8] sm:$0xff]
        %s1647 = scalar_lea.vmem [#allocation9], 16
        %v1648 = vld [vmem:[%s1647] sm:$0xff]
        %v1649 = vld [vmem:[%s1647 + $0x8] sm:$0xff]
        %1650 = vmatprep.subr.mxu0 0.0
        %1651 = vmatpush1.msra.mxu0 %v1648
        %1652 = vmatprep.subr.mxu0 0.0
        %1653 = vmatpush1.msra.mxu0 %v1649
        %1654 = vmatprep.subr.mxu0 0.0
        %1655 = vmatpush1.msra.mxu0 0.0
        %1656 = vmatprep.subr.mxu0 0.0
        %1657 = vmatpush1.msra.mxu0 0.0
        %1658 = vmatprep.subr.mxu0 0.0
        %1659 = vmatpush1.msra.mxu0 0.0
        %1660 = vmatprep.subr.mxu0 0.0
        %1661 = vmatpush1.msra.mxu0 0.0
        %1662 = vmatprep.subr.mxu0 0.0
        %1663 = vmatpush1.msra.mxu0 0.0
        %1664 = vmatprep.subr.mxu0 0.0
        %1665 = vmatpush1.msra.mxu0 0.0
        %1666 = vmatprep.subr.mxu0 0.0
        %1667 = vmatpush1.msra.mxu0 0.0
        %1668 = vmatprep.subr.mxu0 0.0
        %1669 = vmatpush1.msra.mxu0 0.0
        %1670 = vmatprep.subr.mxu0 0.0
        %1671 = vmatpush1.msra.mxu0 0.0
        %1672 = vmatprep.subr.mxu0 0.0
        %1673 = vmatpush1.msra.mxu0 0.0
        %1674 = vmatprep.subr.mxu0 0.0
        %1675 = vmatpush1.msra.mxu0 0.0
        %1676 = vmatprep.subr.mxu0 0.0
        %1677 = vmatpush1.msra.mxu0 0.0
        %1678 = vmatprep.subr.mxu0 0.0
        %1679 = vmatpush1.msra.mxu0 0.0
        %1680 = vmatprep.subr.mxu0 0.0
        %1681 = vmatpush1.msra.mxu0 0.0
        %1682 = vmatprep.subr.mxu0 0.0
        %1683 = vmatpush1.msra.mxu0 0.0
        %1684 = vmatprep.subr.mxu0 0.0
        %1685 = vmatpush1.msra.mxu0 0.0
        %1686 = vmatprep.subr.mxu0 0.0
        %1687 = vmatpush1.msra.mxu0 0.0
        %1688 = vmatprep.subr.mxu0 0.0
        %1689 = vmatpush1.msra.mxu0 0.0
        %1690 = vmatprep.subr.mxu0 0.0
        %1691 = vmatpush1.msra.mxu0 0.0
        %1692 = vmatprep.subr.mxu0 0.0
        %1693 = vmatpush1.msra.mxu0 0.0
        %1694 = vmatprep.subr.mxu0 0.0
        %1695 = vmatpush1.msra.mxu0 0.0
        %1696 = vmatprep.subr.mxu0 0.0
        %1697 = vmatpush1.msra.mxu0 0.0
        %1698 = vmatprep.subr.mxu0 0.0
        %1699 = vmatpush1.msra.mxu0 0.0
        %1700 = vmatprep.subr.mxu0 0.0
        %1701 = vmatpush1.msra.mxu0 0.0
        %1702 = vmatprep.subr.mxu0 0.0
        %1703 = vmatpush1.msra.mxu0 0.0
        %1704 = vmatprep.subr.mxu0 0.0
        %1705 = vmatpush1.msra.mxu0 0.0
        %1706 = vmatprep.subr.mxu0 0.0
        %1707 = vmatpush1.msra.mxu0 0.0
        %1708 = vmatprep.subr.mxu0 0.0
        %1709 = vmatpush1.msra.mxu0 0.0
        %1710 = vmatprep.subr.mxu0 0.0
        %1711 = vmatpush1.msra.mxu0 0.0
        %1712 = vmatprep.subr.mxu0 0.0
        %1713 = vmatpush1.msra.mxu0 0.0
        %1714 = vmatprep.mubr.f32.mxu0 0.0
        %1715 = vmatmul.mubr.f32.gmra.mrb[0].mxu0 %v1077
        %v1716 = vpop.f32.mrb[0].mxu0
        %v1717 = vadd.f32 0.0, %v1716
        %v1718 = vpop.f32.mrb[0].mxu0
        %1719 = vmatprep.mubr.f32.mxu0 0.0
        %1720 = vmatmul.mubr.f32.gmra.mrb[0].mxu0 %v1080
        %v1721 = vpop.f32.mrb[0].mxu0
        %v1722 = vadd.f32 0.0, %v1721
        %v1723 = vpop.f32.mrb[0].mxu0
        %1724 = vmatprep.mubr.f32.mxu0 0.0
        %1725 = vmatmul.mubr.f32.gmra.mrb[0].mxu0 %v1083
        %v1726 = vpop.f32.mrb[0].mxu0
        %v1727 = vadd.f32 0.0, %v1726
        %v1728 = vpop.f32.mrb[0].mxu0
        %1729 = vmatprep.mubr.f32.mxu0 0.0
        %1730 = vmatmul.mubr.f32.gmra.mrb[0].mxu0 %v1086
        %v1731 = vpop.f32.mrb[0].mxu0
        %v1732 = vadd.f32 0.0, %v1731
        %v1733 = vpop.f32.mrb[0].mxu0
        %1734 = vmatprep.mubr.f32.mxu0 0.0
        %1735 = vmatmul.mubr.f32.gmra.mrb[0].mxu0 %v1089
        %v1736 = vpop.f32.mrb[0].mxu0
        %v1737 = vadd.f32 0.0, %v1736
        %v1738 = vpop.f32.mrb[0].mxu0
        %1739 = vmatprep.mubr.f32.mxu0 0.0
        %1740 = vmatmul.mubr.f32.gmra.mrb[0].mxu0 %v1092
        %v1741 = vpop.f32.mrb[0].mxu0
        %v1742 = vadd.f32 0.0, %v1741
        %v1743 = vpop.f32.mrb[0].mxu0
        %1744 = vmatprep.mubr.f32.mxu0 0.0
        %1745 = vmatmul.mubr.f32.gmra.mrb[0].mxu0 %v1095
        %v1746 = vpop.f32.mrb[0].mxu0
        %v1747 = vadd.f32 0.0, %v1746
        %v1748 = vpop.f32.mrb[0].mxu0
        %1749 = vmatprep.mubr.f32.mxu0 0.0
        %1750 = vmatmul.mubr.f32.gmra.mrb[0].mxu0 %v1098
        %v1751 = vpop.f32.mrb[0].mxu0
        %v1752 = vadd.f32 0.0, %v1751
        %v1753 = vpop.f32.mrb[0].mxu0
        %1754 = vdwg.mxu0
        %1755 = vmatprep.subr.mxu0 0.0
        %1756 = vmatpush1.msra.mxu0 %v1645
        %1757 = vmatprep.subr.mxu0 0.0
        %1758 = vmatpush1.msra.mxu0 %v1646
        %1759 = vmatprep.subr.mxu0 0.0
        %1760 = vmatpush1.msra.mxu0 0.0
        %1761 = vmatprep.subr.mxu0 0.0
        %1762 = vmatpush1.msra.mxu0 0.0
        %1763 = vmatprep.subr.mxu0 0.0
        %1764 = vmatpush1.msra.mxu0 0.0
        %1765 = vmatprep.subr.mxu0 0.0
        %1766 = vmatpush1.msra.mxu0 0.0
        %1767 = vmatprep.subr.mxu0 0.0
        %1768 = vmatpush1.msra.mxu0 0.0
        %1769 = vmatprep.subr.mxu0 0.0
        %1770 = vmatpush1.msra.mxu0 0.0
        %1771 = vmatprep.subr.mxu0 0.0
        %1772 = vmatpush1.msra.mxu0 0.0
        %1773 = vmatprep.subr.mxu0 0.0
        %1774 = vmatpush1.msra.mxu0 0.0
        %1775 = vmatprep.subr.mxu0 0.0
        %1776 = vmatpush1.msra.mxu0 0.0
        %1777 = vmatprep.subr.mxu0 0.0
        %1778 = vmatpush1.msra.mxu0 0.0
        %1779 = vmatprep.subr.mxu0 0.0
        %1780 = vmatpush1.msra.mxu0 0.0
        %1781 = vmatprep.subr.mxu0 0.0
        %1782 = vmatpush1.msra.mxu0 0.0
        %1783 = vmatprep.subr.mxu0 0.0
        %1784 = vmatpush1.msra.mxu0 0.0
        %1785 = vmatprep.subr.mxu0 0.0
        %1786 = vmatpush1.msra.mxu0 0.0
        %1787 = vmatprep.subr.mxu0 0.0
        %1788 = vmatpush1.msra.mxu0 0.0
        %1789 = vmatprep.subr.mxu0 0.0
        %1790 = vmatpush1.msra.mxu0 0.0
        %1791 = vmatprep.subr.mxu0 0.0
        %1792 = vmatpush1.msra.mxu0 0.0
        %1793 = vmatprep.subr.mxu0 0.0
        %1794 = vmatpush1.msra.mxu0 0.0
        %1795 = vmatprep.subr.mxu0 0.0
        %1796 = vmatpush1.msra.mxu0 0.0
        %1797 = vmatprep.subr.mxu0 0.0
        %1798 = vmatpush1.msra.mxu0 0.0
        %1799 = vmatprep.subr.mxu0 0.0
        %1800 = vmatpush1.msra.mxu0 0.0
        %1801 = vmatprep.subr.mxu0 0.0
        %1802 = vmatpush1.msra.mxu0 0.0
        %1803 = vmatprep.subr.mxu0 0.0
        %1804 = vmatpush1.msra.mxu0 0.0
        %1805 = vmatprep.subr.mxu0 0.0
        %1806 = vmatpush1.msra.mxu0 0.0
        %1807 = vmatprep.subr.mxu0 0.0
        %1808 = vmatpush1.msra.mxu0 0.0
        %1809 = vmatprep.subr.mxu0 0.0
        %1810 = vmatpush1.msra.mxu0 0.0
        %1811 = vmatprep.subr.mxu0 0.0
        %1812 = vmatpush1.msra.mxu0 0.0
        %1813 = vmatprep.subr.mxu0 0.0
        %1814 = vmatpush1.msra.mxu0 0.0
        %1815 = vmatprep.subr.mxu0 0.0
        %1816 = vmatpush1.msra.mxu0 0.0
        %1817 = vmatprep.subr.mxu0 0.0
        %1818 = vmatpush1.msra.mxu0 0.0
        %1819 = vmatprep.mubr.f32.mxu0 0.0
        %1820 = vmatmul.mubr.f32.gmra.mrb[0].mxu0 %v1206
        %v1821 = vpop.f32.mrb[0].mxu0
        %v1822 = vadd.f32 %v1717, %v1821
        %v1823 = vpop.f32.mrb[0].mxu0
        %1824 = vmatprep.mubr.f32.mxu0 0.0
        %1825 = vmatmul.mubr.f32.gmra.mrb[0].mxu0 %v1209
        %v1826 = vpop.f32.mrb[0].mxu0
        %v1827 = vadd.f32 %v1722, %v1826
        %v1828 = vpop.f32.mrb[0].mxu0
        %1829 = vmatprep.mubr.f32.mxu0 0.0
        %1830 = vmatmul.mubr.f32.gmra.mrb[0].mxu0 %v1212
        %v1831 = vpop.f32.mrb[0].mxu0
        %v1832 = vadd.f32 %v1727, %v1831
        %v1833 = vpop.f32.mrb[0].mxu0
        %1834 = vmatprep.mubr.f32.mxu0 0.0
        %1835 = vmatmul.mubr.f32.gmra.mrb[0].mxu0 %v1215
        %v1836 = vpop.f32.mrb[0].mxu0
        %v1837 = vadd.f32 %v1732, %v1836
        %v1838 = vpop.f32.mrb[0].mxu0
        %1839 = vmatprep.mubr.f32.mxu0 0.0
        %1840 = vmatmul.mubr.f32.gmra.mrb[0].mxu0 %v1218
        %v1841 = vpop.f32.mrb[0].mxu0
        %v1842 = vadd.f32 %v1737, %v1841
        %v1843 = vpop.f32.mrb[0].mxu0
        %1844 = vmatprep.mubr.f32.mxu0 0.0
        %1845 = vmatmul.mubr.f32.gmra.mrb[0].mxu0 %v1221
        %v1846 = vpop.f32.mrb[0].mxu0
        %v1847 = vadd.f32 %v1742, %v1846
        %v1848 = vpop.f32.mrb[0].mxu0
        %1849 = vmatprep.mubr.f32.mxu0 0.0
        %1850 = vmatmul.mubr.f32.gmra.mrb[0].mxu0 %v1224
        %v1851 = vpop.f32.mrb[0].mxu0
        %v1852 = vadd.f32 %v1747, %v1851
        %v1853 = vpop.f32.mrb[0].mxu0
        %1854 = vmatprep.mubr.f32.mxu0 0.0
        %1855 = vmatmul.mubr.f32.gmra.mrb[0].mxu0 %v1227
        %v1856 = vpop.f32.mrb[0].mxu0
        %v1857 = vadd.f32 %v1752, %v1856
        %v1858 = vpop.f32.mrb[0].mxu0
        %1859 = vdwg.mxu0
        %s1860 = scalar_lea.vmem [#allocation9], 32
        %v1861 = vld [vmem:[%s1860] sm:$0xff]
        %v1862 = vld [vmem:[%s1860 + $0x8] sm:$0xff]
        %1863 = vmatprep.subr.mxu0 0.0
        %1864 = vmatpush1.msra.mxu0 %v1861
        %1865 = vmatprep.subr.mxu0 0.0
        %1866 = vmatpush1.msra.mxu0 %v1862
        %1867 = vmatprep.subr.mxu0 0.0
        %1868 = vmatpush1.msra.mxu0 0.0
        %1869 = vmatprep.subr.mxu0 0.0
        %1870 = vmatpush1.msra.mxu0 0.0
        %1871 = vmatprep.subr.mxu0 0.0
        %1872 = vmatpush1.msra.mxu0 0.0
        %1873 = vmatprep.subr.mxu0 0.0
        %1874 = vmatpush1.msra.mxu0 0.0
        %1875 = vmatprep.subr.mxu0 0.0
        %1876 = vmatpush1.msra.mxu0 0.0
        %1877 = vmatprep.subr.mxu0 0.0
        %1878 = vmatpush1.msra.mxu0 0.0
        %1879 = vmatprep.subr.mxu0 0.0
        %1880 = vmatpush1.msra.mxu0 0.0
        %1881 = vmatprep.subr.mxu0 0.0
        %1882 = vmatpush1.msra.mxu0 0.0
        %1883 = vmatprep.subr.mxu0 0.0
        %1884 = vmatpush1.msra.mxu0 0.0
        %1885 = vmatprep.subr.mxu0 0.0
        %1886 = vmatpush1.msra.mxu0 0.0
        %1887 = vmatprep.subr.mxu0 0.0
        %1888 = vmatpush1.msra.mxu0 0.0
        %1889 = vmatprep.subr.mxu0 0.0
        %1890 = vmatpush1.msra.mxu0 0.0
        %1891 = vmatprep.subr.mxu0 0.0
        %1892 = vmatpush1.msra.mxu0 0.0
        %1893 = vmatprep.subr.mxu0 0.0
        %1894 = vmatpush1.msra.mxu0 0.0
        %1895 = vmatprep.subr.mxu0 0.0
        %1896 = vmatpush1.msra.mxu0 0.0
        %1897 = vmatprep.subr.mxu0 0.0
        %1898 = vmatpush1.msra.mxu0 0.0
        %1899 = vmatprep.subr.mxu0 0.0
        %1900 = vmatpush1.msra.mxu0 0.0
        %1901 = vmatprep.subr.mxu0 0.0
        %1902 = vmatpush1.msra.mxu0 0.0
        %1903 = vmatprep.subr.mxu0 0.0
        %1904 = vmatpush1.msra.mxu0 0.0
        %1905 = vmatprep.subr.mxu0 0.0
        %1906 = vmatpush1.msra.mxu0 0.0
        %1907 = vmatprep.subr.mxu0 0.0
        %1908 = vmatpush1.msra.mxu0 0.0
        %1909 = vmatprep.subr.mxu0 0.0
        %1910 = vmatpush1.msra.mxu0 0.0
        %1911 = vmatprep.subr.mxu0 0.0
        %1912 = vmatpush1.msra.mxu0 0.0
        %1913 = vmatprep.subr.mxu0 0.0
        %1914 = vmatpush1.msra.mxu0 0.0
        %1915 = vmatprep.subr.mxu0 0.0
        %1916 = vmatpush1.msra.mxu0 0.0
        %1917 = vmatprep.subr.mxu0 0.0
        %1918 = vmatpush1.msra.mxu0 0.0
        %1919 = vmatprep.subr.mxu0 0.0
        %1920 = vmatpush1.msra.mxu0 0.0
        %1921 = vmatprep.subr.mxu0 0.0
        %1922 = vmatpush1.msra.mxu0 0.0
        %1923 = vmatprep.subr.mxu0 0.0
        %1924 = vmatpush1.msra.mxu0 0.0
        %1925 = vmatprep.subr.mxu0 0.0
        %1926 = vmatpush1.msra.mxu0 0.0
        %1927 = vmatprep.mubr.f32.mxu0 0.0
        %1928 = vmatmul.mubr.f32.gmra.mrb[0].mxu0 %v1346
        %v1929 = vpop.f32.mrb[0].mxu0
        %v1930 = vadd.f32 0.0, %v1929
        %v1931 = vpop.f32.mrb[0].mxu0
        %1932 = vmatprep.mubr.f32.mxu0 0.0
        %1933 = vmatmul.mubr.f32.gmra.mrb[0].mxu0 %v1349
        %v1934 = vpop.f32.mrb[0].mxu0
        %v1935 = vadd.f32 0.0, %v1934
        %v1936 = vpop.f32.mrb[0].mxu0
        %1937 = vmatprep.mubr.f32.mxu0 0.0
        %1938 = vmatmul.mubr.f32.gmra.mrb[0].mxu0 %v1352
        %v1939 = vpop.f32.mrb[0].mxu0
        %v1940 = vadd.f32 0.0, %v1939
        %v1941 = vpop.f32.mrb[0].mxu0
        %1942 = vmatprep.mubr.f32.mxu0 0.0
        %1943 = vmatmul.mubr.f32.gmra.mrb[0].mxu0 %v1355
        %v1944 = vpop.f32.mrb[0].mxu0
        %v1945 = vadd.f32 0.0, %v1944
        %v1946 = vpop.f32.mrb[0].mxu0
        %1947 = vmatprep.mubr.f32.mxu0 0.0
        %1948 = vmatmul.mubr.f32.gmra.mrb[0].mxu0 %v1358
        %v1949 = vpop.f32.mrb[0].mxu0
        %v1950 = vadd.f32 0.0, %v1949
        %v1951 = vpop.f32.mrb[0].mxu0
        %1952 = vmatprep.mubr.f32.mxu0 0.0
        %1953 = vmatmul.mubr.f32.gmra.mrb[0].mxu0 %v1361
        %v1954 = vpop.f32.mrb[0].mxu0
        %v1955 = vadd.f32 0.0, %v1954
        %v1956 = vpop.f32.mrb[0].mxu0
        %1957 = vmatprep.mubr.f32.mxu0 0.0
        %1958 = vmatmul.mubr.f32.gmra.mrb[0].mxu0 %v1364
        %v1959 = vpop.f32.mrb[0].mxu0
        %v1960 = vadd.f32 0.0, %v1959
        %v1961 = vpop.f32.mrb[0].mxu0
        %1962 = vmatprep.mubr.f32.mxu0 0.0
        %1963 = vmatmul.mubr.f32.gmra.mrb[0].mxu0 %v1367
        %v1964 = vpop.f32.mrb[0].mxu0
        %v1965 = vadd.f32 0.0, %v1964
        %v1966 = vpop.f32.mrb[0].mxu0
        %1967 = vdwg.mxu0
        %v1968 = vadd.f32 %v1822, %v1930
        %v1969 = vadd.f32 %v1827, %v1935
        %v1970 = vadd.f32 %v1832, %v1940
        %v1971 = vadd.f32 %v1837, %v1945
        %v1972 = vadd.f32 %v1842, %v1950
        %v1973 = vadd.f32 %v1847, %v1955
        %v1974 = vadd.f32 %v1852, %v1960
        %v1975 = vadd.f32 %v1857, %v1965
        %s1976 = scalar_lea.vmem [#allocation9], 48
        %v1977 = vld [vmem:[%s1976] sm:$0xff]
        %v1978 = vld [vmem:[%s1976 + $0x8] sm:$0xff]
        %1979 = vmatprep.subr.mxu0 0.0
        %1980 = vmatpush1.msra.mxu0 %v1977
        %1981 = vmatprep.subr.mxu0 0.0
        %1982 = vmatpush1.msra.mxu0 %v1978
        %1983 = vmatprep.subr.mxu0 0.0
        %1984 = vmatpush1.msra.mxu0 0.0
        %1985 = vmatprep.subr.mxu0 0.0
        %1986 = vmatpush1.msra.mxu0 0.0
        %1987 = vmatprep.subr.mxu0 0.0
        %1988 = vmatpush1.msra.mxu0 0.0
        %1989 = vmatprep.subr.mxu0 0.0
        %1990 = vmatpush1.msra.mxu0 0.0
        %1991 = vmatprep.subr.mxu0 0.0
        %1992 = vmatpush1.msra.mxu0 0.0
        %1993 = vmatprep.subr.mxu0 0.0
        %1994 = vmatpush1.msra.mxu0 0.0
        %1995 = vmatprep.subr.mxu0 0.0
        %1996 = vmatpush1.msra.mxu0 0.0
        %1997 = vmatprep.subr.mxu0 0.0
        %1998 = vmatpush1.msra.mxu0 0.0
        %1999 = vmatprep.subr.mxu0 0.0
        %2000 = vmatpush1.msra.mxu0 0.0
        %2001 = vmatprep.subr.mxu0 0.0
        %2002 = vmatpush1.msra.mxu0 0.0
        %2003 = vmatprep.subr.mxu0 0.0
        %2004 = vmatpush1.msra.mxu0 0.0
        %2005 = vmatprep.subr.mxu0 0.0
        %2006 = vmatpush1.msra.mxu0 0.0
        %2007 = vmatprep.subr.mxu0 0.0
        %2008 = vmatpush1.msra.mxu0 0.0
        %2009 = vmatprep.subr.mxu0 0.0
        %2010 = vmatpush1.msra.mxu0 0.0
        %2011 = vmatprep.subr.mxu0 0.0
        %2012 = vmatpush1.msra.mxu0 0.0
        %2013 = vmatprep.subr.mxu0 0.0
        %2014 = vmatpush1.msra.mxu0 0.0
        %2015 = vmatprep.subr.mxu0 0.0
        %2016 = vmatpush1.msra.mxu0 0.0
        %2017 = vmatprep.subr.mxu0 0.0
        %2018 = vmatpush1.msra.mxu0 0.0
        %2019 = vmatprep.subr.mxu0 0.0
        %2020 = vmatpush1.msra.mxu0 0.0
        %2021 = vmatprep.subr.mxu0 0.0
        %2022 = vmatpush1.msra.mxu0 0.0
        %2023 = vmatprep.subr.mxu0 0.0
        %2024 = vmatpush1.msra.mxu0 0.0
        %2025 = vmatprep.subr.mxu0 0.0
        %2026 = vmatpush1.msra.mxu0 0.0
        %2027 = vmatprep.subr.mxu0 0.0
        %2028 = vmatpush1.msra.mxu0 0.0
        %2029 = vmatprep.subr.mxu0 0.0
        %2030 = vmatpush1.msra.mxu0 0.0
        %2031 = vmatprep.subr.mxu0 0.0
        %2032 = vmatpush1.msra.mxu0 0.0
        %2033 = vmatprep.subr.mxu0 0.0
        %2034 = vmatpush1.msra.mxu0 0.0
        %2035 = vmatprep.subr.mxu0 0.0
        %2036 = vmatpush1.msra.mxu0 0.0
        %2037 = vmatprep.subr.mxu0 0.0
        %2038 = vmatpush1.msra.mxu0 0.0
        %2039 = vmatprep.subr.mxu0 0.0
        %2040 = vmatpush1.msra.mxu0 0.0
        %2041 = vmatprep.subr.mxu0 0.0
        %2042 = vmatpush1.msra.mxu0 0.0
        %2043 = vmatprep.mubr.f32.mxu0 0.0
        %2044 = vmatmul.mubr.f32.gmra.mrb[0].mxu0 %v1494
        %v2045 = vpop.f32.mrb[0].mxu0
        %v2046 = vadd.f32 0.0, %v2045
        %v2047 = vpop.f32.mrb[0].mxu0
        %2048 = vmatprep.mubr.f32.mxu0 0.0
        %2049 = vmatmul.mubr.f32.gmra.mrb[0].mxu0 %v1497
        %v2050 = vpop.f32.mrb[0].mxu0
        %v2051 = vadd.f32 0.0, %v2050
        %v2052 = vpop.f32.mrb[0].mxu0
        %2053 = vmatprep.mubr.f32.mxu0 0.0
        %2054 = vmatmul.mubr.f32.gmra.mrb[0].mxu0 %v1500
        %v2055 = vpop.f32.mrb[0].mxu0
        %v2056 = vadd.f32 0.0, %v2055
        %v2057 = vpop.f32.mrb[0].mxu0
        %2058 = vmatprep.mubr.f32.mxu0 0.0
        %2059 = vmatmul.mubr.f32.gmra.mrb[0].mxu0 %v1503
        %v2060 = vpop.f32.mrb[0].mxu0
        %v2061 = vadd.f32 0.0, %v2060
        %v2062 = vpop.f32.mrb[0].mxu0
        %2063 = vmatprep.mubr.f32.mxu0 0.0
        %2064 = vmatmul.mubr.f32.gmra.mrb[0].mxu0 %v1506
        %v2065 = vpop.f32.mrb[0].mxu0
        %v2066 = vadd.f32 0.0, %v2065
        %v2067 = vpop.f32.mrb[0].mxu0
        %2068 = vmatprep.mubr.f32.mxu0 0.0
        %2069 = vmatmul.mubr.f32.gmra.mrb[0].mxu0 %v1509
        %v2070 = vpop.f32.mrb[0].mxu0
        %v2071 = vadd.f32 0.0, %v2070
        %v2072 = vpop.f32.mrb[0].mxu0
        %2073 = vmatprep.mubr.f32.mxu0 0.0
        %2074 = vmatmul.mubr.f32.gmra.mrb[0].mxu0 %v1512
        %v2075 = vpop.f32.mrb[0].mxu0
        %v2076 = vadd.f32 0.0, %v2075
        %v2077 = vpop.f32.mrb[0].mxu0
        %2078 = vmatprep.mubr.f32.mxu0 0.0
        %2079 = vmatmul.mubr.f32.gmra.mrb[0].mxu0 %v1515
        %v2080 = vpop.f32.mrb[0].mxu0
        %v2081 = vadd.f32 0.0, %v2080
        %v2082 = vpop.f32.mrb[0].mxu0
        %2083 = vdwg.mxu0
        %v2084 = vadd.f32 %v1968, %v2046
        %v2085 = vadd.f32 %v1969, %v2051
        %v2086 = vadd.f32 %v1970, %v2056
        %v2087 = vadd.f32 %v1971, %v2061
        %v2088 = vadd.f32 %v1972, %v2066
        %v2089 = vadd.f32 %v1973, %v2071
        %v2090 = vadd.f32 %v1974, %v2076
        %v2091 = vadd.f32 %v1975, %v2081
        %v2092 = vld [vmem:[%s6] sm:$0x1]
        %v2094 = vlaneseq
        %v2095 = vshrl.u32 %v2094, 7
        %v2096 = vsub.s32 0, %v2095
        %v2097 = vrot.slane %v2092, %v2096
        %v2099 = vadd.f32 %v2084, %v2097
        %v2100 = vadd.f32 %v2085, %v2097
        %v2101 = vadd.f32 %v2086, %v2097
        %v2102 = vadd.f32 %v2087, %v2097
        %v2103 = vadd.f32 %v2088, %v2097
        %v2104 = vadd.f32 %v2089, %v2097
        %v2105 = vadd.f32 %v2090, %v2097
        %v2106 = vadd.f32 %v2091, %v2097
        %v2107 = vxor.u32 %v2099, 2147483648
        %v2108 = vxor.u32 %v2100, 2147483648
        %v2109 = vxor.u32 %v2101, 2147483648
        %v2110 = vxor.u32 %v2102, 2147483648
        %v2111 = vxor.u32 %v2103, 2147483648
        %v2112 = vxor.u32 %v2104, 2147483648
        %v2113 = vxor.u32 %v2105, 2147483648
        %v2114 = vxor.u32 %v2106, 2147483648
        %v2115 = vmul.f32 %v2107, 1.442695
        %v2116 = vpow.pop %v2115
        %v2117 = vmul.f32 %v2108, 1.442695
        %v2118 = vpow.pop %v2117
        %v2119 = vmul.f32 %v2109, 1.442695
        %v2120 = vpow.pop %v2119
        %v2121 = vmul.f32 %v2110, 1.442695
        %v2122 = vpow.pop %v2121
        %v2123 = vmul.f32 %v2111, 1.442695
        %v2124 = vpow.pop %v2123
        %v2125 = vmul.f32 %v2112, 1.442695
        %v2126 = vpow.pop %v2125
        %v2127 = vmul.f32 %v2113, 1.442695
        %v2128 = vpow.pop %v2127
        %v2129 = vmul.f32 %v2114, 1.442695
        %v2130 = vpow.pop %v2129
        %v2131 = vadd.f32 %v2116, 1.0
        %v2132 = vadd.f32 %v2118, 1.0
        %v2133 = vadd.f32 %v2120, 1.0
        %v2134 = vadd.f32 %v2122, 1.0
        %v2135 = vadd.f32 %v2124, 1.0
        %v2136 = vadd.f32 %v2126, 1.0
        %v2137 = vadd.f32 %v2128, 1.0
        %v2138 = vadd.f32 %v2130, 1.0
        %v2139 = vrcp.pop %v2131
        %v2140 = vmul.f32 1.0, %v2139
        %v2141 = vrcp.pop %v2132
        %v2142 = vmul.f32 1.0, %v2141
        %v2143 = vrcp.pop %v2133
        %v2144 = vmul.f32 1.0, %v2143
        %v2145 = vrcp.pop %v2134
        %v2146 = vmul.f32 1.0, %v2145
        %v2147 = vrcp.pop %v2135
        %v2148 = vmul.f32 1.0, %v2147
        %v2149 = vrcp.pop %v2136
        %v2150 = vmul.f32 1.0, %v2149
        %v2151 = vrcp.pop %v2137
        %v2152 = vmul.f32 1.0, %v2151
        %v2153 = vrcp.pop %v2138
        %v2154 = vmul.f32 1.0, %v2153
        %v2155 = vmul.f32 %v1637, %v2140
        %v2156 = vmul.f32 %v1638, %v2142
        %v2157 = vmul.f32 %v1639, %v2144
        %v2158 = vmul.f32 %v1640, %v2146
        %v2159 = vmul.f32 %v1641, %v2148
        %v2160 = vmul.f32 %v1642, %v2150
        %v2161 = vmul.f32 %v1643, %v2152
        %v2162 = vmul.f32 %v1644, %v2154
        %v2163 = vadd.f32 %v360, %v2155
        %v2164 = vadd.f32 %v361, %v2156
        %v2165 = vadd.f32 %v362, %v2157
        %v2166 = vadd.f32 %v363, %v2158
        %v2167 = vadd.f32 %v364, %v2159
        %v2168 = vadd.f32 %v365, %v2160
        %v2169 = vadd.f32 %v366, %v2161
        %v2170 = vadd.f32 %v367, %v2162
        %vm2171 = vcmp.gt.f32.partialorder %v2163, 0.0
        %vm2172 = vcmp.gt.f32.partialorder %v2164, 0.0
        %vm2173 = vcmp.gt.f32.partialorder %v2165, 0.0
        %vm2174 = vcmp.gt.f32.partialorder %v2166, 0.0
        %vm2175 = vcmp.gt.f32.partialorder %v2167, 0.0
        %vm2176 = vcmp.gt.f32.partialorder %v2168, 0.0
        %vm2177 = vcmp.gt.f32.partialorder %v2169, 0.0
        %vm2178 = vcmp.gt.f32.partialorder %v2170, 0.0
        %v2179 = vmul.f32 %v2163, 1.442695
        %v2180 = vpow.pop %v2179
        %v2181 = vmul.f32 %v2164, 1.442695
        %v2182 = vpow.pop %v2181
        %v2183 = vmul.f32 %v2165, 1.442695
        %v2184 = vpow.pop %v2183
        %v2185 = vmul.f32 %v2166, 1.442695
        %v2186 = vpow.pop %v2185
        %v2187 = vmul.f32 %v2167, 1.442695
        %v2188 = vpow.pop %v2187
        %v2189 = vmul.f32 %v2168, 1.442695
        %v2190 = vpow.pop %v2189
        %v2191 = vmul.f32 %v2169, 1.442695
        %v2192 = vpow.pop %v2191
        %v2193 = vmul.f32 %v2170, 1.442695
        %v2194 = vpow.pop %v2193
        %v2195 = vsub.f32 %v2180, 1.0
        %v2196 = vsub.f32 %v2182, 1.0
        %v2197 = vsub.f32 %v2184, 1.0
        %v2198 = vsub.f32 %v2186, 1.0
        %v2199 = vsub.f32 %v2188, 1.0
        %v2200 = vsub.f32 %v2190, 1.0
        %v2201 = vsub.f32 %v2192, 1.0
        %v2202 = vsub.f32 %v2194, 1.0
        %v2203 = vsel %vm2171, %v2163, %v2195
        %v2204 = vsel %vm2172, %v2164, %v2196
        %v2205 = vsel %vm2173, %v2165, %v2197
        %v2206 = vsel %vm2174, %v2166, %v2198
        %v2207 = vsel %vm2175, %v2167, %v2199
        %v2208 = vsel %vm2176, %v2168, %v2200
        %v2209 = vsel %vm2177, %v2169, %v2201
        %v2210 = vsel %vm2178, %v2170, %v2202
        %2211 = vst.msk [vmem:[%s408 + $0x8] sm:$0xff] %vm341, %v2203
        %2212 = vst.msk [vmem:[%s408 + $0x18] sm:$0xff] %vm341, %v2204
        %2213 = vst.msk [vmem:[%s408 + $0x28] sm:$0xff] %vm341, %v2205
        %2214 = vst.msk [vmem:[%s408 + $0x38] sm:$0xff] %vm341, %v2206
        %2215 = vst.msk [vmem:[%s408 + $0x48] sm:$0xff] %vm341, %v2207
        %2216 = vst.msk [vmem:[%s408 + $0x58] sm:$0xff] %vm341, %v2208
        %2217 = vst.msk [vmem:[%s408 + $0x68] sm:$0xff] %vm341, %v2209
        %2218 = vst.msk [vmem:[%s408 + $0x78] sm:$0xff] %vm341, %v2210
        %v2219 = vld [vmem:[#allocation2 + $0x7] sm:$0xff]
        %v2220 = vld [vmem:[#allocation2 + $0x17] sm:$0xff]
        %v2221 = vld [vmem:[#allocation2 + $0x27] sm:$0xff]
        %v2222 = vld [vmem:[#allocation2 + $0x37] sm:$0xff]
        %v2223 = vld [vmem:[#allocation2 + $0x47] sm:$0xff]
        %v2224 = vld [vmem:[#allocation2 + $0x57] sm:$0xff]
        %v2225 = vld [vmem:[#allocation2 + $0x67] sm:$0xff]
        %v2226 = vld [vmem:[#allocation2 + $0x77] sm:$0xff]
        %s2227 = scalar_lea.vmem [#allocation6], 64
        %v2228 = vld [vmem:[%s2227] sm:$0xff]
        %v2229 = vld [vmem:[%s2227 + $0x8] sm:$0xff]
        %v2230 = vld [vmem:[#allocation2 + $0x8] sm:$0xff]
        %v2231 = vld [vmem:[#allocation2 + $0x18] sm:$0xff]
        %v2232 = vld [vmem:[#allocation2 + $0x28] sm:$0xff]
        %v2233 = vld [vmem:[#allocation2 + $0x38] sm:$0xff]
        %v2234 = vld [vmem:[#allocation2 + $0x48] sm:$0xff]
        %v2235 = vld [vmem:[#allocation2 + $0x58] sm:$0xff]
        %v2236 = vld [vmem:[#allocation2 + $0x68] sm:$0xff]
        %v2237 = vld [vmem:[#allocation2 + $0x78] sm:$0xff]
        %s2238 = scalar_lea.vmem [#allocation6], 80
        %v2239 = vld [vmem:[%s2238] sm:$0xff]
        %v2240 = vld [vmem:[%s2238 + $0x8] sm:$0xff]
        %v2242 = vsel %vm341, %v2230, 0
        %v2245 = vsel %vm341, %v2231, 0
        %v2248 = vsel %vm341, %v2232, 0
        %v2251 = vsel %vm341, %v2233, 0
        %v2254 = vsel %vm341, %v2234, 0
        %v2257 = vsel %vm341, %v2235, 0
        %v2260 = vsel %vm341, %v2236, 0
        %v2263 = vsel %vm341, %v2237, 0
        %2265 = vmatprep.subr.mxu0 0.0
        %2266 = vmatpush1.msra.mxu0 %v2239
        %2267 = vmatprep.subr.mxu0 0.0
        %2268 = vmatpush1.msra.mxu0 %v2240
        %2269 = vmatprep.subr.mxu0 0.0
        %2270 = vmatpush1.msra.mxu0 0.0
        %2271 = vmatprep.subr.mxu0 0.0
        %2272 = vmatpush1.msra.mxu0 0.0
        %2273 = vmatprep.subr.mxu0 0.0
        %2274 = vmatpush1.msra.mxu0 0.0
        %2275 = vmatprep.subr.mxu0 0.0
        %2276 = vmatpush1.msra.mxu0 0.0
        %2277 = vmatprep.subr.mxu0 0.0
        %2278 = vmatpush1.msra.mxu0 0.0
        %2279 = vmatprep.subr.mxu0 0.0
        %2280 = vmatpush1.msra.mxu0 0.0
        %2281 = vmatprep.subr.mxu0 0.0
        %2282 = vmatpush1.msra.mxu0 0.0
        %2283 = vmatprep.subr.mxu0 0.0
        %2284 = vmatpush1.msra.mxu0 0.0
        %2285 = vmatprep.subr.mxu0 0.0
        %2286 = vmatpush1.msra.mxu0 0.0
        %2287 = vmatprep.subr.mxu0 0.0
        %2288 = vmatpush1.msra.mxu0 0.0
        %2289 = vmatprep.subr.mxu0 0.0
        %2290 = vmatpush1.msra.mxu0 0.0
        %2291 = vmatprep.subr.mxu0 0.0
        %2292 = vmatpush1.msra.mxu0 0.0
        %2293 = vmatprep.subr.mxu0 0.0
        %2294 = vmatpush1.msra.mxu0 0.0
        %2295 = vmatprep.subr.mxu0 0.0
        %2296 = vmatpush1.msra.mxu0 0.0
        %2297 = vmatprep.subr.mxu0 0.0
        %2298 = vmatpush1.msra.mxu0 0.0
        %2299 = vmatprep.subr.mxu0 0.0
        %2300 = vmatpush1.msra.mxu0 0.0
        %2301 = vmatprep.subr.mxu0 0.0
        %2302 = vmatpush1.msra.mxu0 0.0
        %2303 = vmatprep.subr.mxu0 0.0
        %2304 = vmatpush1.msra.mxu0 0.0
        %2305 = vmatprep.subr.mxu0 0.0
        %2306 = vmatpush1.msra.mxu0 0.0
        %2307 = vmatprep.subr.mxu0 0.0
        %2308 = vmatpush1.msra.mxu0 0.0
        %2309 = vmatprep.subr.mxu0 0.0
        %2310 = vmatpush1.msra.mxu0 0.0
        %2311 = vmatprep.subr.mxu0 0.0
        %2312 = vmatpush1.msra.mxu0 0.0
        %2313 = vmatprep.subr.mxu0 0.0
        %2314 = vmatpush1.msra.mxu0 0.0
        %2315 = vmatprep.subr.mxu0 0.0
        %2316 = vmatpush1.msra.mxu0 0.0
        %2317 = vmatprep.subr.mxu0 0.0
        %2318 = vmatpush1.msra.mxu0 0.0
        %2319 = vmatprep.subr.mxu0 0.0
        %2320 = vmatpush1.msra.mxu0 0.0
        %2321 = vmatprep.subr.mxu0 0.0
        %2322 = vmatpush1.msra.mxu0 0.0
        %2323 = vmatprep.subr.mxu0 0.0
        %2324 = vmatpush1.msra.mxu0 0.0
        %2325 = vmatprep.subr.mxu0 0.0
        %2326 = vmatpush1.msra.mxu0 0.0
        %2327 = vmatprep.subr.mxu0 0.0
        %2328 = vmatpush1.msra.mxu0 0.0
        %2329 = vmatprep.mubr.f32.mxu0 0.0
        %2330 = vmatmul.mubr.f32.gmra.mrb[0].mxu0 %v2242
        %v2331 = vpop.f32.mrb[0].mxu0
        %v2332 = vadd.f32 0.0, %v2331
        %v2333 = vpop.f32.mrb[0].mxu0
        %2334 = vmatprep.mubr.f32.mxu0 0.0
        %2335 = vmatmul.mubr.f32.gmra.mrb[0].mxu0 %v2245
        %v2336 = vpop.f32.mrb[0].mxu0
        %v2337 = vadd.f32 0.0, %v2336
        %v2338 = vpop.f32.mrb[0].mxu0
        %2339 = vmatprep.mubr.f32.mxu0 0.0
        %2340 = vmatmul.mubr.f32.gmra.mrb[0].mxu0 %v2248
        %v2341 = vpop.f32.mrb[0].mxu0
        %v2342 = vadd.f32 0.0, %v2341
        %v2343 = vpop.f32.mrb[0].mxu0
        %2344 = vmatprep.mubr.f32.mxu0 0.0
        %2345 = vmatmul.mubr.f32.gmra.mrb[0].mxu0 %v2251
        %v2346 = vpop.f32.mrb[0].mxu0
        %v2347 = vadd.f32 0.0, %v2346
        %v2348 = vpop.f32.mrb[0].mxu0
        %2349 = vmatprep.mubr.f32.mxu0 0.0
        %2350 = vmatmul.mubr.f32.gmra.mrb[0].mxu0 %v2254
        %v2351 = vpop.f32.mrb[0].mxu0
        %v2352 = vadd.f32 0.0, %v2351
        %v2353 = vpop.f32.mrb[0].mxu0
        %2354 = vmatprep.mubr.f32.mxu0 0.0
        %2355 = vmatmul.mubr.f32.gmra.mrb[0].mxu0 %v2257
        %v2356 = vpop.f32.mrb[0].mxu0
        %v2357 = vadd.f32 0.0, %v2356
        %v2358 = vpop.f32.mrb[0].mxu0
        %2359 = vmatprep.mubr.f32.mxu0 0.0
        %2360 = vmatmul.mubr.f32.gmra.mrb[0].mxu0 %v2260
        %v2361 = vpop.f32.mrb[0].mxu0
        %v2362 = vadd.f32 0.0, %v2361
        %v2363 = vpop.f32.mrb[0].mxu0
        %2364 = vmatprep.mubr.f32.mxu0 0.0
        %2365 = vmatmul.mubr.f32.gmra.mrb[0].mxu0 %v2263
        %v2366 = vpop.f32.mrb[0].mxu0
        %v2367 = vadd.f32 0.0, %v2366
        %v2368 = vpop.f32.mrb[0].mxu0
        %2369 = vdwg.mxu0
        %v2371 = vsel %vm341, %v2219, 0
        %v2374 = vsel %vm341, %v2220, 0
        %v2377 = vsel %vm341, %v2221, 0
        %v2380 = vsel %vm341, %v2222, 0
        %v2383 = vsel %vm341, %v2223, 0
        %v2386 = vsel %vm341, %v2224, 0
        %v2389 = vsel %vm341, %v2225, 0
        %v2392 = vsel %vm341, %v2226, 0
        %2394 = vmatprep.subr.mxu0 0.0
        %2395 = vmatpush1.msra.mxu0 %v2228
        %2396 = vmatprep.subr.mxu0 0.0
        %2397 = vmatpush1.msra.mxu0 %v2229
        %2398 = vmatprep.subr.mxu0 0.0
        %2399 = vmatpush1.msra.mxu0 0.0
        %2400 = vmatprep.subr.mxu0 0.0
        %2401 = vmatpush1.msra.mxu0 0.0
        %2402 = vmatprep.subr.mxu0 0.0
        %2403 = vmatpush1.msra.mxu0 0.0
        %2404 = vmatprep.subr.mxu0 0.0
        %2405 = vmatpush1.msra.mxu0 0.0
        %2406 = vmatprep.subr.mxu0 0.0
        %2407 = vmatpush1.msra.mxu0 0.0
        %2408 = vmatprep.subr.mxu0 0.0
        %2409 = vmatpush1.msra.mxu0 0.0
        %2410 = vmatprep.subr.mxu0 0.0
        %2411 = vmatpush1.msra.mxu0 0.0
        %2412 = vmatprep.subr.mxu0 0.0
        %2413 = vmatpush1.msra.mxu0 0.0
        %2414 = vmatprep.subr.mxu0 0.0
        %2415 = vmatpush1.msra.mxu0 0.0
        %2416 = vmatprep.subr.mxu0 0.0
        %2417 = vmatpush1.msra.mxu0 0.0
        %2418 = vmatprep.subr.mxu0 0.0
        %2419 = vmatpush1.msra.mxu0 0.0
        %2420 = vmatprep.subr.mxu0 0.0
        %2421 = vmatpush1.msra.mxu0 0.0
        %2422 = vmatprep.subr.mxu0 0.0
        %2423 = vmatpush1.msra.mxu0 0.0
        %2424 = vmatprep.subr.mxu0 0.0
        %2425 = vmatpush1.msra.mxu0 0.0
        %2426 = vmatprep.subr.mxu0 0.0
        %2427 = vmatpush1.msra.mxu0 0.0
        %2428 = vmatprep.subr.mxu0 0.0
        %2429 = vmatpush1.msra.mxu0 0.0
        %2430 = vmatprep.subr.mxu0 0.0
        %2431 = vmatpush1.msra.mxu0 0.0
        %2432 = vmatprep.subr.mxu0 0.0
        %2433 = vmatpush1.msra.mxu0 0.0
        %2434 = vmatprep.subr.mxu0 0.0
        %2435 = vmatpush1.msra.mxu0 0.0
        %2436 = vmatprep.subr.mxu0 0.0
        %2437 = vmatpush1.msra.mxu0 0.0
        %2438 = vmatprep.subr.mxu0 0.0
        %2439 = vmatpush1.msra.mxu0 0.0
        %2440 = vmatprep.subr.mxu0 0.0
        %2441 = vmatpush1.msra.mxu0 0.0
        %2442 = vmatprep.subr.mxu0 0.0
        %2443 = vmatpush1.msra.mxu0 0.0
        %2444 = vmatprep.subr.mxu0 0.0
        %2445 = vmatpush1.msra.mxu0 0.0
        %2446 = vmatprep.subr.mxu0 0.0
        %2447 = vmatpush1.msra.mxu0 0.0
        %2448 = vmatprep.subr.mxu0 0.0
        %2449 = vmatpush1.msra.mxu0 0.0
        %2450 = vmatprep.subr.mxu0 0.0
        %2451 = vmatpush1.msra.mxu0 0.0
        %2452 = vmatprep.subr.mxu0 0.0
        %2453 = vmatpush1.msra.mxu0 0.0
        %2454 = vmatprep.subr.mxu0 0.0
        %2455 = vmatpush1.msra.mxu0 0.0
        %2456 = vmatprep.subr.mxu0 0.0
        %2457 = vmatpush1.msra.mxu0 0.0
        %2458 = vmatprep.mubr.f32.mxu0 0.0
        %2459 = vmatmul.mubr.f32.gmra.mrb[0].mxu0 %v2371
        %v2460 = vpop.f32.mrb[0].mxu0
        %v2461 = vadd.f32 %v2332, %v2460
        %v2462 = vpop.f32.mrb[0].mxu0
        %2463 = vmatprep.mubr.f32.mxu0 0.0
        %2464 = vmatmul.mubr.f32.gmra.mrb[0].mxu0 %v2374
        %v2465 = vpop.f32.mrb[0].mxu0
        %v2466 = vadd.f32 %v2337, %v2465
        %v2467 = vpop.f32.mrb[0].mxu0
        %2468 = vmatprep.mubr.f32.mxu0 0.0
        %2469 = vmatmul.mubr.f32.gmra.mrb[0].mxu0 %v2377
        %v2470 = vpop.f32.mrb[0].mxu0
        %v2471 = vadd.f32 %v2342, %v2470
        %v2472 = vpop.f32.mrb[0].mxu0
        %2473 = vmatprep.mubr.f32.mxu0 0.0
        %2474 = vmatmul.mubr.f32.gmra.mrb[0].mxu0 %v2380
        %v2475 = vpop.f32.mrb[0].mxu0
        %v2476 = vadd.f32 %v2347, %v2475
        %v2477 = vpop.f32.mrb[0].mxu0
        %2478 = vmatprep.mubr.f32.mxu0 0.0
        %2479 = vmatmul.mubr.f32.gmra.mrb[0].mxu0 %v2383
        %v2480 = vpop.f32.mrb[0].mxu0
        %v2481 = vadd.f32 %v2352, %v2480
        %v2482 = vpop.f32.mrb[0].mxu0
        %2483 = vmatprep.mubr.f32.mxu0 0.0
        %2484 = vmatmul.mubr.f32.gmra.mrb[0].mxu0 %v2386
        %v2485 = vpop.f32.mrb[0].mxu0
        %v2486 = vadd.f32 %v2357, %v2485
        %v2487 = vpop.f32.mrb[0].mxu0
        %2488 = vmatprep.mubr.f32.mxu0 0.0
        %2489 = vmatmul.mubr.f32.gmra.mrb[0].mxu0 %v2389
        %v2490 = vpop.f32.mrb[0].mxu0
        %v2491 = vadd.f32 %v2362, %v2490
        %v2492 = vpop.f32.mrb[0].mxu0
        %2493 = vmatprep.mubr.f32.mxu0 0.0
        %2494 = vmatmul.mubr.f32.gmra.mrb[0].mxu0 %v2392
        %v2495 = vpop.f32.mrb[0].mxu0
        %v2496 = vadd.f32 %v2367, %v2495
        %v2497 = vpop.f32.mrb[0].mxu0
        %2498 = vdwg.mxu0
        %v2499 = vld [vmem:[%s408 + $0x7] sm:$0xff]
        %v2500 = vld [vmem:[%s408 + $0x17] sm:$0xff]
        %v2501 = vld [vmem:[%s408 + $0x27] sm:$0xff]
        %v2502 = vld [vmem:[%s408 + $0x37] sm:$0xff]
        %v2503 = vld [vmem:[%s408 + $0x47] sm:$0xff]
        %v2504 = vld [vmem:[%s408 + $0x57] sm:$0xff]
        %v2505 = vld [vmem:[%s408 + $0x67] sm:$0xff]
        %v2506 = vld [vmem:[%s408 + $0x77] sm:$0xff]
        %s2507 = scalar_lea.vmem [#allocation6], 96
        %v2508 = vld [vmem:[%s2507] sm:$0xff]
        %v2509 = vld [vmem:[%s2507 + $0x8] sm:$0xff]
        %v2511 = vsel %vm341, %v2499, 0
        %v2514 = vsel %vm341, %v2500, 0
        %v2517 = vsel %vm341, %v2501, 0
        %v2520 = vsel %vm341, %v2502, 0
        %v2523 = vsel %vm341, %v2503, 0
        %v2526 = vsel %vm341, %v2504, 0
        %v2529 = vsel %vm341, %v2505, 0
        %v2532 = vsel %vm341, %v2506, 0
        %2534 = vmatprep.subr.mxu0 0.0
        %2535 = vmatpush1.msra.mxu0 %v2508
        %2536 = vmatprep.subr.mxu0 0.0
        %2537 = vmatpush1.msra.mxu0 %v2509
        %2538 = vmatprep.subr.mxu0 0.0
        %2539 = vmatpush1.msra.mxu0 0.0
        %2540 = vmatprep.subr.mxu0 0.0
        %2541 = vmatpush1.msra.mxu0 0.0
        %2542 = vmatprep.subr.mxu0 0.0
        %2543 = vmatpush1.msra.mxu0 0.0
        %2544 = vmatprep.subr.mxu0 0.0
        %2545 = vmatpush1.msra.mxu0 0.0
        %2546 = vmatprep.subr.mxu0 0.0
        %2547 = vmatpush1.msra.mxu0 0.0
        %2548 = vmatprep.subr.mxu0 0.0
        %2549 = vmatpush1.msra.mxu0 0.0
        %2550 = vmatprep.subr.mxu0 0.0
        %2551 = vmatpush1.msra.mxu0 0.0
        %2552 = vmatprep.subr.mxu0 0.0
        %2553 = vmatpush1.msra.mxu0 0.0
        %2554 = vmatprep.subr.mxu0 0.0
        %2555 = vmatpush1.msra.mxu0 0.0
        %2556 = vmatprep.subr.mxu0 0.0
        %2557 = vmatpush1.msra.mxu0 0.0
        %2558 = vmatprep.subr.mxu0 0.0
        %2559 = vmatpush1.msra.mxu0 0.0
        %2560 = vmatprep.subr.mxu0 0.0
        %2561 = vmatpush1.msra.mxu0 0.0
        %2562 = vmatprep.subr.mxu0 0.0
        %2563 = vmatpush1.msra.mxu0 0.0
        %2564 = vmatprep.subr.mxu0 0.0
        %2565 = vmatpush1.msra.mxu0 0.0
        %2566 = vmatprep.subr.mxu0 0.0
        %2567 = vmatpush1.msra.mxu0 0.0
        %2568 = vmatprep.subr.mxu0 0.0
        %2569 = vmatpush1.msra.mxu0 0.0
        %2570 = vmatprep.subr.mxu0 0.0
        %2571 = vmatpush1.msra.mxu0 0.0
        %2572 = vmatprep.subr.mxu0 0.0
        %2573 = vmatpush1.msra.mxu0 0.0
        %2574 = vmatprep.subr.mxu0 0.0
        %2575 = vmatpush1.msra.mxu0 0.0
        %2576 = vmatprep.subr.mxu0 0.0
        %2577 = vmatpush1.msra.mxu0 0.0
        %2578 = vmatprep.subr.mxu0 0.0
        %2579 = vmatpush1.msra.mxu0 0.0
        %2580 = vmatprep.subr.mxu0 0.0
        %2581 = vmatpush1.msra.mxu0 0.0
        %2582 = vmatprep.subr.mxu0 0.0
        %2583 = vmatpush1.msra.mxu0 0.0
        %2584 = vmatprep.subr.mxu0 0.0
        %2585 = vmatpush1.msra.mxu0 0.0
        %2586 = vmatprep.subr.mxu0 0.0
        %2587 = vmatpush1.msra.mxu0 0.0
        %2588 = vmatprep.subr.mxu0 0.0
        %2589 = vmatpush1.msra.mxu0 0.0
        %2590 = vmatprep.subr.mxu0 0.0
        %2591 = vmatpush1.msra.mxu0 0.0
        %2592 = vmatprep.subr.mxu0 0.0
        %2593 = vmatpush1.msra.mxu0 0.0
        %2594 = vmatprep.subr.mxu0 0.0
        %2595 = vmatpush1.msra.mxu0 0.0
        %2596 = vmatprep.subr.mxu0 0.0
        %2597 = vmatpush1.msra.mxu0 0.0
        %2598 = vmatprep.mubr.f32.mxu0 0.0
        %2599 = vmatmul.mubr.f32.gmra.mrb[0].mxu0 %v2511
        %v2600 = vpop.f32.mrb[0].mxu0
        %v2601 = vadd.f32 0.0, %v2600
        %v2602 = vpop.f32.mrb[0].mxu0
        %2603 = vmatprep.mubr.f32.mxu0 0.0
        %2604 = vmatmul.mubr.f32.gmra.mrb[0].mxu0 %v2514
        %v2605 = vpop.f32.mrb[0].mxu0
        %v2606 = vadd.f32 0.0, %v2605
        %v2607 = vpop.f32.mrb[0].mxu0
        %2608 = vmatprep.mubr.f32.mxu0 0.0
        %2609 = vmatmul.mubr.f32.gmra.mrb[0].mxu0 %v2517
        %v2610 = vpop.f32.mrb[0].mxu0
        %v2611 = vadd.f32 0.0, %v2610
        %v2612 = vpop.f32.mrb[0].mxu0
        %2613 = vmatprep.mubr.f32.mxu0 0.0
        %2614 = vmatmul.mubr.f32.gmra.mrb[0].mxu0 %v2520
        %v2615 = vpop.f32.mrb[0].mxu0
        %v2616 = vadd.f32 0.0, %v2615
        %v2617 = vpop.f32.mrb[0].mxu0
        %2618 = vmatprep.mubr.f32.mxu0 0.0
        %2619 = vmatmul.mubr.f32.gmra.mrb[0].mxu0 %v2523
        %v2620 = vpop.f32.mrb[0].mxu0
        %v2621 = vadd.f32 0.0, %v2620
        %v2622 = vpop.f32.mrb[0].mxu0
        %2623 = vmatprep.mubr.f32.mxu0 0.0
        %2624 = vmatmul.mubr.f32.gmra.mrb[0].mxu0 %v2526
        %v2625 = vpop.f32.mrb[0].mxu0
        %v2626 = vadd.f32 0.0, %v2625
        %v2627 = vpop.f32.mrb[0].mxu0
        %2628 = vmatprep.mubr.f32.mxu0 0.0
        %2629 = vmatmul.mubr.f32.gmra.mrb[0].mxu0 %v2529
        %v2630 = vpop.f32.mrb[0].mxu0
        %v2631 = vadd.f32 0.0, %v2630
        %v2632 = vpop.f32.mrb[0].mxu0
        %2633 = vmatprep.mubr.f32.mxu0 0.0
        %2634 = vmatmul.mubr.f32.gmra.mrb[0].mxu0 %v2532
        %v2635 = vpop.f32.mrb[0].mxu0
        %v2636 = vadd.f32 0.0, %v2635
        %v2637 = vpop.f32.mrb[0].mxu0
        %2638 = vdwg.mxu0
        %v2639 = vadd.f32 %v2461, %v2601
        %v2640 = vadd.f32 %v2466, %v2606
        %v2641 = vadd.f32 %v2471, %v2611
        %v2642 = vadd.f32 %v2476, %v2616
        %v2643 = vadd.f32 %v2481, %v2621
        %v2644 = vadd.f32 %v2486, %v2626
        %v2645 = vadd.f32 %v2491, %v2631
        %v2646 = vadd.f32 %v2496, %v2636
        %v2647 = vld [vmem:[%s408 + $0x8] sm:$0xff]
        %v2648 = vld [vmem:[%s408 + $0x18] sm:$0xff]
        %v2649 = vld [vmem:[%s408 + $0x28] sm:$0xff]
        %v2650 = vld [vmem:[%s408 + $0x38] sm:$0xff]
        %v2651 = vld [vmem:[%s408 + $0x48] sm:$0xff]
        %v2652 = vld [vmem:[%s408 + $0x58] sm:$0xff]
        %v2653 = vld [vmem:[%s408 + $0x68] sm:$0xff]
        %v2654 = vld [vmem:[%s408 + $0x78] sm:$0xff]
        %s2655 = scalar_lea.vmem [#allocation6], 112
        %v2656 = vld [vmem:[%s2655] sm:$0xff]
        %v2657 = vld [vmem:[%s2655 + $0x8] sm:$0xff]
        %v2659 = vsel %vm341, %v2647, 0
        %v2662 = vsel %vm341, %v2648, 0
        %v2665 = vsel %vm341, %v2649, 0
        %v2668 = vsel %vm341, %v2650, 0
        %v2671 = vsel %vm341, %v2651, 0
        %v2674 = vsel %vm341, %v2652, 0
        %v2677 = vsel %vm341, %v2653, 0
        %v2680 = vsel %vm341, %v2654, 0
        %2682 = vmatprep.subr.mxu0 0.0
        %2683 = vmatpush1.msra.mxu0 %v2656
        %2684 = vmatprep.subr.mxu0 0.0
        %2685 = vmatpush1.msra.mxu0 %v2657
        %2686 = vmatprep.subr.mxu0 0.0
        %2687 = vmatpush1.msra.mxu0 0.0
        %2688 = vmatprep.subr.mxu0 0.0
        %2689 = vmatpush1.msra.mxu0 0.0
        %2690 = vmatprep.subr.mxu0 0.0
        %2691 = vmatpush1.msra.mxu0 0.0
        %2692 = vmatprep.subr.mxu0 0.0
        %2693 = vmatpush1.msra.mxu0 0.0
        %2694 = vmatprep.subr.mxu0 0.0
        %2695 = vmatpush1.msra.mxu0 0.0
        %2696 = vmatprep.subr.mxu0 0.0
        %2697 = vmatpush1.msra.mxu0 0.0
        %2698 = vmatprep.subr.mxu0 0.0
        %2699 = vmatpush1.msra.mxu0 0.0
        %2700 = vmatprep.subr.mxu0 0.0
        %2701 = vmatpush1.msra.mxu0 0.0
        %2702 = vmatprep.subr.mxu0 0.0
        %2703 = vmatpush1.msra.mxu0 0.0
        %2704 = vmatprep.subr.mxu0 0.0
        %2705 = vmatpush1.msra.mxu0 0.0
        %2706 = vmatprep.subr.mxu0 0.0
        %2707 = vmatpush1.msra.mxu0 0.0
        %2708 = vmatprep.subr.mxu0 0.0
        %2709 = vmatpush1.msra.mxu0 0.0
        %2710 = vmatprep.subr.mxu0 0.0
        %2711 = vmatpush1.msra.mxu0 0.0
        %2712 = vmatprep.subr.mxu0 0.0
        %2713 = vmatpush1.msra.mxu0 0.0
        %2714 = vmatprep.subr.mxu0 0.0
        %2715 = vmatpush1.msra.mxu0 0.0
        %2716 = vmatprep.subr.mxu0 0.0
        %2717 = vmatpush1.msra.mxu0 0.0
        %2718 = vmatprep.subr.mxu0 0.0
        %2719 = vmatpush1.msra.mxu0 0.0
        %2720 = vmatprep.subr.mxu0 0.0
        %2721 = vmatpush1.msra.mxu0 0.0
        %2722 = vmatprep.subr.mxu0 0.0
        %2723 = vmatpush1.msra.mxu0 0.0
        %2724 = vmatprep.subr.mxu0 0.0
        %2725 = vmatpush1.msra.mxu0 0.0
        %2726 = vmatprep.subr.mxu0 0.0
        %2727 = vmatpush1.msra.mxu0 0.0
        %2728 = vmatprep.subr.mxu0 0.0
        %2729 = vmatpush1.msra.mxu0 0.0
        %2730 = vmatprep.subr.mxu0 0.0
        %2731 = vmatpush1.msra.mxu0 0.0
        %2732 = vmatprep.subr.mxu0 0.0
        %2733 = vmatpush1.msra.mxu0 0.0
        %2734 = vmatprep.subr.mxu0 0.0
        %2735 = vmatpush1.msra.mxu0 0.0
        %2736 = vmatprep.subr.mxu0 0.0
        %2737 = vmatpush1.msra.mxu0 0.0
        %2738 = vmatprep.subr.mxu0 0.0
        %2739 = vmatpush1.msra.mxu0 0.0
        %2740 = vmatprep.subr.mxu0 0.0
        %2741 = vmatpush1.msra.mxu0 0.0
        %2742 = vmatprep.subr.mxu0 0.0
        %2743 = vmatpush1.msra.mxu0 0.0
        %2744 = vmatprep.subr.mxu0 0.0
        %2745 = vmatpush1.msra.mxu0 0.0
        %2746 = vmatprep.mubr.f32.mxu0 0.0
        %2747 = vmatmul.mubr.f32.gmra.mrb[0].mxu0 %v2659
        %v2748 = vpop.f32.mrb[0].mxu0
        %v2749 = vadd.f32 0.0, %v2748
        %v2750 = vpop.f32.mrb[0].mxu0
        %2751 = vmatprep.mubr.f32.mxu0 0.0
        %2752 = vmatmul.mubr.f32.gmra.mrb[0].mxu0 %v2662
        %v2753 = vpop.f32.mrb[0].mxu0
        %v2754 = vadd.f32 0.0, %v2753
        %v2755 = vpop.f32.mrb[0].mxu0
        %2756 = vmatprep.mubr.f32.mxu0 0.0
        %2757 = vmatmul.mubr.f32.gmra.mrb[0].mxu0 %v2665
        %v2758 = vpop.f32.mrb[0].mxu0
        %v2759 = vadd.f32 0.0, %v2758
        %v2760 = vpop.f32.mrb[0].mxu0
        %2761 = vmatprep.mubr.f32.mxu0 0.0
        %2762 = vmatmul.mubr.f32.gmra.mrb[0].mxu0 %v2668
        %v2763 = vpop.f32.mrb[0].mxu0
        %v2764 = vadd.f32 0.0, %v2763
        %v2765 = vpop.f32.mrb[0].mxu0
        %2766 = vmatprep.mubr.f32.mxu0 0.0
        %2767 = vmatmul.mubr.f32.gmra.mrb[0].mxu0 %v2671
        %v2768 = vpop.f32.mrb[0].mxu0
        %v2769 = vadd.f32 0.0, %v2768
        %v2770 = vpop.f32.mrb[0].mxu0
        %2771 = vmatprep.mubr.f32.mxu0 0.0
        %2772 = vmatmul.mubr.f32.gmra.mrb[0].mxu0 %v2674
        %v2773 = vpop.f32.mrb[0].mxu0
        %v2774 = vadd.f32 0.0, %v2773
        %v2775 = vpop.f32.mrb[0].mxu0
        %2776 = vmatprep.mubr.f32.mxu0 0.0
        %2777 = vmatmul.mubr.f32.gmra.mrb[0].mxu0 %v2677
        %v2778 = vpop.f32.mrb[0].mxu0
        %v2779 = vadd.f32 0.0, %v2778
        %v2780 = vpop.f32.mrb[0].mxu0
        %2781 = vmatprep.mubr.f32.mxu0 0.0
        %2782 = vmatmul.mubr.f32.gmra.mrb[0].mxu0 %v2680
        %v2783 = vpop.f32.mrb[0].mxu0
        %v2784 = vadd.f32 0.0, %v2783
        %v2785 = vpop.f32.mrb[0].mxu0
        %2786 = vdwg.mxu0
        %v2787 = vadd.f32 %v2639, %v2749
        %v2788 = vadd.f32 %v2640, %v2754
        %v2789 = vadd.f32 %v2641, %v2759
        %v2790 = vadd.f32 %v2642, %v2764
        %v2791 = vadd.f32 %v2643, %v2769
        %v2792 = vadd.f32 %v2644, %v2774
        %v2793 = vadd.f32 %v2645, %v2779
        %v2794 = vadd.f32 %v2646, %v2784
        %s2795 = scalar_lea.vmem %s2, 1
        %v2796 = vld [vmem:[%s2795] sm:$0x1]
        %v2798 = vlaneseq
        %v2799 = vshrl.u32 %v2798, 7
        %v2800 = vsub.s32 0, %v2799
        %v2801 = vrot.slane %v2796, %v2800
        %v2803 = vadd.f32 %v2787, %v2801
        %v2804 = vadd.f32 %v2788, %v2801
        %v2805 = vadd.f32 %v2789, %v2801
        %v2806 = vadd.f32 %v2790, %v2801
        %v2807 = vadd.f32 %v2791, %v2801
        %v2808 = vadd.f32 %v2792, %v2801
        %v2809 = vadd.f32 %v2793, %v2801
        %v2810 = vadd.f32 %v2794, %v2801
        %vm2811 = vcmp.gt.f32.partialorder %v2803, 0.0
        %vm2812 = vcmp.gt.f32.partialorder %v2804, 0.0
        %vm2813 = vcmp.gt.f32.partialorder %v2805, 0.0
        %vm2814 = vcmp.gt.f32.partialorder %v2806, 0.0
        %vm2815 = vcmp.gt.f32.partialorder %v2807, 0.0
        %vm2816 = vcmp.gt.f32.partialorder %v2808, 0.0
        %vm2817 = vcmp.gt.f32.partialorder %v2809, 0.0
        %vm2818 = vcmp.gt.f32.partialorder %v2810, 0.0
        %v2819 = vmul.f32 %v2803, 1.442695
        %v2820 = vpow.pop %v2819
        %v2821 = vmul.f32 %v2804, 1.442695
        %v2822 = vpow.pop %v2821
        %v2823 = vmul.f32 %v2805, 1.442695
        %v2824 = vpow.pop %v2823
        %v2825 = vmul.f32 %v2806, 1.442695
        %v2826 = vpow.pop %v2825
        %v2827 = vmul.f32 %v2807, 1.442695
        %v2828 = vpow.pop %v2827
        %v2829 = vmul.f32 %v2808, 1.442695
        %v2830 = vpow.pop %v2829
        %v2831 = vmul.f32 %v2809, 1.442695
        %v2832 = vpow.pop %v2831
        %v2833 = vmul.f32 %v2810, 1.442695
        %v2834 = vpow.pop %v2833
        %v2835 = vsub.f32 %v2820, 1.0
        %v2836 = vsub.f32 %v2822, 1.0
        %v2837 = vsub.f32 %v2824, 1.0
        %v2838 = vsub.f32 %v2826, 1.0
        %v2839 = vsub.f32 %v2828, 1.0
        %v2840 = vsub.f32 %v2830, 1.0
        %v2841 = vsub.f32 %v2832, 1.0
        %v2842 = vsub.f32 %v2834, 1.0
        %v2843 = vsel %vm2811, %v2803, %v2835
        %v2844 = vsel %vm2812, %v2804, %v2836
        %v2845 = vsel %vm2813, %v2805, %v2837
        %v2846 = vsel %vm2814, %v2806, %v2838
        %v2847 = vsel %vm2815, %v2807, %v2839
        %v2848 = vsel %vm2816, %v2808, %v2840
        %v2849 = vsel %vm2817, %v2809, %v2841
        %v2850 = vsel %vm2818, %v2810, %v2842
        %2851 = vst.msk [vmem:[%s408 + $0x8] sm:$0xff] %vm341, %v2843
        %2852 = vst.msk [vmem:[%s408 + $0x18] sm:$0xff] %vm341, %v2844
        %2853 = vst.msk [vmem:[%s408 + $0x28] sm:$0xff] %vm341, %v2845
        %2854 = vst.msk [vmem:[%s408 + $0x38] sm:$0xff] %vm341, %v2846
        %2855 = vst.msk [vmem:[%s408 + $0x48] sm:$0xff] %vm341, %v2847
        %2856 = vst.msk [vmem:[%s408 + $0x58] sm:$0xff] %vm341, %v2848
        %2857 = vst.msk [vmem:[%s408 + $0x68] sm:$0xff] %vm341, %v2849
        %2858 = vst.msk [vmem:[%s408 + $0x78] sm:$0xff] %vm341, %v2850
        %v2859 = vld [vmem:[#allocation2 + $0x7] sm:$0xff]
        %v2860 = vld [vmem:[#allocation2 + $0x17] sm:$0xff]
        %v2861 = vld [vmem:[#allocation2 + $0x27] sm:$0xff]
        %v2862 = vld [vmem:[#allocation2 + $0x37] sm:$0xff]
        %v2863 = vld [vmem:[#allocation2 + $0x47] sm:$0xff]
        %v2864 = vld [vmem:[#allocation2 + $0x57] sm:$0xff]
        %v2865 = vld [vmem:[#allocation2 + $0x67] sm:$0xff]
        %v2866 = vld [vmem:[#allocation2 + $0x77] sm:$0xff]
        %s2867 = scalar_lea.vmem [#allocation8], 64
        %v2868 = vld [vmem:[%s2867] sm:$0xff]
        %v2869 = vld [vmem:[%s2867 + $0x8] sm:$0xff]
        %v2870 = vld [vmem:[#allocation2 + $0x8] sm:$0xff]
        %v2871 = vld [vmem:[#allocation2 + $0x18] sm:$0xff]
        %v2872 = vld [vmem:[#allocation2 + $0x28] sm:$0xff]
        %v2873 = vld [vmem:[#allocation2 + $0x38] sm:$0xff]
        %v2874 = vld [vmem:[#allocation2 + $0x48] sm:$0xff]
        %v2875 = vld [vmem:[#allocation2 + $0x58] sm:$0xff]
        %v2876 = vld [vmem:[#allocation2 + $0x68] sm:$0xff]
        %v2877 = vld [vmem:[#allocation2 + $0x78] sm:$0xff]
        %s2878 = scalar_lea.vmem [#allocation8], 80
        %v2879 = vld [vmem:[%s2878] sm:$0xff]
        %v2880 = vld [vmem:[%s2878 + $0x8] sm:$0xff]
        %v2882 = vsel %vm341, %v2870, 0
        %v2885 = vsel %vm341, %v2871, 0
        %v2888 = vsel %vm341, %v2872, 0
        %v2891 = vsel %vm341, %v2873, 0
        %v2894 = vsel %vm341, %v2874, 0
        %v2897 = vsel %vm341, %v2875, 0
        %v2900 = vsel %vm341, %v2876, 0
        %v2903 = vsel %vm341, %v2877, 0
        %2905 = vmatprep.subr.mxu0 0.0
        %2906 = vmatpush1.msra.mxu0 %v2879
        %2907 = vmatprep.subr.mxu0 0.0
        %2908 = vmatpush1.msra.mxu0 %v2880
        %2909 = vmatprep.subr.mxu0 0.0
        %2910 = vmatpush1.msra.mxu0 0.0
        %2911 = vmatprep.subr.mxu0 0.0
        %2912 = vmatpush1.msra.mxu0 0.0
        %2913 = vmatprep.subr.mxu0 0.0
        %2914 = vmatpush1.msra.mxu0 0.0
        %2915 = vmatprep.subr.mxu0 0.0
        %2916 = vmatpush1.msra.mxu0 0.0
        %2917 = vmatprep.subr.mxu0 0.0
        %2918 = vmatpush1.msra.mxu0 0.0
        %2919 = vmatprep.subr.mxu0 0.0
        %2920 = vmatpush1.msra.mxu0 0.0
        %2921 = vmatprep.subr.mxu0 0.0
        %2922 = vmatpush1.msra.mxu0 0.0
        %2923 = vmatprep.subr.mxu0 0.0
        %2924 = vmatpush1.msra.mxu0 0.0
        %2925 = vmatprep.subr.mxu0 0.0
        %2926 = vmatpush1.msra.mxu0 0.0
        %2927 = vmatprep.subr.mxu0 0.0
        %2928 = vmatpush1.msra.mxu0 0.0
        %2929 = vmatprep.subr.mxu0 0.0
        %2930 = vmatpush1.msra.mxu0 0.0
        %2931 = vmatprep.subr.mxu0 0.0
        %2932 = vmatpush1.msra.mxu0 0.0
        %2933 = vmatprep.subr.mxu0 0.0
        %2934 = vmatpush1.msra.mxu0 0.0
        %2935 = vmatprep.subr.mxu0 0.0
        %2936 = vmatpush1.msra.mxu0 0.0
        %2937 = vmatprep.subr.mxu0 0.0
        %2938 = vmatpush1.msra.mxu0 0.0
        %2939 = vmatprep.subr.mxu0 0.0
        %2940 = vmatpush1.msra.mxu0 0.0
        %2941 = vmatprep.subr.mxu0 0.0
        %2942 = vmatpush1.msra.mxu0 0.0
        %2943 = vmatprep.subr.mxu0 0.0
        %2944 = vmatpush1.msra.mxu0 0.0
        %2945 = vmatprep.subr.mxu0 0.0
        %2946 = vmatpush1.msra.mxu0 0.0
        %2947 = vmatprep.subr.mxu0 0.0
        %2948 = vmatpush1.msra.mxu0 0.0
        %2949 = vmatprep.subr.mxu0 0.0
        %2950 = vmatpush1.msra.mxu0 0.0
        %2951 = vmatprep.subr.mxu0 0.0
        %2952 = vmatpush1.msra.mxu0 0.0
        %2953 = vmatprep.subr.mxu0 0.0
        %2954 = vmatpush1.msra.mxu0 0.0
        %2955 = vmatprep.subr.mxu0 0.0
        %2956 = vmatpush1.msra.mxu0 0.0
        %2957 = vmatprep.subr.mxu0 0.0
        %2958 = vmatpush1.msra.mxu0 0.0
        %2959 = vmatprep.subr.mxu0 0.0
        %2960 = vmatpush1.msra.mxu0 0.0
        %2961 = vmatprep.subr.mxu0 0.0
        %2962 = vmatpush1.msra.mxu0 0.0
        %2963 = vmatprep.subr.mxu0 0.0
        %2964 = vmatpush1.msra.mxu0 0.0
        %2965 = vmatprep.subr.mxu0 0.0
        %2966 = vmatpush1.msra.mxu0 0.0
        %2967 = vmatprep.subr.mxu0 0.0
        %2968 = vmatpush1.msra.mxu0 0.0
        %2969 = vmatprep.mubr.f32.mxu0 0.0
        %2970 = vmatmul.mubr.f32.gmra.mrb[0].mxu0 %v2882
        %v2971 = vpop.f32.mrb[0].mxu0
        %v2972 = vadd.f32 0.0, %v2971
        %v2973 = vpop.f32.mrb[0].mxu0
        %2974 = vmatprep.mubr.f32.mxu0 0.0
        %2975 = vmatmul.mubr.f32.gmra.mrb[0].mxu0 %v2885
        %v2976 = vpop.f32.mrb[0].mxu0
        %v2977 = vadd.f32 0.0, %v2976
        %v2978 = vpop.f32.mrb[0].mxu0
        %2979 = vmatprep.mubr.f32.mxu0 0.0
        %2980 = vmatmul.mubr.f32.gmra.mrb[0].mxu0 %v2888
        %v2981 = vpop.f32.mrb[0].mxu0
        %v2982 = vadd.f32 0.0, %v2981
        %v2983 = vpop.f32.mrb[0].mxu0
        %2984 = vmatprep.mubr.f32.mxu0 0.0
        %2985 = vmatmul.mubr.f32.gmra.mrb[0].mxu0 %v2891
        %v2986 = vpop.f32.mrb[0].mxu0
        %v2987 = vadd.f32 0.0, %v2986
        %v2988 = vpop.f32.mrb[0].mxu0
        %2989 = vmatprep.mubr.f32.mxu0 0.0
        %2990 = vmatmul.mubr.f32.gmra.mrb[0].mxu0 %v2894
        %v2991 = vpop.f32.mrb[0].mxu0
        %v2992 = vadd.f32 0.0, %v2991
        %v2993 = vpop.f32.mrb[0].mxu0
        %2994 = vmatprep.mubr.f32.mxu0 0.0
        %2995 = vmatmul.mubr.f32.gmra.mrb[0].mxu0 %v2897
        %v2996 = vpop.f32.mrb[0].mxu0
        %v2997 = vadd.f32 0.0, %v2996
        %v2998 = vpop.f32.mrb[0].mxu0
        %2999 = vmatprep.mubr.f32.mxu0 0.0
        %3000 = vmatmul.mubr.f32.gmra.mrb[0].mxu0 %v2900
        %v3001 = vpop.f32.mrb[0].mxu0
        %v3002 = vadd.f32 0.0, %v3001
        %v3003 = vpop.f32.mrb[0].mxu0
        %3004 = vmatprep.mubr.f32.mxu0 0.0
        %3005 = vmatmul.mubr.f32.gmra.mrb[0].mxu0 %v2903
        %v3006 = vpop.f32.mrb[0].mxu0
        %v3007 = vadd.f32 0.0, %v3006
        %v3008 = vpop.f32.mrb[0].mxu0
        %3009 = vdwg.mxu0
        %v3011 = vsel %vm341, %v2859, 0
        %v3014 = vsel %vm341, %v2860, 0
        %v3017 = vsel %vm341, %v2861, 0
        %v3020 = vsel %vm341, %v2862, 0
        %v3023 = vsel %vm341, %v2863, 0
        %v3026 = vsel %vm341, %v2864, 0
        %v3029 = vsel %vm341, %v2865, 0
        %v3032 = vsel %vm341, %v2866, 0
        %3034 = vmatprep.subr.mxu0 0.0
        %3035 = vmatpush1.msra.mxu0 %v2868
        %3036 = vmatprep.subr.mxu0 0.0
        %3037 = vmatpush1.msra.mxu0 %v2869
        %3038 = vmatprep.subr.mxu0 0.0
        %3039 = vmatpush1.msra.mxu0 0.0
        %3040 = vmatprep.subr.mxu0 0.0
        %3041 = vmatpush1.msra.mxu0 0.0
        %3042 = vmatprep.subr.mxu0 0.0
        %3043 = vmatpush1.msra.mxu0 0.0
        %3044 = vmatprep.subr.mxu0 0.0
        %3045 = vmatpush1.msra.mxu0 0.0
        %3046 = vmatprep.subr.mxu0 0.0
        %3047 = vmatpush1.msra.mxu0 0.0
        %3048 = vmatprep.subr.mxu0 0.0
        %3049 = vmatpush1.msra.mxu0 0.0
        %3050 = vmatprep.subr.mxu0 0.0
        %3051 = vmatpush1.msra.mxu0 0.0
        %3052 = vmatprep.subr.mxu0 0.0
        %3053 = vmatpush1.msra.mxu0 0.0
        %3054 = vmatprep.subr.mxu0 0.0
        %3055 = vmatpush1.msra.mxu0 0.0
        %3056 = vmatprep.subr.mxu0 0.0
        %3057 = vmatpush1.msra.mxu0 0.0
        %3058 = vmatprep.subr.mxu0 0.0
        %3059 = vmatpush1.msra.mxu0 0.0
        %3060 = vmatprep.subr.mxu0 0.0
        %3061 = vmatpush1.msra.mxu0 0.0
        %3062 = vmatprep.subr.mxu0 0.0
        %3063 = vmatpush1.msra.mxu0 0.0
        %3064 = vmatprep.subr.mxu0 0.0
        %3065 = vmatpush1.msra.mxu0 0.0
        %3066 = vmatprep.subr.mxu0 0.0
        %3067 = vmatpush1.msra.mxu0 0.0
        %3068 = vmatprep.subr.mxu0 0.0
        %3069 = vmatpush1.msra.mxu0 0.0
        %3070 = vmatprep.subr.mxu0 0.0
        %3071 = vmatpush1.msra.mxu0 0.0
        %3072 = vmatprep.subr.mxu0 0.0
        %3073 = vmatpush1.msra.mxu0 0.0
        %3074 = vmatprep.subr.mxu0 0.0
        %3075 = vmatpush1.msra.mxu0 0.0
        %3076 = vmatprep.subr.mxu0 0.0
        %3077 = vmatpush1.msra.mxu0 0.0
        %3078 = vmatprep.subr.mxu0 0.0
        %3079 = vmatpush1.msra.mxu0 0.0
        %3080 = vmatprep.subr.mxu0 0.0
        %3081 = vmatpush1.msra.mxu0 0.0
        %3082 = vmatprep.subr.mxu0 0.0
        %3083 = vmatpush1.msra.mxu0 0.0
        %3084 = vmatprep.subr.mxu0 0.0
        %3085 = vmatpush1.msra.mxu0 0.0
        %3086 = vmatprep.subr.mxu0 0.0
        %3087 = vmatpush1.msra.mxu0 0.0
        %3088 = vmatprep.subr.mxu0 0.0
        %3089 = vmatpush1.msra.mxu0 0.0
        %3090 = vmatprep.subr.mxu0 0.0
        %3091 = vmatpush1.msra.mxu0 0.0
        %3092 = vmatprep.subr.mxu0 0.0
        %3093 = vmatpush1.msra.mxu0 0.0
        %3094 = vmatprep.subr.mxu0 0.0
        %3095 = vmatpush1.msra.mxu0 0.0
        %3096 = vmatprep.subr.mxu0 0.0
        %3097 = vmatpush1.msra.mxu0 0.0
        %3098 = vmatprep.mubr.f32.mxu0 0.0
        %3099 = vmatmul.mubr.f32.gmra.mrb[0].mxu0 %v3011
        %v3100 = vpop.f32.mrb[0].mxu0
        %v3101 = vadd.f32 %v2972, %v3100
        %v3102 = vpop.f32.mrb[0].mxu0
        %3103 = vmatprep.mubr.f32.mxu0 0.0
        %3104 = vmatmul.mubr.f32.gmra.mrb[0].mxu0 %v3014
        %v3105 = vpop.f32.mrb[0].mxu0
        %v3106 = vadd.f32 %v2977, %v3105
        %v3107 = vpop.f32.mrb[0].mxu0
        %3108 = vmatprep.mubr.f32.mxu0 0.0
        %3109 = vmatmul.mubr.f32.gmra.mrb[0].mxu0 %v3017
        %v3110 = vpop.f32.mrb[0].mxu0
        %v3111 = vadd.f32 %v2982, %v3110
        %v3112 = vpop.f32.mrb[0].mxu0
        %3113 = vmatprep.mubr.f32.mxu0 0.0
        %3114 = vmatmul.mubr.f32.gmra.mrb[0].mxu0 %v3020
        %v3115 = vpop.f32.mrb[0].mxu0
        %v3116 = vadd.f32 %v2987, %v3115
        %v3117 = vpop.f32.mrb[0].mxu0
        %3118 = vmatprep.mubr.f32.mxu0 0.0
        %3119 = vmatmul.mubr.f32.gmra.mrb[0].mxu0 %v3023
        %v3120 = vpop.f32.mrb[0].mxu0
        %v3121 = vadd.f32 %v2992, %v3120
        %v3122 = vpop.f32.mrb[0].mxu0
        %3123 = vmatprep.mubr.f32.mxu0 0.0
        %3124 = vmatmul.mubr.f32.gmra.mrb[0].mxu0 %v3026
        %v3125 = vpop.f32.mrb[0].mxu0
        %v3126 = vadd.f32 %v2997, %v3125
        %v3127 = vpop.f32.mrb[0].mxu0
        %3128 = vmatprep.mubr.f32.mxu0 0.0
        %3129 = vmatmul.mubr.f32.gmra.mrb[0].mxu0 %v3029
        %v3130 = vpop.f32.mrb[0].mxu0
        %v3131 = vadd.f32 %v3002, %v3130
        %v3132 = vpop.f32.mrb[0].mxu0
        %3133 = vmatprep.mubr.f32.mxu0 0.0
        %3134 = vmatmul.mubr.f32.gmra.mrb[0].mxu0 %v3032
        %v3135 = vpop.f32.mrb[0].mxu0
        %v3136 = vadd.f32 %v3007, %v3135
        %v3137 = vpop.f32.mrb[0].mxu0
        %3138 = vdwg.mxu0
        %v3139 = vld [vmem:[%s408 + $0x7] sm:$0xff]
        %v3140 = vld [vmem:[%s408 + $0x17] sm:$0xff]
        %v3141 = vld [vmem:[%s408 + $0x27] sm:$0xff]
        %v3142 = vld [vmem:[%s408 + $0x37] sm:$0xff]
        %v3143 = vld [vmem:[%s408 + $0x47] sm:$0xff]
        %v3144 = vld [vmem:[%s408 + $0x57] sm:$0xff]
        %v3145 = vld [vmem:[%s408 + $0x67] sm:$0xff]
        %v3146 = vld [vmem:[%s408 + $0x77] sm:$0xff]
        %s3147 = scalar_lea.vmem [#allocation8], 96
        %v3148 = vld [vmem:[%s3147] sm:$0xff]
        %v3149 = vld [vmem:[%s3147 + $0x8] sm:$0xff]
        %v3151 = vsel %vm341, %v3139, 0
        %v3154 = vsel %vm341, %v3140, 0
        %v3157 = vsel %vm341, %v3141, 0
        %v3160 = vsel %vm341, %v3142, 0
        %v3163 = vsel %vm341, %v3143, 0
        %v3166 = vsel %vm341, %v3144, 0
        %v3169 = vsel %vm341, %v3145, 0
        %v3172 = vsel %vm341, %v3146, 0
        %3174 = vmatprep.subr.mxu0 0.0
        %3175 = vmatpush1.msra.mxu0 %v3148
        %3176 = vmatprep.subr.mxu0 0.0
        %3177 = vmatpush1.msra.mxu0 %v3149
        %3178 = vmatprep.subr.mxu0 0.0
        %3179 = vmatpush1.msra.mxu0 0.0
        %3180 = vmatprep.subr.mxu0 0.0
        %3181 = vmatpush1.msra.mxu0 0.0
        %3182 = vmatprep.subr.mxu0 0.0
        %3183 = vmatpush1.msra.mxu0 0.0
        %3184 = vmatprep.subr.mxu0 0.0
        %3185 = vmatpush1.msra.mxu0 0.0
        %3186 = vmatprep.subr.mxu0 0.0
        %3187 = vmatpush1.msra.mxu0 0.0
        %3188 = vmatprep.subr.mxu0 0.0
        %3189 = vmatpush1.msra.mxu0 0.0
        %3190 = vmatprep.subr.mxu0 0.0
        %3191 = vmatpush1.msra.mxu0 0.0
        %3192 = vmatprep.subr.mxu0 0.0
        %3193 = vmatpush1.msra.mxu0 0.0
        %3194 = vmatprep.subr.mxu0 0.0
        %3195 = vmatpush1.msra.mxu0 0.0
        %3196 = vmatprep.subr.mxu0 0.0
        %3197 = vmatpush1.msra.mxu0 0.0
        %3198 = vmatprep.subr.mxu0 0.0
        %3199 = vmatpush1.msra.mxu0 0.0
        %3200 = vmatprep.subr.mxu0 0.0
        %3201 = vmatpush1.msra.mxu0 0.0
        %3202 = vmatprep.subr.mxu0 0.0
        %3203 = vmatpush1.msra.mxu0 0.0
        %3204 = vmatprep.subr.mxu0 0.0
        %3205 = vmatpush1.msra.mxu0 0.0
        %3206 = vmatprep.subr.mxu0 0.0
        %3207 = vmatpush1.msra.mxu0 0.0
        %3208 = vmatprep.subr.mxu0 0.0
        %3209 = vmatpush1.msra.mxu0 0.0
        %3210 = vmatprep.subr.mxu0 0.0
        %3211 = vmatpush1.msra.mxu0 0.0
        %3212 = vmatprep.subr.mxu0 0.0
        %3213 = vmatpush1.msra.mxu0 0.0
        %3214 = vmatprep.subr.mxu0 0.0
        %3215 = vmatpush1.msra.mxu0 0.0
        %3216 = vmatprep.subr.mxu0 0.0
        %3217 = vmatpush1.msra.mxu0 0.0
        %3218 = vmatprep.subr.mxu0 0.0
        %3219 = vmatpush1.msra.mxu0 0.0
        %3220 = vmatprep.subr.mxu0 0.0
        %3221 = vmatpush1.msra.mxu0 0.0
        %3222 = vmatprep.subr.mxu0 0.0
        %3223 = vmatpush1.msra.mxu0 0.0
        %3224 = vmatprep.subr.mxu0 0.0
        %3225 = vmatpush1.msra.mxu0 0.0
        %3226 = vmatprep.subr.mxu0 0.0
        %3227 = vmatpush1.msra.mxu0 0.0
        %3228 = vmatprep.subr.mxu0 0.0
        %3229 = vmatpush1.msra.mxu0 0.0
        %3230 = vmatprep.subr.mxu0 0.0
        %3231 = vmatpush1.msra.mxu0 0.0
        %3232 = vmatprep.subr.mxu0 0.0
        %3233 = vmatpush1.msra.mxu0 0.0
        %3234 = vmatprep.subr.mxu0 0.0
        %3235 = vmatpush1.msra.mxu0 0.0
        %3236 = vmatprep.subr.mxu0 0.0
        %3237 = vmatpush1.msra.mxu0 0.0
        %3238 = vmatprep.mubr.f32.mxu0 0.0
        %3239 = vmatmul.mubr.f32.gmra.mrb[0].mxu0 %v3151
        %v3240 = vpop.f32.mrb[0].mxu0
        %v3241 = vadd.f32 0.0, %v3240
        %v3242 = vpop.f32.mrb[0].mxu0
        %3243 = vmatprep.mubr.f32.mxu0 0.0
        %3244 = vmatmul.mubr.f32.gmra.mrb[0].mxu0 %v3154
        %v3245 = vpop.f32.mrb[0].mxu0
        %v3246 = vadd.f32 0.0, %v3245
        %v3247 = vpop.f32.mrb[0].mxu0
        %3248 = vmatprep.mubr.f32.mxu0 0.0
        %3249 = vmatmul.mubr.f32.gmra.mrb[0].mxu0 %v3157
        %v3250 = vpop.f32.mrb[0].mxu0
        %v3251 = vadd.f32 0.0, %v3250
        %v3252 = vpop.f32.mrb[0].mxu0
        %3253 = vmatprep.mubr.f32.mxu0 0.0
        %3254 = vmatmul.mubr.f32.gmra.mrb[0].mxu0 %v3160
        %v3255 = vpop.f32.mrb[0].mxu0
        %v3256 = vadd.f32 0.0, %v3255
        %v3257 = vpop.f32.mrb[0].mxu0
        %3258 = vmatprep.mubr.f32.mxu0 0.0
        %3259 = vmatmul.mubr.f32.gmra.mrb[0].mxu0 %v3163
        %v3260 = vpop.f32.mrb[0].mxu0
        %v3261 = vadd.f32 0.0, %v3260
        %v3262 = vpop.f32.mrb[0].mxu0
        %3263 = vmatprep.mubr.f32.mxu0 0.0
        %3264 = vmatmul.mubr.f32.gmra.mrb[0].mxu0 %v3166
        %v3265 = vpop.f32.mrb[0].mxu0
        %v3266 = vadd.f32 0.0, %v3265
        %v3267 = vpop.f32.mrb[0].mxu0
        %3268 = vmatprep.mubr.f32.mxu0 0.0
        %3269 = vmatmul.mubr.f32.gmra.mrb[0].mxu0 %v3169
        %v3270 = vpop.f32.mrb[0].mxu0
        %v3271 = vadd.f32 0.0, %v3270
        %v3272 = vpop.f32.mrb[0].mxu0
        %3273 = vmatprep.mubr.f32.mxu0 0.0
        %3274 = vmatmul.mubr.f32.gmra.mrb[0].mxu0 %v3172
        %v3275 = vpop.f32.mrb[0].mxu0
        %v3276 = vadd.f32 0.0, %v3275
        %v3277 = vpop.f32.mrb[0].mxu0
        %3278 = vdwg.mxu0
        %v3279 = vadd.f32 %v3101, %v3241
        %v3280 = vadd.f32 %v3106, %v3246
        %v3281 = vadd.f32 %v3111, %v3251
        %v3282 = vadd.f32 %v3116, %v3256
        %v3283 = vadd.f32 %v3121, %v3261
        %v3284 = vadd.f32 %v3126, %v3266
        %v3285 = vadd.f32 %v3131, %v3271
        %v3286 = vadd.f32 %v3136, %v3276
        %v3287 = vld [vmem:[%s408 + $0x8] sm:$0xff]
        %v3288 = vld [vmem:[%s408 + $0x18] sm:$0xff]
        %v3289 = vld [vmem:[%s408 + $0x28] sm:$0xff]
        %v3290 = vld [vmem:[%s408 + $0x38] sm:$0xff]
        %v3291 = vld [vmem:[%s408 + $0x48] sm:$0xff]
        %v3292 = vld [vmem:[%s408 + $0x58] sm:$0xff]
        %v3293 = vld [vmem:[%s408 + $0x68] sm:$0xff]
        %v3294 = vld [vmem:[%s408 + $0x78] sm:$0xff]
        %s3295 = scalar_lea.vmem [#allocation8], 112
        %v3296 = vld [vmem:[%s3295] sm:$0xff]
        %v3297 = vld [vmem:[%s3295 + $0x8] sm:$0xff]
        %v3299 = vsel %vm341, %v3287, 0
        %v3302 = vsel %vm341, %v3288, 0
        %v3305 = vsel %vm341, %v3289, 0
        %v3308 = vsel %vm341, %v3290, 0
        %v3311 = vsel %vm341, %v3291, 0
        %v3314 = vsel %vm341, %v3292, 0
        %v3317 = vsel %vm341, %v3293, 0
        %v3320 = vsel %vm341, %v3294, 0
        %3322 = vmatprep.subr.mxu0 0.0
        %3323 = vmatpush1.msra.mxu0 %v3296
        %3324 = vmatprep.subr.mxu0 0.0
        %3325 = vmatpush1.msra.mxu0 %v3297
        %3326 = vmatprep.subr.mxu0 0.0
        %3327 = vmatpush1.msra.mxu0 0.0
        %3328 = vmatprep.subr.mxu0 0.0
        %3329 = vmatpush1.msra.mxu0 0.0
        %3330 = vmatprep.subr.mxu0 0.0
        %3331 = vmatpush1.msra.mxu0 0.0
        %3332 = vmatprep.subr.mxu0 0.0
        %3333 = vmatpush1.msra.mxu0 0.0
        %3334 = vmatprep.subr.mxu0 0.0
        %3335 = vmatpush1.msra.mxu0 0.0
        %3336 = vmatprep.subr.mxu0 0.0
        %3337 = vmatpush1.msra.mxu0 0.0
        %3338 = vmatprep.subr.mxu0 0.0
        %3339 = vmatpush1.msra.mxu0 0.0
        %3340 = vmatprep.subr.mxu0 0.0
        %3341 = vmatpush1.msra.mxu0 0.0
        %3342 = vmatprep.subr.mxu0 0.0
        %3343 = vmatpush1.msra.mxu0 0.0
        %3344 = vmatprep.subr.mxu0 0.0
        %3345 = vmatpush1.msra.mxu0 0.0
        %3346 = vmatprep.subr.mxu0 0.0
        %3347 = vmatpush1.msra.mxu0 0.0
        %3348 = vmatprep.subr.mxu0 0.0
        %3349 = vmatpush1.msra.mxu0 0.0
        %3350 = vmatprep.subr.mxu0 0.0
        %3351 = vmatpush1.msra.mxu0 0.0
        %3352 = vmatprep.subr.mxu0 0.0
        %3353 = vmatpush1.msra.mxu0 0.0
        %3354 = vmatprep.subr.mxu0 0.0
        %3355 = vmatpush1.msra.mxu0 0.0
        %3356 = vmatprep.subr.mxu0 0.0
        %3357 = vmatpush1.msra.mxu0 0.0
        %3358 = vmatprep.subr.mxu0 0.0
        %3359 = vmatpush1.msra.mxu0 0.0
        %3360 = vmatprep.subr.mxu0 0.0
        %3361 = vmatpush1.msra.mxu0 0.0
        %3362 = vmatprep.subr.mxu0 0.0
        %3363 = vmatpush1.msra.mxu0 0.0
        %3364 = vmatprep.subr.mxu0 0.0
        %3365 = vmatpush1.msra.mxu0 0.0
        %3366 = vmatprep.subr.mxu0 0.0
        %3367 = vmatpush1.msra.mxu0 0.0
        %3368 = vmatprep.subr.mxu0 0.0
        %3369 = vmatpush1.msra.mxu0 0.0
        %3370 = vmatprep.subr.mxu0 0.0
        %3371 = vmatpush1.msra.mxu0 0.0
        %3372 = vmatprep.subr.mxu0 0.0
        %3373 = vmatpush1.msra.mxu0 0.0
        %3374 = vmatprep.subr.mxu0 0.0
        %3375 = vmatpush1.msra.mxu0 0.0
        %3376 = vmatprep.subr.mxu0 0.0
        %3377 = vmatpush1.msra.mxu0 0.0
        %3378 = vmatprep.subr.mxu0 0.0
        %3379 = vmatpush1.msra.mxu0 0.0
        %3380 = vmatprep.subr.mxu0 0.0
        %3381 = vmatpush1.msra.mxu0 0.0
        %3382 = vmatprep.subr.mxu0 0.0
        %3383 = vmatpush1.msra.mxu0 0.0
        %3384 = vmatprep.subr.mxu0 0.0
        %3385 = vmatpush1.msra.mxu0 0.0
        %3386 = vmatprep.mubr.f32.mxu0 0.0
        %3387 = vmatmul.mubr.f32.gmra.mrb[0].mxu0 %v3299
        %v3388 = vpop.f32.mrb[0].mxu0
        %v3389 = vadd.f32 0.0, %v3388
        %v3390 = vpop.f32.mrb[0].mxu0
        %3391 = vmatprep.mubr.f32.mxu0 0.0
        %3392 = vmatmul.mubr.f32.gmra.mrb[0].mxu0 %v3302
        %v3393 = vpop.f32.mrb[0].mxu0
        %v3394 = vadd.f32 0.0, %v3393
        %v3395 = vpop.f32.mrb[0].mxu0
        %3396 = vmatprep.mubr.f32.mxu0 0.0
        %3397 = vmatmul.mubr.f32.gmra.mrb[0].mxu0 %v3305
        %v3398 = vpop.f32.mrb[0].mxu0
        %v3399 = vadd.f32 0.0, %v3398
        %v3400 = vpop.f32.mrb[0].mxu0
        %3401 = vmatprep.mubr.f32.mxu0 0.0
        %3402 = vmatmul.mubr.f32.gmra.mrb[0].mxu0 %v3308
        %v3403 = vpop.f32.mrb[0].mxu0
        %v3404 = vadd.f32 0.0, %v3403
        %v3405 = vpop.f32.mrb[0].mxu0
        %3406 = vmatprep.mubr.f32.mxu0 0.0
        %3407 = vmatmul.mubr.f32.gmra.mrb[0].mxu0 %v3311
        %v3408 = vpop.f32.mrb[0].mxu0
        %v3409 = vadd.f32 0.0, %v3408
        %v3410 = vpop.f32.mrb[0].mxu0
        %3411 = vmatprep.mubr.f32.mxu0 0.0
        %3412 = vmatmul.mubr.f32.gmra.mrb[0].mxu0 %v3314
        %v3413 = vpop.f32.mrb[0].mxu0
        %v3414 = vadd.f32 0.0, %v3413
        %v3415 = vpop.f32.mrb[0].mxu0
        %3416 = vmatprep.mubr.f32.mxu0 0.0
        %3417 = vmatmul.mubr.f32.gmra.mrb[0].mxu0 %v3317
        %v3418 = vpop.f32.mrb[0].mxu0
        %v3419 = vadd.f32 0.0, %v3418
        %v3420 = vpop.f32.mrb[0].mxu0
        %3421 = vmatprep.mubr.f32.mxu0 0.0
        %3422 = vmatmul.mubr.f32.gmra.mrb[0].mxu0 %v3320
        %v3423 = vpop.f32.mrb[0].mxu0
        %v3424 = vadd.f32 0.0, %v3423
        %v3425 = vpop.f32.mrb[0].mxu0
        %3426 = vdwg.mxu0
        %v3427 = vadd.f32 %v3279, %v3389
        %v3428 = vadd.f32 %v3280, %v3394
        %v3429 = vadd.f32 %v3281, %v3399
        %v3430 = vadd.f32 %v3282, %v3404
        %v3431 = vadd.f32 %v3283, %v3409
        %v3432 = vadd.f32 %v3284, %v3414
        %v3433 = vadd.f32 %v3285, %v3419
        %v3434 = vadd.f32 %v3286, %v3424
        %s3435 = scalar_lea.vmem %s4, 1
        %v3436 = vld [vmem:[%s3435] sm:$0x1]
        %v3438 = vlaneseq
        %v3439 = vshrl.u32 %v3438, 7
        %v3440 = vsub.s32 0, %v3439
        %v3441 = vrot.slane %v3436, %v3440
        %v3443 = vadd.f32 %v3427, %v3441
        %v3444 = vadd.f32 %v3428, %v3441
        %v3445 = vadd.f32 %v3429, %v3441
        %v3446 = vadd.f32 %v3430, %v3441
        %v3447 = vadd.f32 %v3431, %v3441
        %v3448 = vadd.f32 %v3432, %v3441
        %v3449 = vadd.f32 %v3433, %v3441
        %v3450 = vadd.f32 %v3434, %v3441
        %s3451 = scalar_lea.vmem [#allocation9], 64
        %v3452 = vld [vmem:[%s3451] sm:$0xff]
        %v3453 = vld [vmem:[%s3451 + $0x8] sm:$0xff]
        %s3454 = scalar_lea.vmem [#allocation9], 80
        %v3455 = vld [vmem:[%s3454] sm:$0xff]
        %v3456 = vld [vmem:[%s3454 + $0x8] sm:$0xff]
        %3457 = vmatprep.subr.mxu0 0.0
        %3458 = vmatpush1.msra.mxu0 %v3455
        %3459 = vmatprep.subr.mxu0 0.0
        %3460 = vmatpush1.msra.mxu0 %v3456
        %3461 = vmatprep.subr.mxu0 0.0
        %3462 = vmatpush1.msra.mxu0 0.0
        %3463 = vmatprep.subr.mxu0 0.0
        %3464 = vmatpush1.msra.mxu0 0.0
        %3465 = vmatprep.subr.mxu0 0.0
        %3466 = vmatpush1.msra.mxu0 0.0
        %3467 = vmatprep.subr.mxu0 0.0
        %3468 = vmatpush1.msra.mxu0 0.0
        %3469 = vmatprep.subr.mxu0 0.0
        %3470 = vmatpush1.msra.mxu0 0.0
        %3471 = vmatprep.subr.mxu0 0.0
        %3472 = vmatpush1.msra.mxu0 0.0
        %3473 = vmatprep.subr.mxu0 0.0
        %3474 = vmatpush1.msra.mxu0 0.0
        %3475 = vmatprep.subr.mxu0 0.0
        %3476 = vmatpush1.msra.mxu0 0.0
        %3477 = vmatprep.subr.mxu0 0.0
        %3478 = vmatpush1.msra.mxu0 0.0
        %3479 = vmatprep.subr.mxu0 0.0
        %3480 = vmatpush1.msra.mxu0 0.0
        %3481 = vmatprep.subr.mxu0 0.0
        %3482 = vmatpush1.msra.mxu0 0.0
        %3483 = vmatprep.subr.mxu0 0.0
        %3484 = vmatpush1.msra.mxu0 0.0
        %3485 = vmatprep.subr.mxu0 0.0
        %3486 = vmatpush1.msra.mxu0 0.0
        %3487 = vmatprep.subr.mxu0 0.0
        %3488 = vmatpush1.msra.mxu0 0.0
        %3489 = vmatprep.subr.mxu0 0.0
        %3490 = vmatpush1.msra.mxu0 0.0
        %3491 = vmatprep.subr.mxu0 0.0
        %3492 = vmatpush1.msra.mxu0 0.0
        %3493 = vmatprep.subr.mxu0 0.0
        %3494 = vmatpush1.msra.mxu0 0.0
        %3495 = vmatprep.subr.mxu0 0.0
        %3496 = vmatpush1.msra.mxu0 0.0
        %3497 = vmatprep.subr.mxu0 0.0
        %3498 = vmatpush1.msra.mxu0 0.0
        %3499 = vmatprep.subr.mxu0 0.0
        %3500 = vmatpush1.msra.mxu0 0.0
        %3501 = vmatprep.subr.mxu0 0.0
        %3502 = vmatpush1.msra.mxu0 0.0
        %3503 = vmatprep.subr.mxu0 0.0
        %3504 = vmatpush1.msra.mxu0 0.0
        %3505 = vmatprep.subr.mxu0 0.0
        %3506 = vmatpush1.msra.mxu0 0.0
        %3507 = vmatprep.subr.mxu0 0.0
        %3508 = vmatpush1.msra.mxu0 0.0
        %3509 = vmatprep.subr.mxu0 0.0
        %3510 = vmatpush1.msra.mxu0 0.0
        %3511 = vmatprep.subr.mxu0 0.0
        %3512 = vmatpush1.msra.mxu0 0.0
        %3513 = vmatprep.subr.mxu0 0.0
        %3514 = vmatpush1.msra.mxu0 0.0
        %3515 = vmatprep.subr.mxu0 0.0
        %3516 = vmatpush1.msra.mxu0 0.0
        %3517 = vmatprep.subr.mxu0 0.0
        %3518 = vmatpush1.msra.mxu0 0.0
        %3519 = vmatprep.subr.mxu0 0.0
        %3520 = vmatpush1.msra.mxu0 0.0
        %3521 = vmatprep.mubr.f32.mxu0 0.0
        %3522 = vmatmul.mubr.f32.gmra.mrb[0].mxu0 %v2882
        %v3523 = vpop.f32.mrb[0].mxu0
        %v3524 = vadd.f32 0.0, %v3523
        %v3525 = vpop.f32.mrb[0].mxu0
        %3526 = vmatprep.mubr.f32.mxu0 0.0
        %3527 = vmatmul.mubr.f32.gmra.mrb[0].mxu0 %v2885
        %v3528 = vpop.f32.mrb[0].mxu0
        %v3529 = vadd.f32 0.0, %v3528
        %v3530 = vpop.f32.mrb[0].mxu0
        %3531 = vmatprep.mubr.f32.mxu0 0.0
        %3532 = vmatmul.mubr.f32.gmra.mrb[0].mxu0 %v2888
        %v3533 = vpop.f32.mrb[0].mxu0
        %v3534 = vadd.f32 0.0, %v3533
        %v3535 = vpop.f32.mrb[0].mxu0
        %3536 = vmatprep.mubr.f32.mxu0 0.0
        %3537 = vmatmul.mubr.f32.gmra.mrb[0].mxu0 %v2891
        %v3538 = vpop.f32.mrb[0].mxu0
        %v3539 = vadd.f32 0.0, %v3538
        %v3540 = vpop.f32.mrb[0].mxu0
        %3541 = vmatprep.mubr.f32.mxu0 0.0
        %3542 = vmatmul.mubr.f32.gmra.mrb[0].mxu0 %v2894
        %v3543 = vpop.f32.mrb[0].mxu0
        %v3544 = vadd.f32 0.0, %v3543
        %v3545 = vpop.f32.mrb[0].mxu0
        %3546 = vmatprep.mubr.f32.mxu0 0.0
        %3547 = vmatmul.mubr.f32.gmra.mrb[0].mxu0 %v2897
        %v3548 = vpop.f32.mrb[0].mxu0
        %v3549 = vadd.f32 0.0, %v3548
        %v3550 = vpop.f32.mrb[0].mxu0
        %3551 = vmatprep.mubr.f32.mxu0 0.0
        %3552 = vmatmul.mubr.f32.gmra.mrb[0].mxu0 %v2900
        %v3553 = vpop.f32.mrb[0].mxu0
        %v3554 = vadd.f32 0.0, %v3553
        %v3555 = vpop.f32.mrb[0].mxu0
        %3556 = vmatprep.mubr.f32.mxu0 0.0
        %3557 = vmatmul.mubr.f32.gmra.mrb[0].mxu0 %v2903
        %v3558 = vpop.f32.mrb[0].mxu0
        %v3559 = vadd.f32 0.0, %v3558
        %v3560 = vpop.f32.mrb[0].mxu0
        %3561 = vdwg.mxu0
        %3562 = vmatprep.subr.mxu0 0.0
        %3563 = vmatpush1.msra.mxu0 %v3452
        %3564 = vmatprep.subr.mxu0 0.0
        %3565 = vmatpush1.msra.mxu0 %v3453
        %3566 = vmatprep.subr.mxu0 0.0
        %3567 = vmatpush1.msra.mxu0 0.0
        %3568 = vmatprep.subr.mxu0 0.0
        %3569 = vmatpush1.msra.mxu0 0.0
        %3570 = vmatprep.subr.mxu0 0.0
        %3571 = vmatpush1.msra.mxu0 0.0
        %3572 = vmatprep.subr.mxu0 0.0
        %3573 = vmatpush1.msra.mxu0 0.0
        %3574 = vmatprep.subr.mxu0 0.0
        %3575 = vmatpush1.msra.mxu0 0.0
        %3576 = vmatprep.subr.mxu0 0.0
        %3577 = vmatpush1.msra.mxu0 0.0
        %3578 = vmatprep.subr.mxu0 0.0
        %3579 = vmatpush1.msra.mxu0 0.0
        %3580 = vmatprep.subr.mxu0 0.0
        %3581 = vmatpush1.msra.mxu0 0.0
        %3582 = vmatprep.subr.mxu0 0.0
        %3583 = vmatpush1.msra.mxu0 0.0
        %3584 = vmatprep.subr.mxu0 0.0
        %3585 = vmatpush1.msra.mxu0 0.0
        %3586 = vmatprep.subr.mxu0 0.0
        %3587 = vmatpush1.msra.mxu0 0.0
        %3588 = vmatprep.subr.mxu0 0.0
        %3589 = vmatpush1.msra.mxu0 0.0
        %3590 = vmatprep.subr.mxu0 0.0
        %3591 = vmatpush1.msra.mxu0 0.0
        %3592 = vmatprep.subr.mxu0 0.0
        %3593 = vmatpush1.msra.mxu0 0.0
        %3594 = vmatprep.subr.mxu0 0.0
        %3595 = vmatpush1.msra.mxu0 0.0
        %3596 = vmatprep.subr.mxu0 0.0
        %3597 = vmatpush1.msra.mxu0 0.0
        %3598 = vmatprep.subr.mxu0 0.0
        %3599 = vmatpush1.msra.mxu0 0.0
        %3600 = vmatprep.subr.mxu0 0.0
        %3601 = vmatpush1.msra.mxu0 0.0
        %3602 = vmatprep.subr.mxu0 0.0
        %3603 = vmatpush1.msra.mxu0 0.0
        %3604 = vmatprep.subr.mxu0 0.0
        %3605 = vmatpush1.msra.mxu0 0.0
        %3606 = vmatprep.subr.mxu0 0.0
        %3607 = vmatpush1.msra.mxu0 0.0
        %3608 = vmatprep.subr.mxu0 0.0
        %3609 = vmatpush1.msra.mxu0 0.0
        %3610 = vmatprep.subr.mxu0 0.0
        %3611 = vmatpush1.msra.mxu0 0.0
        %3612 = vmatprep.subr.mxu0 0.0
        %3613 = vmatpush1.msra.mxu0 0.0
        %3614 = vmatprep.subr.mxu0 0.0
        %3615 = vmatpush1.msra.mxu0 0.0
        %3616 = vmatprep.subr.mxu0 0.0
        %3617 = vmatpush1.msra.mxu0 0.0
        %3618 = vmatprep.subr.mxu0 0.0
        %3619 = vmatpush1.msra.mxu0 0.0
        %3620 = vmatprep.subr.mxu0 0.0
        %3621 = vmatpush1.msra.mxu0 0.0
        %3622 = vmatprep.subr.mxu0 0.0
        %3623 = vmatpush1.msra.mxu0 0.0
        %3624 = vmatprep.subr.mxu0 0.0
        %3625 = vmatpush1.msra.mxu0 0.0
        %3626 = vmatprep.mubr.f32.mxu0 0.0
        %3627 = vmatmul.mubr.f32.gmra.mrb[0].mxu0 %v3011
        %v3628 = vpop.f32.mrb[0].mxu0
        %v3629 = vadd.f32 %v3524, %v3628
        %v3630 = vpop.f32.mrb[0].mxu0
        %3631 = vmatprep.mubr.f32.mxu0 0.0
        %3632 = vmatmul.mubr.f32.gmra.mrb[0].mxu0 %v3014
        %v3633 = vpop.f32.mrb[0].mxu0
        %v3634 = vadd.f32 %v3529, %v3633
        %v3635 = vpop.f32.mrb[0].mxu0
        %3636 = vmatprep.mubr.f32.mxu0 0.0
        %3637 = vmatmul.mubr.f32.gmra.mrb[0].mxu0 %v3017
        %v3638 = vpop.f32.mrb[0].mxu0
        %v3639 = vadd.f32 %v3534, %v3638
        %v3640 = vpop.f32.mrb[0].mxu0
        %3641 = vmatprep.mubr.f32.mxu0 0.0
        %3642 = vmatmul.mubr.f32.gmra.mrb[0].mxu0 %v3020
        %v3643 = vpop.f32.mrb[0].mxu0
        %v3644 = vadd.f32 %v3539, %v3643
        %v3645 = vpop.f32.mrb[0].mxu0
        %3646 = vmatprep.mubr.f32.mxu0 0.0
        %3647 = vmatmul.mubr.f32.gmra.mrb[0].mxu0 %v3023
        %v3648 = vpop.f32.mrb[0].mxu0
        %v3649 = vadd.f32 %v3544, %v3648
        %v3650 = vpop.f32.mrb[0].mxu0
        %3651 = vmatprep.mubr.f32.mxu0 0.0
        %3652 = vmatmul.mubr.f32.gmra.mrb[0].mxu0 %v3026
        %v3653 = vpop.f32.mrb[0].mxu0
        %v3654 = vadd.f32 %v3549, %v3653
        %v3655 = vpop.f32.mrb[0].mxu0
        %3656 = vmatprep.mubr.f32.mxu0 0.0
        %3657 = vmatmul.mubr.f32.gmra.mrb[0].mxu0 %v3029
        %v3658 = vpop.f32.mrb[0].mxu0
        %v3659 = vadd.f32 %v3554, %v3658
        %v3660 = vpop.f32.mrb[0].mxu0
        %3661 = vmatprep.mubr.f32.mxu0 0.0
        %3662 = vmatmul.mubr.f32.gmra.mrb[0].mxu0 %v3032
        %v3663 = vpop.f32.mrb[0].mxu0
        %v3664 = vadd.f32 %v3559, %v3663
        %v3665 = vpop.f32.mrb[0].mxu0
        %3666 = vdwg.mxu0
        %s3667 = scalar_lea.vmem [#allocation9], 96
        %v3668 = vld [vmem:[%s3667] sm:$0xff]
        %v3669 = vld [vmem:[%s3667 + $0x8] sm:$0xff]
        %3670 = vmatprep.subr.mxu0 0.0
        %3671 = vmatpush1.msra.mxu0 %v3668
        %3672 = vmatprep.subr.mxu0 0.0
        %3673 = vmatpush1.msra.mxu0 %v3669
        %3674 = vmatprep.subr.mxu0 0.0
        %3675 = vmatpush1.msra.mxu0 0.0
        %3676 = vmatprep.subr.mxu0 0.0
        %3677 = vmatpush1.msra.mxu0 0.0
        %3678 = vmatprep.subr.mxu0 0.0
        %3679 = vmatpush1.msra.mxu0 0.0
        %3680 = vmatprep.subr.mxu0 0.0
        %3681 = vmatpush1.msra.mxu0 0.0
        %3682 = vmatprep.subr.mxu0 0.0
        %3683 = vmatpush1.msra.mxu0 0.0
        %3684 = vmatprep.subr.mxu0 0.0
        %3685 = vmatpush1.msra.mxu0 0.0
        %3686 = vmatprep.subr.mxu0 0.0
        %3687 = vmatpush1.msra.mxu0 0.0
        %3688 = vmatprep.subr.mxu0 0.0
        %3689 = vmatpush1.msra.mxu0 0.0
        %3690 = vmatprep.subr.mxu0 0.0
        %3691 = vmatpush1.msra.mxu0 0.0
        %3692 = vmatprep.subr.mxu0 0.0
        %3693 = vmatpush1.msra.mxu0 0.0
        %3694 = vmatprep.subr.mxu0 0.0
        %3695 = vmatpush1.msra.mxu0 0.0
        %3696 = vmatprep.subr.mxu0 0.0
        %3697 = vmatpush1.msra.mxu0 0.0
        %3698 = vmatprep.subr.mxu0 0.0
        %3699 = vmatpush1.msra.mxu0 0.0
        %3700 = vmatprep.subr.mxu0 0.0
        %3701 = vmatpush1.msra.mxu0 0.0
        %3702 = vmatprep.subr.mxu0 0.0
        %3703 = vmatpush1.msra.mxu0 0.0
        %3704 = vmatprep.subr.mxu0 0.0
        %3705 = vmatpush1.msra.mxu0 0.0
        %3706 = vmatprep.subr.mxu0 0.0
        %3707 = vmatpush1.msra.mxu0 0.0
        %3708 = vmatprep.subr.mxu0 0.0
        %3709 = vmatpush1.msra.mxu0 0.0
        %3710 = vmatprep.subr.mxu0 0.0
        %3711 = vmatpush1.msra.mxu0 0.0
        %3712 = vmatprep.subr.mxu0 0.0
        %3713 = vmatpush1.msra.mxu0 0.0
        %3714 = vmatprep.subr.mxu0 0.0
        %3715 = vmatpush1.msra.mxu0 0.0
        %3716 = vmatprep.subr.mxu0 0.0
        %3717 = vmatpush1.msra.mxu0 0.0
        %3718 = vmatprep.subr.mxu0 0.0
        %3719 = vmatpush1.msra.mxu0 0.0
        %3720 = vmatprep.subr.mxu0 0.0
        %3721 = vmatpush1.msra.mxu0 0.0
        %3722 = vmatprep.subr.mxu0 0.0
        %3723 = vmatpush1.msra.mxu0 0.0
        %3724 = vmatprep.subr.mxu0 0.0
        %3725 = vmatpush1.msra.mxu0 0.0
        %3726 = vmatprep.subr.mxu0 0.0
        %3727 = vmatpush1.msra.mxu0 0.0
        %3728 = vmatprep.subr.mxu0 0.0
        %3729 = vmatpush1.msra.mxu0 0.0
        %3730 = vmatprep.subr.mxu0 0.0
        %3731 = vmatpush1.msra.mxu0 0.0
        %3732 = vmatprep.subr.mxu0 0.0
        %3733 = vmatpush1.msra.mxu0 0.0
        %3734 = vmatprep.mubr.f32.mxu0 0.0
        %3735 = vmatmul.mubr.f32.gmra.mrb[0].mxu0 %v3151
        %v3736 = vpop.f32.mrb[0].mxu0
        %v3737 = vadd.f32 0.0, %v3736
        %v3738 = vpop.f32.mrb[0].mxu0
        %3739 = vmatprep.mubr.f32.mxu0 0.0
        %3740 = vmatmul.mubr.f32.gmra.mrb[0].mxu0 %v3154
        %v3741 = vpop.f32.mrb[0].mxu0
        %v3742 = vadd.f32 0.0, %v3741
        %v3743 = vpop.f32.mrb[0].mxu0
        %3744 = vmatprep.mubr.f32.mxu0 0.0
        %3745 = vmatmul.mubr.f32.gmra.mrb[0].mxu0 %v3157
        %v3746 = vpop.f32.mrb[0].mxu0
        %v3747 = vadd.f32 0.0, %v3746
        %v3748 = vpop.f32.mrb[0].mxu0
        %3749 = vmatprep.mubr.f32.mxu0 0.0
        %3750 = vmatmul.mubr.f32.gmra.mrb[0].mxu0 %v3160
        %v3751 = vpop.f32.mrb[0].mxu0
        %v3752 = vadd.f32 0.0, %v3751
        %v3753 = vpop.f32.mrb[0].mxu0
        %3754 = vmatprep.mubr.f32.mxu0 0.0
        %3755 = vmatmul.mubr.f32.gmra.mrb[0].mxu0 %v3163
        %v3756 = vpop.f32.mrb[0].mxu0
        %v3757 = vadd.f32 0.0, %v3756
        %v3758 = vpop.f32.mrb[0].mxu0
        %3759 = vmatprep.mubr.f32.mxu0 0.0
        %3760 = vmatmul.mubr.f32.gmra.mrb[0].mxu0 %v3166
        %v3761 = vpop.f32.mrb[0].mxu0
        %v3762 = vadd.f32 0.0, %v3761
        %v3763 = vpop.f32.mrb[0].mxu0
        %3764 = vmatprep.mubr.f32.mxu0 0.0
        %3765 = vmatmul.mubr.f32.gmra.mrb[0].mxu0 %v3169
        %v3766 = vpop.f32.mrb[0].mxu0
        %v3767 = vadd.f32 0.0, %v3766
        %v3768 = vpop.f32.mrb[0].mxu0
        %3769 = vmatprep.mubr.f32.mxu0 0.0
        %3770 = vmatmul.mubr.f32.gmra.mrb[0].mxu0 %v3172
        %v3771 = vpop.f32.mrb[0].mxu0
        %v3772 = vadd.f32 0.0, %v3771
        %v3773 = vpop.f32.mrb[0].mxu0
        %3774 = vdwg.mxu0
        %v3775 = vadd.f32 %v3629, %v3737
        %v3776 = vadd.f32 %v3634, %v3742
        %v3777 = vadd.f32 %v3639, %v3747
        %v3778 = vadd.f32 %v3644, %v3752
        %v3779 = vadd.f32 %v3649, %v3757
        %v3780 = vadd.f32 %v3654, %v3762
        %v3781 = vadd.f32 %v3659, %v3767
        %v3782 = vadd.f32 %v3664, %v3772
        %s3783 = scalar_lea.vmem [#allocation9], 112
        %v3784 = vld [vmem:[%s3783] sm:$0xff]
        %v3785 = vld [vmem:[%s3783 + $0x8] sm:$0xff]
        %3786 = vmatprep.subr.mxu0 0.0
        %3787 = vmatpush1.msra.mxu0 %v3784
        %3788 = vmatprep.subr.mxu0 0.0
        %3789 = vmatpush1.msra.mxu0 %v3785
        %3790 = vmatprep.subr.mxu0 0.0
        %3791 = vmatpush1.msra.mxu0 0.0
        %3792 = vmatprep.subr.mxu0 0.0
        %3793 = vmatpush1.msra.mxu0 0.0
        %3794 = vmatprep.subr.mxu0 0.0
        %3795 = vmatpush1.msra.mxu0 0.0
        %3796 = vmatprep.subr.mxu0 0.0
        %3797 = vmatpush1.msra.mxu0 0.0
        %3798 = vmatprep.subr.mxu0 0.0
        %3799 = vmatpush1.msra.mxu0 0.0
        %3800 = vmatprep.subr.mxu0 0.0
        %3801 = vmatpush1.msra.mxu0 0.0
        %3802 = vmatprep.subr.mxu0 0.0
        %3803 = vmatpush1.msra.mxu0 0.0
        %3804 = vmatprep.subr.mxu0 0.0
        %3805 = vmatpush1.msra.mxu0 0.0
        %3806 = vmatprep.subr.mxu0 0.0
        %3807 = vmatpush1.msra.mxu0 0.0
        %3808 = vmatprep.subr.mxu0 0.0
        %3809 = vmatpush1.msra.mxu0 0.0
        %3810 = vmatprep.subr.mxu0 0.0
        %3811 = vmatpush1.msra.mxu0 0.0
        %3812 = vmatprep.subr.mxu0 0.0
        %3813 = vmatpush1.msra.mxu0 0.0
        %3814 = vmatprep.subr.mxu0 0.0
        %3815 = vmatpush1.msra.mxu0 0.0
        %3816 = vmatprep.subr.mxu0 0.0
        %3817 = vmatpush1.msra.mxu0 0.0
        %3818 = vmatprep.subr.mxu0 0.0
        %3819 = vmatpush1.msra.mxu0 0.0
        %3820 = vmatprep.subr.mxu0 0.0
        %3821 = vmatpush1.msra.mxu0 0.0
        %3822 = vmatprep.subr.mxu0 0.0
        %3823 = vmatpush1.msra.mxu0 0.0
        %3824 = vmatprep.subr.mxu0 0.0
        %3825 = vmatpush1.msra.mxu0 0.0
        %3826 = vmatprep.subr.mxu0 0.0
        %3827 = vmatpush1.msra.mxu0 0.0
        %3828 = vmatprep.subr.mxu0 0.0
        %3829 = vmatpush1.msra.mxu0 0.0
        %3830 = vmatprep.subr.mxu0 0.0
        %3831 = vmatpush1.msra.mxu0 0.0
        %3832 = vmatprep.subr.mxu0 0.0
        %3833 = vmatpush1.msra.mxu0 0.0
        %3834 = vmatprep.subr.mxu0 0.0
        %3835 = vmatpush1.msra.mxu0 0.0
        %3836 = vmatprep.subr.mxu0 0.0
        %3837 = vmatpush1.msra.mxu0 0.0
        %3838 = vmatprep.subr.mxu0 0.0
        %3839 = vmatpush1.msra.mxu0 0.0
        %3840 = vmatprep.subr.mxu0 0.0
        %3841 = vmatpush1.msra.mxu0 0.0
        %3842 = vmatprep.subr.mxu0 0.0
        %3843 = vmatpush1.msra.mxu0 0.0
        %3844 = vmatprep.subr.mxu0 0.0
        %3845 = vmatpush1.msra.mxu0 0.0
        %3846 = vmatprep.subr.mxu0 0.0
        %3847 = vmatpush1.msra.mxu0 0.0
        %3848 = vmatprep.subr.mxu0 0.0
        %3849 = vmatpush1.msra.mxu0 0.0
        %3850 = vmatprep.mubr.f32.mxu0 0.0
        %3851 = vmatmul.mubr.f32.gmra.mrb[0].mxu0 %v3299
        %v3852 = vpop.f32.mrb[0].mxu0
        %v3853 = vadd.f32 0.0, %v3852
        %v3854 = vpop.f32.mrb[0].mxu0
        %3855 = vmatprep.mubr.f32.mxu0 0.0
        %3856 = vmatmul.mubr.f32.gmra.mrb[0].mxu0 %v3302
        %v3857 = vpop.f32.mrb[0].mxu0
        %v3858 = vadd.f32 0.0, %v3857
        %v3859 = vpop.f32.mrb[0].mxu0
        %3860 = vmatprep.mubr.f32.mxu0 0.0
        %3861 = vmatmul.mubr.f32.gmra.mrb[0].mxu0 %v3305
        %v3862 = vpop.f32.mrb[0].mxu0
        %v3863 = vadd.f32 0.0, %v3862
        %v3864 = vpop.f32.mrb[0].mxu0
        %3865 = vmatprep.mubr.f32.mxu0 0.0
        %3866 = vmatmul.mubr.f32.gmra.mrb[0].mxu0 %v3308
        %v3867 = vpop.f32.mrb[0].mxu0
        %v3868 = vadd.f32 0.0, %v3867
        %v3869 = vpop.f32.mrb[0].mxu0
        %3870 = vmatprep.mubr.f32.mxu0 0.0
        %3871 = vmatmul.mubr.f32.gmra.mrb[0].mxu0 %v3311
        %v3872 = vpop.f32.mrb[0].mxu0
        %v3873 = vadd.f32 0.0, %v3872
        %v3874 = vpop.f32.mrb[0].mxu0
        %3875 = vmatprep.mubr.f32.mxu0 0.0
        %3876 = vmatmul.mubr.f32.gmra.mrb[0].mxu0 %v3314
        %v3877 = vpop.f32.mrb[0].mxu0
        %v3878 = vadd.f32 0.0, %v3877
        %v3879 = vpop.f32.mrb[0].mxu0
        %3880 = vmatprep.mubr.f32.mxu0 0.0
        %3881 = vmatmul.mubr.f32.gmra.mrb[0].mxu0 %v3317
        %v3882 = vpop.f32.mrb[0].mxu0
        %v3883 = vadd.f32 0.0, %v3882
        %v3884 = vpop.f32.mrb[0].mxu0
        %3885 = vmatprep.mubr.f32.mxu0 0.0
        %3886 = vmatmul.mubr.f32.gmra.mrb[0].mxu0 %v3320
        %v3887 = vpop.f32.mrb[0].mxu0
        %v3888 = vadd.f32 0.0, %v3887
        %v3889 = vpop.f32.mrb[0].mxu0
        %3890 = vdwg.mxu0
        %v3891 = vadd.f32 %v3775, %v3853
        %v3892 = vadd.f32 %v3776, %v3858
        %v3893 = vadd.f32 %v3777, %v3863
        %v3894 = vadd.f32 %v3778, %v3868
        %v3895 = vadd.f32 %v3779, %v3873
        %v3896 = vadd.f32 %v3780, %v3878
        %v3897 = vadd.f32 %v3781, %v3883
        %v3898 = vadd.f32 %v3782, %v3888
        %s3899 = scalar_lea.vmem %s6, 1
        %v3900 = vld [vmem:[%s3899] sm:$0x1]
        %v3902 = vlaneseq
        %v3903 = vshrl.u32 %v3902, 7
        %v3904 = vsub.s32 0, %v3903
        %v3905 = vrot.slane %v3900, %v3904
        %v3907 = vadd.f32 %v3891, %v3905
        %v3908 = vadd.f32 %v3892, %v3905
        %v3909 = vadd.f32 %v3893, %v3905
        %v3910 = vadd.f32 %v3894, %v3905
        %v3911 = vadd.f32 %v3895, %v3905
        %v3912 = vadd.f32 %v3896, %v3905
        %v3913 = vadd.f32 %v3897, %v3905
        %v3914 = vadd.f32 %v3898, %v3905
        %v3915 = vxor.u32 %v3907, 2147483648
        %v3916 = vxor.u32 %v3908, 2147483648
        %v3917 = vxor.u32 %v3909, 2147483648
        %v3918 = vxor.u32 %v3910, 2147483648
        %v3919 = vxor.u32 %v3911, 2147483648
        %v3920 = vxor.u32 %v3912, 2147483648
        %v3921 = vxor.u32 %v3913, 2147483648
        %v3922 = vxor.u32 %v3914, 2147483648
        %v3923 = vmul.f32 %v3915, 1.442695
        %v3924 = vpow.pop %v3923
        %v3925 = vmul.f32 %v3916, 1.442695
        %v3926 = vpow.pop %v3925
        %v3927 = vmul.f32 %v3917, 1.442695
        %v3928 = vpow.pop %v3927
        %v3929 = vmul.f32 %v3918, 1.442695
        %v3930 = vpow.pop %v3929
        %v3931 = vmul.f32 %v3919, 1.442695
        %v3932 = vpow.pop %v3931
        %v3933 = vmul.f32 %v3920, 1.442695
        %v3934 = vpow.pop %v3933
        %v3935 = vmul.f32 %v3921, 1.442695
        %v3936 = vpow.pop %v3935
        %v3937 = vmul.f32 %v3922, 1.442695
        %v3938 = vpow.pop %v3937
        %v3939 = vadd.f32 %v3924, 1.0
        %v3940 = vadd.f32 %v3926, 1.0
        %v3941 = vadd.f32 %v3928, 1.0
        %v3942 = vadd.f32 %v3930, 1.0
        %v3943 = vadd.f32 %v3932, 1.0
        %v3944 = vadd.f32 %v3934, 1.0
        %v3945 = vadd.f32 %v3936, 1.0
        %v3946 = vadd.f32 %v3938, 1.0
        %v3947 = vrcp.pop %v3939
        %v3948 = vmul.f32 1.0, %v3947
        %v3949 = vrcp.pop %v3940
        %v3950 = vmul.f32 1.0, %v3949
        %v3951 = vrcp.pop %v3941
        %v3952 = vmul.f32 1.0, %v3951
        %v3953 = vrcp.pop %v3942
        %v3954 = vmul.f32 1.0, %v3953
        %v3955 = vrcp.pop %v3943
        %v3956 = vmul.f32 1.0, %v3955
        %v3957 = vrcp.pop %v3944
        %v3958 = vmul.f32 1.0, %v3957
        %v3959 = vrcp.pop %v3945
        %v3960 = vmul.f32 1.0, %v3959
        %v3961 = vrcp.pop %v3946
        %v3962 = vmul.f32 1.0, %v3961
        %v3963 = vmul.f32 %v3443, %v3948
        %v3964 = vmul.f32 %v3444, %v3950
        %v3965 = vmul.f32 %v3445, %v3952
        %v3966 = vmul.f32 %v3446, %v3954
        %v3967 = vmul.f32 %v3447, %v3956
        %v3968 = vmul.f32 %v3448, %v3958
        %v3969 = vmul.f32 %v3449, %v3960
        %v3970 = vmul.f32 %v3450, %v3962
        %v3971 = vadd.f32 %v2163, %v3963
        %v3972 = vadd.f32 %v2164, %v3964
        %v3973 = vadd.f32 %v2165, %v3965
        %v3974 = vadd.f32 %v2166, %v3966
        %v3975 = vadd.f32 %v2167, %v3967
        %v3976 = vadd.f32 %v2168, %v3968
        %v3977 = vadd.f32 %v2169, %v3969
        %v3978 = vadd.f32 %v2170, %v3970
        %3979 = vst.msk [vmem:[%s340] sm:$0xff] %vm341, %v3971
        %3980 = vst.msk [vmem:[%s340 + $0x8] sm:$0xff] %vm341, %v3972
        %3981 = vst.msk [vmem:[%s340 + $0x10] sm:$0xff] %vm341, %v3973
        %3982 = vst.msk [vmem:[%s340 + $0x18] sm:$0xff] %vm341, %v3974
        %3983 = vst.msk [vmem:[%s340 + $0x20] sm:$0xff] %vm341, %v3975
        %3984 = vst.msk [vmem:[%s340 + $0x28] sm:$0xff] %vm341, %v3976
        %3985 = vst.msk [vmem:[%s340 + $0x30] sm:$0xff] %vm341, %v3977
        %3986 = vst.msk [vmem:[%s340 + $0x38] sm:$0xff] %vm341, %v3978
        %s3987 = sand.u32 %s186, 1
        %s3988 = scalar_lea.sflag [#allocation5], %s3987
        %s3989 = sand.u32 %s186, 1
        %s3990 = smul.addr %s3989, 64
        %s3991 = scalar_lea.vmem [#allocation11], %s3990
        // Predicated region
        $region65: #{tpu_custom_call.1} parent=47 // pred_check
          %p3992 = pneg %p196
        $region66: #{tpu_custom_call.1} parent=47 // pred_check_branch
          %3994 = sbr.rel (%p3992) target = $region68
        $region67: #{tpu_custom_call.1} parent=47 // pred_region
          %s3996 = ssub.s32 1024, 1024
          %3997 = vsyncadd %s3988, %s3996
          %s3998 = smul.addr %s26, 8
          %s3999 = smul.addr %s3998, 128
          %s4000 = scalar_lea.hbm %s7, %s3999
          %s4001 = sshll.u32 %s3991, 4
          %s4002 = int_to_ptr.vmem [resolvable:$true] %s4001
          %4007 = dma.vmem_to_hbm [thread:$0]  %s4002, 1024, %s4000, %s3988, 128, 128, 8
        $region68: #{tpu_custom_call.1} parent=47 // pred_fallthru
          _
      $region48: #{tpu_custom_call.1} parent=5 // pred_fallthru
        _
      %p4008 = scmp.le.s32.totalorder 2, %s21
      // Predicated region
      $region69: #{tpu_custom_call.1} parent=5 // pred_check
        %p4009 = pneg %p4008
      $region70: #{tpu_custom_call.1} parent=5 // pred_check_branch
        %4011 = sbr.rel (%p4009) target = $region72
      $region71: #{tpu_custom_call.1} parent=5 // pred_region
        %s4012 = ssub.s32 %s21, 2
        // Predicated region
        $region73: #{tpu_custom_call.1} parent=71 // pred_check
          %p4013 = pneg %p202
        $region74: #{tpu_custom_call.1} parent=71 // pred_check_branch
          %4015 = sbr.rel (%p4013) target = $region76
        $region75: #{tpu_custom_call.1} parent=71 // pred_region
          %s4016 = sand.u32 %s187, 1
          %s4017 = scalar_lea.sflag [#allocation5], %s4016
          %s4018 = sand.u32 %s187, 1
          %s4019 = smul.addr %s4018, 64
          %s4020 = scalar_lea.vmem [#allocation11], %s4019
          %4021 = dma.done %s4017, 1024
        $region76: #{tpu_custom_call.1} parent=71 // pred_fallthru
          _
      $region72: #{tpu_custom_call.1} parent=5 // pred_fallthru
        _
    $region6: #{tpu_custom_call.1} parent=1 // loop_footer
      %s25 = sadd.s32 1, %s21
    $region7: #{tpu_custom_call.1} parent=1 // loop_footer_branch
      %20 = sbr.rel target = $region3
    $region8: #{tpu_custom_call.1} parent=1 // loop_exit
      _
    %4022 = vsyncpa [#allocation4], 1
    %s4023 = scalar_lea.sflag [#allocation4], 1
    %4024 = vsyncpa %s4023, 1
    %4025 = vsyncpa [#allocation7], 1
    %4026 = vsyncpa [#allocation10], 1
    %4027 = vsyncpa [#allocation5], 1
    %s4028 = scalar_lea.sflag [#allocation5], 1
    %4029 = vsyncpa %s4028, 1

</llo_original>
